<compile_context>
chip_gen: v6e
topology: v6e:2x2x1
jax: 0.10.0
libtpu: 0.0.40
codegen_flags: <defaults>
</compile_context>

<pallas_src>
import functools

import jax
import jax.numpy as jnp
from jax import lax
from jax.experimental import pallas as pl
from jax.experimental.pallas import tpu as pltpu


def _round_up(v, m):
    return (v + m - 1) // m * m


def _silu(y):
    # exp -> EUP, approx reciprocal -> EUP; only the mul hits the VPU.
    return y * pl.reciprocal(1.0 + jnp.exp(-y), approx=True)


# ---------------------------------------------------------------------------
# Fused Bottleneck kernel: cv1 (1x1) + cv2 (3x3, pad 1) + optional residual.
# One grid step == NB batch images resident in VMEM.
# ---------------------------------------------------------------------------
def _bottleneck_kernel(x_ref, w1_ref, b1_ref, w2_ref, b2_ref, o_ref,
                       pad_ref, slab_ref, *, add, NB, H, W):
    C1p = x_ref.shape[-1]
    C_p = w1_ref.shape[-1]
    C2p = w2_ref.shape[-1]
    M = NB * H * W
    Wp = pad_ref.shape[2]                                   # round_up(W + 2, 8)

    # ---- cv1: 1x1 conv (BN1 folded into weights) + bias + SiLU --------------
    xf = x_ref[...].reshape(M, C1p)                         # bf16, lane-dense
    y1 = jnp.dot(xf, w1_ref[...], preferred_element_type=jnp.float32)
    y1 = _silu(y1 + b1_ref[...])
    y1 = y1.astype(jnp.bfloat16)

    # ---- zero-pad y1 into VMEM scratch (only borders re-zeroed) -------------
    # The interior is fully overwritten every grid step, so re-zeroing just the
    # borders keeps per-core scratch correct under "parallel" batch sharding.
    pad_ref[:, 0:1, :, :] = jnp.zeros((NB, 1, Wp, C_p), jnp.bfloat16)
    pad_ref[:, H + 1:H + 2, :, :] = jnp.zeros((NB, 1, Wp, C_p), jnp.bfloat16)
    pad_ref[:, :, 0:1, :] = jnp.zeros((NB, H + 2, 1, C_p), jnp.bfloat16)
    pad_ref[:, :, W + 1:Wp, :] = jnp.zeros((NB, H + 2, Wp - W - 1, C_p),
                                           jnp.bfloat16)
    pad_ref[:, 1:1 + H, 1:1 + W, :] = y1.reshape(NB, H, W, C_p)

    # ---- im2col slab: tap t = (dy, dx) occupies lanes [t*C_p, (t+1)*C_p) ----
    for t in range(9):
        dy, dx = divmod(t, 3)
        tap = pad_ref[:, dy:dy + H, dx:dx + W, :]
        slab_ref[:, t * C_p:(t + 1) * C_p] = tap.reshape(M, C_p)

    # ---- cv2: single big-K MXU matmul (K = 9*C_p), bias + SiLU --------------
    y2 = jnp.dot(slab_ref[...], w2_ref[...],
                 preferred_element_type=jnp.float32)
    y2 = _silu(y2 + b2_ref[...])

    # ---- optional shortcut: fresh vld from the still-resident x block -------
    if add:
        y2 = y2 + x_ref[...].reshape(M, C1p).astype(jnp.float32)

    o_ref[...] = y2.reshape(NB, H, W, C2p).astype(o_ref.dtype)


# ---------------------------------------------------------------------------
# Parameter setup (deterministic, synthetic) + BN folding + forward-pass glue
# ---------------------------------------------------------------------------
def _fold_bn(gamma, beta, mean, var, eps=1e-5):
    scale = gamma / jnp.sqrt(var + eps)
    bias = beta - mean * scale
    return scale, bias


def init_bottleneck_params(key, c1, c2, e=0.5):
    c_ = max(int(c2 * e), 1)
    k1, k2 = jax.random.split(key)
    w1 = jax.random.normal(k1, (c_, c1), jnp.float32) / jnp.sqrt(float(c1))
    w2 = jax.random.normal(k2, (c2, c_, 3, 3), jnp.float32) / jnp.sqrt(float(9 * c_))

    def bn(c, off):
        i = jnp.arange(c, dtype=jnp.float32)
        gamma = 1.0 + 0.05 * jnp.cos(i + off)
        beta = 0.02 * jnp.sin(i + off)
        mean = 0.01 * i
        var = 1.0 + 0.1 * (i % 4)
        return (gamma, beta, mean, var)

    return {"w1": w1, "bn1": bn(c_, 0.0), "w2": w2, "bn2": bn(c2, 1.0)}


def _pick_block_n(N, H, W, c1p, c_p, c2p, vmem_budget=24 * 1024 * 1024):
    """Largest NB dividing N that fits the VMEM budget and keeps >=2 grid steps."""
    wp = _round_up(W + 2, 8)

    def vmem_bytes(nb):
        x_blk = nb * H * W * c1p * 2 * 2            # bf16, double-buffered
        o_blk = nb * H * W * c2p * 4 * 2            # f32,  double-buffered
        pad = nb * (H + 2) * wp * c_p * 2           # bf16 scratch
        slab = nb * H * W * 9 * c_p * 2             # bf16 im2col slab
        return x_blk + o_blk + pad + slab

    best = 1
    for nb in range(1, N + 1):
        if N % nb:
            continue
        if N >= 2 and N // nb < 2:                  # keep both v7x cores busy
            continue
        if vmem_bytes(nb) <= vmem_budget:
            best = nb
    return best


@functools.partial(jax.jit, static_argnames=("shortcut", "block_n"))
def bottleneck_forward(x_nchw, params, *, shortcut=True, block_n=None):
    N, C1, H, W = x_nchw.shape
    w1, w2 = params["w1"], params["w2"]          # (c_, c1), (c2, c_, 3, 3)
    s1, b1 = _fold_bn(*params["bn1"])
    s2, b2 = _fold_bn(*params["bn2"])
    c_ = w1.shape[0]
    c2 = w2.shape[0]
    add = bool(shortcut and C1 == c2)

    LANES = 128
    c1p = _round_up(C1, LANES)
    c_p = _round_up(c_, LANES)
    c2p = _round_up(c2, LANES)

    # Fold BN scales into the conv weights, pad channels lane-dense, cast bf16.
    w1_eff = w1.T * s1[None, :]                                      # (C1, c_)
    w1_eff = (jnp.zeros((c1p, c_p), jnp.float32)
              .at[:C1, :c_].set(w1_eff).astype(jnp.bfloat16))
    b1_eff = jnp.zeros((1, c_p), jnp.float32).at[0, :c_].set(b1)

    w2_eff = w2 * s2[:, None, None, None]                            # (c2, c_, 3, 3)
    w2_eff = jnp.transpose(w2_eff, (2, 3, 1, 0))                     # (3, 3, c_, c2)
    w2_eff = (jnp.zeros((3, 3, c_p, c2p), jnp.float32)
              .at[:, :, :c_, :c2].set(w2_eff)
              .reshape(9 * c_p, c2p).astype(jnp.bfloat16))
    b2_eff = jnp.zeros((1, c2p), jnp.float32).at[0, :c2].set(b2)

    # NCHW -> NHWC, channel-pad to lane width, bf16 (halves HBM DMA bytes).
    x_nhwc = jnp.transpose(x_nchw, (0, 2, 3, 1)).astype(jnp.bfloat16)
    x_nhwc = jnp.pad(x_nhwc, ((0, 0), (0, 0), (0, 0), (0, c1p - C1)))

    nb = block_n if block_n is not None else _pick_block_n(N, H, W, c1p, c_p, c2p)
    assert N % nb == 0, (N, nb)
    grid_n = N // nb
    wp = _round_up(W + 2, 8)

    out_nhwc = pl.pallas_call(
        functools.partial(_bottleneck_kernel, add=add, NB=nb, H=H, W=W),
        out_shape=jax.ShapeDtypeStruct((N, H, W, c2p), jnp.float32),
        grid=(grid_n,),
        in_specs=[
            pl.BlockSpec((nb, H, W, c1p), lambda n: (n, 0, 0, 0)),
            pl.BlockSpec((c1p, c_p), lambda n: (0, 0)),
            pl.BlockSpec((1, c_p), lambda n: (0, 0)),
            pl.BlockSpec((9 * c_p, c2p), lambda n: (0, 0)),
            pl.BlockSpec((1, c2p), lambda n: (0, 0)),
        ],
        out_specs=pl.BlockSpec((nb, H, W, c2p), lambda n: (n, 0, 0, 0)),
        scratch_shapes=[
            pltpu.VMEM((nb, H + 2, wp, c_p), jnp.bfloat16),          # padded y1
            pltpu.VMEM((nb * H * W, 9 * c_p), jnp.bfloat16),         # im2col slab
        ],
        compiler_params=pltpu.CompilerParams(
            dimension_semantics=("parallel",),
            vmem_limit_bytes=64 * 1024 * 1024),
    )(x_nhwc, w1_eff, b1_eff, w2_eff, b2_eff)

    out = out_nhwc[..., :c2]                                         # drop lane pad
    return jnp.transpose(out, (0, 3, 1, 2))                          # NHWC -> NCHW


# ---------------------------------------------------------------------------
# Pure-JAX reference (correctness check only)
# ---------------------------------------------------------------------------
def _bn_silu_ref(y, bn):
    gamma, beta, mean, var = bn
    scale = gamma / jnp.sqrt(var + 1e-5)
    bias = beta - mean * scale
    y = y * scale[None, :, None, None] + bias[None, :, None, None]
    return y * jax.nn.sigmoid(y)


def bottleneck_reference(x_nchw, params, *, shortcut=True):
    w1, w2 = params["w1"], params["w2"]
    c2 = w2.shape[0]
    y = jnp.einsum("nchw,oc->nohw", x_nchw, w1)                     # 1x1 conv
    y = _bn_silu_ref(y, params["bn1"])
    y = lax.conv_general_dilated(                                   # 3x3 conv, pad 1
        y, w2, window_strides=(1, 1), padding=((1, 1), (1, 1)),
        dimension_numbers=("NCHW", "OIHW", "NCHW"))
    y = _bn_silu_ref(y, params["bn2"])
    if shortcut and x_nchw.shape[1] == c2:
        y = x_nchw + y
    return y


if __name__ == "__main__":
    key = jax.random.PRNGKey(0)
    kx, kp1, kp2 = jax.random.split(key, 3)

    # Config 1: shortcut active (c1 == c2), like Bottleneck(32, 32)
    N, C, H, W = 2, 32, 16, 16
    x = jax.random.normal(kx, (N, C, H, W), jnp.float32)
    params = init_bottleneck_params(kp1, C, C)

    out = jax.block_until_ready(bottleneck_forward(x, params, shortcut=True))
    ref = jax.block_until_ready(bottleneck_reference(x, params, shortcut=True))
    assert out.shape == (N, C, H, W), out.shape
    err = float(jnp.max(jnp.abs(out - ref)))
    # bf16 MXU inputs + approx-reciprocal SiLU vs f32 reference -> relaxed tol.
    assert err < 5e-2, f"mismatch vs reference (add path), max_err={err}"

    # Config 2: no shortcut (c1 != c2), like Bottleneck(32, 16)
    C2b = 16
    params2 = init_bottleneck_params(kp2, C, C2b)
    out2 = jax.block_until_ready(bottleneck_forward(x, params2, shortcut=True))
    ref2 = jax.block_until_ready(bottleneck_reference(x, params2, shortcut=True))
    assert out2.shape == (N, C2b, H, W), out2.shape
    err2 = float(jnp.max(jnp.abs(out2 - ref2)))
    assert err2 < 5e-2, f"mismatch vs reference (no-add path), max_err={err2}"

    print("KERNEL_OK")
</pallas_src>

<mosaic_0001>
module attributes {stable_mosaic.version = 11 : i64} {
  func.func @_bottleneck_kernel(%arg0: i32, %arg1: memref<1x16x16x128xbf16, #tpu.memory_space<vmem>>, %arg2: memref<128x128xbf16, #tpu.memory_space<vmem>>, %arg3: memref<1x128xf32, #tpu.memory_space<vmem>>, %arg4: memref<1152x128xbf16, #tpu.memory_space<vmem>>, %arg5: memref<1x128xf32, #tpu.memory_space<vmem>>, %arg6: memref<1x16x16x128xf32, #tpu.memory_space<vmem>>, %arg7: memref<1x18x24x128xbf16, #tpu.memory_space<vmem>>, %arg8: memref<256x1152xbf16, #tpu.memory_space<vmem>>) attributes {dimension_semantics = [#tpu.dimension_semantics<parallel>], iteration_bounds = array<i64: 2>, scalar_prefetch = 0 : i64, scratch_operands = 2 : i64, tpu.core_type = #tpu.core_type<tc>, window_params = [{transform_indices = @transform_0, window_bounds = array<i64: 1, 16, 16, 128>}, {pipeline_mode = #tpu.pipeline_mode<synchronous>, transform_indices = @transform_1, window_bounds = array<i64: 128, 128>}, {pipeline_mode = #tpu.pipeline_mode<synchronous>, transform_indices = @transform_2, window_bounds = array<i64: 1, 128>}, {pipeline_mode = #tpu.pipeline_mode<synchronous>, transform_indices = @transform_3, window_bounds = array<i64: 1152, 128>}, {pipeline_mode = #tpu.pipeline_mode<synchronous>, transform_indices = @transform_4, window_bounds = array<i64: 1, 128>}, {transform_indices = @transform_5, window_bounds = array<i64: 1, 16, 16, 128>}]} {
    %c0 = arith.constant 0 : index
    %c0_0 = arith.constant 0 : index
    %c0_1 = arith.constant 0 : index
    %c0_2 = arith.constant 0 : index
    %0 = vector.load %arg1[%c0, %c0_0, %c0_1, %c0_2] : memref<1x16x16x128xbf16, #tpu.memory_space<vmem>>, vector<1x16x16x128xbf16>
    %1 = vector.shape_cast %0 : vector<1x16x16x128xbf16> to vector<256x128xbf16>
    %c0_3 = arith.constant 0 : index
    %c0_4 = arith.constant 0 : index
    %2 = vector.load %arg2[%c0_3, %c0_4] : memref<128x128xbf16, #tpu.memory_space<vmem>>, vector<128x128xbf16>
    %cst = arith.constant dense<0.000000e+00> : vector<256x128xf32>
    %3 = tpu.matmul %1, %2, %cst {dimension_numbers = #tpu.dot_dimension_numbers<[1], [0], [0], [1], [0, 0, 1, 1], [], []>} : vector<256x128xbf16>, vector<128x128xbf16>, vector<256x128xf32> -> vector<256x128xf32>
    %c0_5 = arith.constant 0 : index
    %c0_6 = arith.constant 0 : index
    %4 = vector.load %arg3[%c0_5, %c0_6] : memref<1x128xf32, #tpu.memory_space<vmem>>, vector<1x128xf32>
    %5 = vector.broadcast %4 : vector<1x128xf32> to vector<256x128xf32>
    %6 = arith.addf %3, %5 : vector<256x128xf32>
    %cst_7 = arith.constant 0.000000e+00 : f32
    %7 = vector.broadcast %cst_7 : f32 to vector<256x128xf32>
    %8 = arith.subf %7, %6 : vector<256x128xf32>
    %9 = math.exp %8 : vector<256x128xf32>
    %cst_8 = arith.constant 1.000000e+00 : f32
    %10 = vector.broadcast %cst_8 : f32 to vector<256x128xf32>
    %11 = arith.addf %10, %9 : vector<256x128xf32>
    %12 = tpu.reciprocal %11 {approx = true} : vector<256x128xf32> -> vector<256x128xf32>
    %13 = arith.mulf %6, %12 : vector<256x128xf32>
    %14 = arith.truncf %13 : vector<256x128xf32> to vector<256x128xbf16>
    %cst_9 = arith.constant 0.000000e+00 : bf16
    %15 = vector.broadcast %cst_9 : bf16 to vector<1x1x24x128xbf16>
    %c0_10 = arith.constant 0 : index
    %c0_11 = arith.constant 0 : index
    %c0_12 = arith.constant 0 : index
    %c0_13 = arith.constant 0 : index
    %16 = vector.load %arg7[%c0_10, %c0_11, %c0_12, %c0_13] : memref<1x18x24x128xbf16, #tpu.memory_space<vmem>>, vector<1x1x24x128xbf16>
    tpu.vector_store %arg7[%c0_10, %c0_11, %c0_12, %c0_13], %15 {strides = array<i32>} : memref<1x18x24x128xbf16, #tpu.memory_space<vmem>>, vector<1x1x24x128xbf16>,
    %cst_14 = arith.constant 0.000000e+00 : bf16
    %17 = vector.broadcast %cst_14 : bf16 to vector<1x1x24x128xbf16>
    %c0_15 = arith.constant 0 : index
    %c17 = arith.constant 17 : index
    %c0_16 = arith.constant 0 : index
    %c0_17 = arith.constant 0 : index
    %18 = vector.load %arg7[%c0_15, %c17, %c0_16, %c0_17] : memref<1x18x24x128xbf16, #tpu.memory_space<vmem>>, vector<1x1x24x128xbf16>
    tpu.vector_store %arg7[%c0_15, %c17, %c0_16, %c0_17], %17 {strides = array<i32>} : memref<1x18x24x128xbf16, #tpu.memory_space<vmem>>, vector<1x1x24x128xbf16>,
    %cst_18 = arith.constant 0.000000e+00 : bf16
    %19 = vector.broadcast %cst_18 : bf16 to vector<1x18x1x128xbf16>
    %c0_19 = arith.constant 0 : index
    %c0_20 = arith.constant 0 : index
    %c0_21 = arith.constant 0 : index
    %c0_22 = arith.constant 0 : index
    %20 = vector.load %arg7[%c0_19, %c0_20, %c0_21, %c0_22] : memref<1x18x24x128xbf16, #tpu.memory_space<vmem>>, vector<1x18x1x128xbf16>
    tpu.vector_store %arg7[%c0_19, %c0_20, %c0_21, %c0_22], %19 {strides = array<i32>} : memref<1x18x24x128xbf16, #tpu.memory_space<vmem>>, vector<1x18x1x128xbf16>,
    %cst_23 = arith.constant 0.000000e+00 : bf16
    %21 = vector.broadcast %cst_23 : bf16 to vector<1x18x7x128xbf16>
    %c0_24 = arith.constant 0 : index
    %c0_25 = arith.constant 0 : index
    %c17_26 = arith.constant 17 : index
    %c0_27 = arith.constant 0 : index
    %22 = vector.load %arg7[%c0_24, %c0_25, %c17_26, %c0_27] : memref<1x18x24x128xbf16, #tpu.memory_space<vmem>>, vector<1x18x7x128xbf16>
    tpu.vector_store %arg7[%c0_24, %c0_25, %c17_26, %c0_27], %21 {strides = array<i32>} : memref<1x18x24x128xbf16, #tpu.memory_space<vmem>>, vector<1x18x7x128xbf16>,
    %23 = vector.shape_cast %14 : vector<256x128xbf16> to vector<1x16x16x128xbf16>
    %c0_28 = arith.constant 0 : index
    %c1 = arith.constant 1 : index
    %c1_29 = arith.constant 1 : index
    %c0_30 = arith.constant 0 : index
    %24 = vector.load %arg7[%c0_28, %c1, %c1_29, %c0_30] : memref<1x18x24x128xbf16, #tpu.memory_space<vmem>>, vector<1x16x16x128xbf16>
    tpu.vector_store %arg7[%c0_28, %c1, %c1_29, %c0_30], %23 {strides = array<i32>} : memref<1x18x24x128xbf16, #tpu.memory_space<vmem>>, vector<1x16x16x128xbf16>,
    %c0_31 = arith.constant 0 : index
    %c0_32 = arith.constant 0 : index
    %c0_33 = arith.constant 0 : index
    %c0_34 = arith.constant 0 : index
    %25 = vector.load %arg7[%c0_31, %c0_32, %c0_33, %c0_34] : memref<1x18x24x128xbf16, #tpu.memory_space<vmem>>, vector<1x16x16x128xbf16>
    %26 = vector.shape_cast %25 : vector<1x16x16x128xbf16> to vector<256x128xbf16>
    %c0_35 = arith.constant 0 : index
    %c0_36 = arith.constant 0 : index
    %27 = vector.load %arg8[%c0_35, %c0_36] : memref<256x1152xbf16, #tpu.memory_space<vmem>>, vector<256x128xbf16>
    tpu.vector_store %arg8[%c0_35, %c0_36], %26 {strides = array<i32>} : memref<256x1152xbf16, #tpu.memory_space<vmem>>, vector<256x128xbf16>,
    %c0_37 = arith.constant 0 : index
    %c0_38 = arith.constant 0 : index
    %c1_39 = arith.constant 1 : index
    %c0_40 = arith.constant 0 : index
    %28 = vector.load %arg7[%c0_37, %c0_38, %c1_39, %c0_40] : memref<1x18x24x128xbf16, #tpu.memory_space<vmem>>, vector<1x16x16x128xbf16>
    %29 = vector.shape_cast %28 : vector<1x16x16x128xbf16> to vector<256x128xbf16>
    %c0_41 = arith.constant 0 : index
    %c128 = arith.constant 128 : index
    %30 = vector.load %arg8[%c0_41, %c128] : memref<256x1152xbf16, #tpu.memory_space<vmem>>, vector<256x128xbf16>
    tpu.vector_store %arg8[%c0_41, %c128], %29 {strides = array<i32>} : memref<256x1152xbf16, #tpu.memory_space<vmem>>, vector<256x128xbf16>,
    %c0_42 = arith.constant 0 : index
    %c0_43 = arith.constant 0 : index
    %c2 = arith.constant 2 : index
    %c0_44 = arith.constant 0 : index
    %31 = vector.load %arg7[%c0_42, %c0_43, %c2, %c0_44] : memref<1x18x24x128xbf16, #tpu.memory_space<vmem>>, vector<1x16x16x128xbf16>
    %32 = vector.shape_cast %31 : vector<1x16x16x128xbf16> to vector<256x128xbf16>
    %c0_45 = arith.constant 0 : index
    %c256 = arith.constant 256 : index
    %33 = vector.load %arg8[%c0_45, %c256] : memref<256x1152xbf16, #tpu.memory_space<vmem>>, vector<256x128xbf16>
    tpu.vector_store %arg8[%c0_45, %c256], %32 {strides = array<i32>} : memref<256x1152xbf16, #tpu.memory_space<vmem>>, vector<256x128xbf16>,
    %c0_46 = arith.constant 0 : index
    %c1_47 = arith.constant 1 : index
    %c0_48 = arith.constant 0 : index
    %c0_49 = arith.constant 0 : index
    %34 = vector.load %arg7[%c0_46, %c1_47, %c0_48, %c0_49] : memref<1x18x24x128xbf16, #tpu.memory_space<vmem>>, vector<1x16x16x128xbf16>
    %35 = vector.shape_cast %34 : vector<1x16x16x128xbf16> to vector<256x128xbf16>
    %c0_50 = arith.constant 0 : index
    %c384 = arith.constant 384 : index
    %36 = vector.load %arg8[%c0_50, %c384] : memref<256x1152xbf16, #tpu.memory_space<vmem>>, vector<256x128xbf16>
    tpu.vector_store %arg8[%c0_50, %c384], %35 {strides = array<i32>} : memref<256x1152xbf16, #tpu.memory_space<vmem>>, vector<256x128xbf16>,
    %c0_51 = arith.constant 0 : index
    %c1_52 = arith.constant 1 : index
    %c1_53 = arith.constant 1 : index
    %c0_54 = arith.constant 0 : index
    %37 = vector.load %arg7[%c0_51, %c1_52, %c1_53, %c0_54] : memref<1x18x24x128xbf16, #tpu.memory_space<vmem>>, vector<1x16x16x128xbf16>
    %38 = vector.shape_cast %37 : vector<1x16x16x128xbf16> to vector<256x128xbf16>
    %c0_55 = arith.constant 0 : index
    %c512 = arith.constant 512 : index
    %39 = vector.load %arg8[%c0_55, %c512] : memref<256x1152xbf16, #tpu.memory_space<vmem>>, vector<256x128xbf16>
    tpu.vector_store %arg8[%c0_55, %c512], %38 {strides = array<i32>} : memref<256x1152xbf16, #tpu.memory_space<vmem>>, vector<256x128xbf16>,
    %c0_56 = arith.constant 0 : index
    %c1_57 = arith.constant 1 : index
    %c2_58 = arith.constant 2 : index
    %c0_59 = arith.constant 0 : index
    %40 = vector.load %arg7[%c0_56, %c1_57, %c2_58, %c0_59] : memref<1x18x24x128xbf16, #tpu.memory_space<vmem>>, vector<1x16x16x128xbf16>
    %41 = vector.shape_cast %40 : vector<1x16x16x128xbf16> to vector<256x128xbf16>
    %c0_60 = arith.constant 0 : index
    %c640 = arith.constant 640 : index
    %42 = vector.load %arg8[%c0_60, %c640] : memref<256x1152xbf16, #tpu.memory_space<vmem>>, vector<256x128xbf16>
    tpu.vector_store %arg8[%c0_60, %c640], %41 {strides = array<i32>} : memref<256x1152xbf16, #tpu.memory_space<vmem>>, vector<256x128xbf16>,
    %c0_61 = arith.constant 0 : index
    %c2_62 = arith.constant 2 : index
    %c0_63 = arith.constant 0 : index
    %c0_64 = arith.constant 0 : index
    %43 = vector.load %arg7[%c0_61, %c2_62, %c0_63, %c0_64] : memref<1x18x24x128xbf16, #tpu.memory_space<vmem>>, vector<1x16x16x128xbf16>
    %44 = vector.shape_cast %43 : vector<1x16x16x128xbf16> to vector<256x128xbf16>
    %c0_65 = arith.constant 0 : index
    %c768 = arith.constant 768 : index
    %45 = vector.load %arg8[%c0_65, %c768] : memref<256x1152xbf16, #tpu.memory_space<vmem>>, vector<256x128xbf16>
    tpu.vector_store %arg8[%c0_65, %c768], %44 {strides = array<i32>} : memref<256x1152xbf16, #tpu.memory_space<vmem>>, vector<256x128xbf16>,
    %c0_66 = arith.constant 0 : index
    %c2_67 = arith.constant 2 : index
    %c1_68 = arith.constant 1 : index
    %c0_69 = arith.constant 0 : index
    %46 = vector.load %arg7[%c0_66, %c2_67, %c1_68, %c0_69] : memref<1x18x24x128xbf16, #tpu.memory_space<vmem>>, vector<1x16x16x128xbf16>
    %47 = vector.shape_cast %46 : vector<1x16x16x128xbf16> to vector<256x128xbf16>
    %c0_70 = arith.constant 0 : index
    %c896 = arith.constant 896 : index
    %48 = vector.load %arg8[%c0_70, %c896] : memref<256x1152xbf16, #tpu.memory_space<vmem>>, vector<256x128xbf16>
    tpu.vector_store %arg8[%c0_70, %c896], %47 {strides = array<i32>} : memref<256x1152xbf16, #tpu.memory_space<vmem>>, vector<256x128xbf16>,
    %c0_71 = arith.constant 0 : index
    %c2_72 = arith.constant 2 : index
    %c2_73 = arith.constant 2 : index
    %c0_74 = arith.constant 0 : index
    %49 = vector.load %arg7[%c0_71, %c2_72, %c2_73, %c0_74] : memref<1x18x24x128xbf16, #tpu.memory_space<vmem>>, vector<1x16x16x128xbf16>
    %50 = vector.shape_cast %49 : vector<1x16x16x128xbf16> to vector<256x128xbf16>
    %c0_75 = arith.constant 0 : index
    %c1024 = arith.constant 1024 : index
    %51 = vector.load %arg8[%c0_75, %c1024] : memref<256x1152xbf16, #tpu.memory_space<vmem>>, vector<256x128xbf16>
    tpu.vector_store %arg8[%c0_75, %c1024], %50 {strides = array<i32>} : memref<256x1152xbf16, #tpu.memory_space<vmem>>, vector<256x128xbf16>,
    %c0_76 = arith.constant 0 : index
    %c0_77 = arith.constant 0 : index
    %52 = vector.load %arg8[%c0_76, %c0_77] : memref<256x1152xbf16, #tpu.memory_space<vmem>>, vector<256x1152xbf16>
    %c0_78 = arith.constant 0 : index
    %c0_79 = arith.constant 0 : index
    %53 = vector.load %arg4[%c0_78, %c0_79] : memref<1152x128xbf16, #tpu.memory_space<vmem>>, vector<1152x128xbf16>
    %cst_80 = arith.constant dense<0.000000e+00> : vector<256x128xf32>
    %54 = tpu.matmul %52, %53, %cst_80 {dimension_numbers = #tpu.dot_dimension_numbers<[1], [0], [0], [1], [0, 0, 1, 1], [], []>} : vector<256x1152xbf16>, vector<1152x128xbf16>, vector<256x128xf32> -> vector<256x128xf32>
    %c0_81 = arith.constant 0 : index
    %c0_82 = arith.constant 0 : index
    %55 = vector.load %arg5[%c0_81, %c0_82] : memref<1x128xf32, #tpu.memory_space<vmem>>, vector<1x128xf32>
    %56 = vector.broadcast %55 : vector<1x128xf32> to vector<256x128xf32>
    %57 = arith.addf %54, %56 : vector<256x128xf32>
    %cst_83 = arith.constant 0.000000e+00 : f32
    %58 = vector.broadcast %cst_83 : f32 to vector<256x128xf32>
    %59 = arith.subf %58, %57 : vector<256x128xf32>
    %60 = math.exp %59 : vector<256x128xf32>
    %cst_84 = arith.constant 1.000000e+00 : f32
    %61 = vector.broadcast %cst_84 : f32 to vector<256x128xf32>
    %62 = arith.addf %61, %60 : vector<256x128xf32>
    %63 = tpu.reciprocal %62 {approx = true} : vector<256x128xf32> -> vector<256x128xf32>
    %64 = arith.mulf %57, %63 : vector<256x128xf32>
    %c0_85 = arith.constant 0 : index
    %c0_86 = arith.constant 0 : index
    %c0_87 = arith.constant 0 : index
    %c0_88 = arith.constant 0 : index
    %65 = vector.load %arg1[%c0_85, %c0_86, %c0_87, %c0_88] : memref<1x16x16x128xbf16, #tpu.memory_space<vmem>>, vector<1x16x16x128xbf16>
    %66 = vector.shape_cast %65 : vector<1x16x16x128xbf16> to vector<256x128xbf16>
    %67 = arith.extf %66 : vector<256x128xbf16> to vector<256x128xf32>
    %68 = arith.addf %64, %67 : vector<256x128xf32>
    %69 = vector.shape_cast %68 : vector<256x128xf32> to vector<1x16x16x128xf32>
    %c0_89 = arith.constant 0 : index
    %c0_90 = arith.constant 0 : index
    %c0_91 = arith.constant 0 : index
    %c0_92 = arith.constant 0 : index
    %70 = vector.load %arg6[%c0_89, %c0_90, %c0_91, %c0_92] : memref<1x16x16x128xf32, #tpu.memory_space<vmem>>, vector<1x16x16x128xf32>
    tpu.vector_store %arg6[%c0_89, %c0_90, %c0_91, %c0_92], %69 {strides = array<i32>} : memref<1x16x16x128xf32, #tpu.memory_space<vmem>>, vector<1x16x16x128xf32>,
    return
  }
  func.func @transform_0(%arg0: i32) -> (i32, i32, i32, i32) {
    %c0_i32 = arith.constant 0 : i32
    %c0_i32_0 = arith.constant 0 : i32
    %c0_i32_1 = arith.constant 0 : i32
    %c0_i32_2 = arith.constant 0 : i32
    return %arg0, %c0_i32, %c0_i32_0, %c0_i32_1 : i32, i32, i32, i32
  }
  func.func @transform_1(%arg0: i32) -> (i32, i32) {
    %c0_i32 = arith.constant 0 : i32
    %c0_i32_0 = arith.constant 0 : i32
    %c0_i32_1 = arith.constant 0 : i32
    return %c0_i32, %c0_i32_0 : i32, i32
  }
  func.func @transform_2(%arg0: i32) -> (i32, i32) {
    %c0_i32 = arith.constant 0 : i32
    %c0_i32_0 = arith.constant 0 : i32
    %c0_i32_1 = arith.constant 0 : i32
    return %c0_i32, %c0_i32_0 : i32, i32
  }
  func.func @transform_3(%arg0: i32) -> (i32, i32) {
    %c0_i32 = arith.constant 0 : i32
    %c0_i32_0 = arith.constant 0 : i32
    %c0_i32_1 = arith.constant 0 : i32
    return %c0_i32, %c0_i32_0 : i32, i32
  }
  func.func @transform_4(%arg0: i32) -> (i32, i32) {
    %c0_i32 = arith.constant 0 : i32
    %c0_i32_0 = arith.constant 0 : i32
    %c0_i32_1 = arith.constant 0 : i32
    return %c0_i32, %c0_i32_0 : i32, i32
  }
  func.func @transform_5(%arg0: i32) -> (i32, i32, i32, i32) {
    %c0_i32 = arith.constant 0 : i32
    %c0_i32_0 = arith.constant 0 : i32
    %c0_i32_1 = arith.constant 0 : i32
    %c0_i32_2 = arith.constant 0 : i32
    return %arg0, %c0_i32, %c0_i32_0, %c0_i32_1 : i32, i32, i32, i32
  }
}

</mosaic_0001>

<llo_original>
// kernel: bottleneck_forward.1
$region0: #{bottleneck_forward.1}
  #allocation0 [shape = 'u32[]', space=smem, size = 0x4, offset = 0x4, fixed_abs, tag = 'smem constant byte address 0x4 - core index']
  #allocation1 [shape = 'u32[144,128]{1,0:T(1,128)}', space=vmem, size = 0x12000, scoped, tag = 'internal scratch']
  #allocation2 [shape = 'bf16[1,18,24,128]{3,2,1,0:T(8,128)(2,1)}', space=vmem, size = 0x1b000, scoped, tag = 'scratch operand']
  #allocation3 [shape = 'bf16[256,1152]{1,0:T(8,128)(2,1)}', space=vmem, size = 0x90000, scoped, tag = 'scratch operand']
  %s0 = inlined_call_operand.vmem [shape: bf16[2,16,16,128], index: 0, kind: input, shape index: {}]
  %s1 = inlined_call_operand.vmem [shape: bf16[128,128], index: 1, kind: input, shape index: {}]
  %s2 = inlined_call_operand.vmem [shape: f32[1,128], index: 2, kind: input, shape index: {}]
  %s3 = inlined_call_operand.vmem [shape: bf16[1152,128], index: 3, kind: input, shape index: {}]
  %s4 = inlined_call_operand.vmem [shape: f32[1,128], index: 4, kind: input, shape index: {}]
  %s5 = inlined_call_operand.vmem [shape: f32[2,16,16,128], index: 5, kind: output, shape index: {}]
  %s6 = sld [smem:[#allocation0]]
  $region53: #{bottleneck_forward.1} parent=0
    _
  %s8 = ssub.s32 1, %s6
  %s9 = scalar_select 0, %s8, %s6
  loop: start=0, step=1, limit=4
  $region2: #{bottleneck_forward.1} parent=0 // loop_pre_header
    _
  $region3: #{bottleneck_forward.1} parent=0 // loop_header
    %s11 = sphi 0, %s15
    %p12 = scmp.ge.s32.totalorder %s11, 4
    %s21 = sphi 0, %s23
    %s24 = sphi 0, %s21
    %s25 = sphi 0, %s24
    %s41 = sphi 0, %s25
    %s45 = sphi 0, %s45
    %s47 = sphi 0, %s45
    %s48 = sphi 0, %s47
    %s62 = sphi 0, %s48
    %s66 = sphi 0, %s66
    %s68 = sphi 0, %s66
    %s69 = sphi 0, %s68
    %s83 = sphi 0, %s69
    %s87 = sphi 0, %s87
    %s89 = sphi 0, %s87
    %s90 = sphi 0, %s89
    %s104 = sphi 0, %s90
    %s108 = sphi 0, %s108
    %s110 = sphi 0, %s108
    %s111 = sphi 0, %s110
    %s125 = sphi 0, %s111
    %s131 = sphi 0, %s133
    %s134 = sphi 0, %s131
    %s135 = sphi 0, %s134
    %s151 = sphi 0, %s135
  $region4: #{bottleneck_forward.1} parent=0 // loop_header_branch
    %14 = sbr.rel (%p12) target = $region8
  $region5: #{bottleneck_forward.1} parent=0 // loop_body
    %s16 = ssub.s32 %s11, 1
    %s17 = ssub.s32 %s11, 2
    %s18 = sadd.s32 %s11, 1
    %s19 = ssub.s32 %s11, %s18
    %p20 = scmp.eq.s32.totalorder %s19, 0
    %s22 = sadd.s32 %s21, 1
    %s23 = scalar_select %p20, %s21, %s22
    %p26 = pneg %p20
    %p27 = scmp.eq.s32.totalorder %s11, 1
    %p28 = por %p26, %p27
    %p29 = scmp.ne.s32.totalorder %s21, %s24
    %p30 = scmp.eq.s32.totalorder %s11, 0
    %p31 = por %p29, %p30
    %p32 = scmp.ne.s32.totalorder %s21, %s24
    %p33 = scmp.eq.s32.totalorder %s16, 1
    %p34 = por %p32, %p33
    %p35 = scmp.ne.s32.totalorder %s24, %s25
    %p36 = scmp.eq.s32.totalorder %s16, 0
    %p37 = por %p35, %p36
    %p38 = scmp.ne.s32.totalorder %s24, %s25
    %p39 = scmp.eq.s32.totalorder %s17, 1
    %p40 = por %p38, %p39
    %p42 = scmp.ne.s32.totalorder %s25, %s41
    %p43 = scmp.eq.s32.totalorder %s17, 0
    %p44 = por %p42, %p43
    %s46 = sadd.s32 %s45, 1
    %p49 = scmp.eq.s32.totalorder %s11, 1
    %p50 = scmp.ne.s32.totalorder %s45, %s47
    %p51 = scmp.eq.s32.totalorder %s11, 0
    %p52 = por %p50, %p51
    %p53 = scmp.ne.s32.totalorder %s45, %s47
    %p54 = scmp.eq.s32.totalorder %s16, 1
    %p55 = por %p53, %p54
    %p56 = scmp.ne.s32.totalorder %s47, %s48
    %p57 = scmp.eq.s32.totalorder %s16, 0
    %p58 = por %p56, %p57
    %p59 = scmp.ne.s32.totalorder %s47, %s48
    %p60 = scmp.eq.s32.totalorder %s17, 1
    %p61 = por %p59, %p60
    %p63 = scmp.ne.s32.totalorder %s48, %s62
    %p64 = scmp.eq.s32.totalorder %s17, 0
    %p65 = por %p63, %p64
    %s67 = sadd.s32 %s66, 1
    %p70 = scmp.eq.s32.totalorder %s11, 1
    %p71 = scmp.ne.s32.totalorder %s66, %s68
    %p72 = scmp.eq.s32.totalorder %s11, 0
    %p73 = por %p71, %p72
    %p74 = scmp.ne.s32.totalorder %s66, %s68
    %p75 = scmp.eq.s32.totalorder %s16, 1
    %p76 = por %p74, %p75
    %p77 = scmp.ne.s32.totalorder %s68, %s69
    %p78 = scmp.eq.s32.totalorder %s16, 0
    %p79 = por %p77, %p78
    %p80 = scmp.ne.s32.totalorder %s68, %s69
    %p81 = scmp.eq.s32.totalorder %s17, 1
    %p82 = por %p80, %p81
    %p84 = scmp.ne.s32.totalorder %s69, %s83
    %p85 = scmp.eq.s32.totalorder %s17, 0
    %p86 = por %p84, %p85
    %s88 = sadd.s32 %s87, 1
    %p91 = scmp.eq.s32.totalorder %s11, 1
    %p92 = scmp.ne.s32.totalorder %s87, %s89
    %p93 = scmp.eq.s32.totalorder %s11, 0
    %p94 = por %p92, %p93
    %p95 = scmp.ne.s32.totalorder %s87, %s89
    %p96 = scmp.eq.s32.totalorder %s16, 1
    %p97 = por %p95, %p96
    %p98 = scmp.ne.s32.totalorder %s89, %s90
    %p99 = scmp.eq.s32.totalorder %s16, 0
    %p100 = por %p98, %p99
    %p101 = scmp.ne.s32.totalorder %s89, %s90
    %p102 = scmp.eq.s32.totalorder %s17, 1
    %p103 = por %p101, %p102
    %p105 = scmp.ne.s32.totalorder %s90, %s104
    %p106 = scmp.eq.s32.totalorder %s17, 0
    %p107 = por %p105, %p106
    %s109 = sadd.s32 %s108, 1
    %p112 = scmp.eq.s32.totalorder %s11, 1
    %p113 = scmp.ne.s32.totalorder %s108, %s110
    %p114 = scmp.eq.s32.totalorder %s11, 0
    %p115 = por %p113, %p114
    %p116 = scmp.ne.s32.totalorder %s108, %s110
    %p117 = scmp.eq.s32.totalorder %s16, 1
    %p118 = por %p116, %p117
    %p119 = scmp.ne.s32.totalorder %s110, %s111
    %p120 = scmp.eq.s32.totalorder %s16, 0
    %p121 = por %p119, %p120
    %p122 = scmp.ne.s32.totalorder %s110, %s111
    %p123 = scmp.eq.s32.totalorder %s17, 1
    %p124 = por %p122, %p123
    %p126 = scmp.ne.s32.totalorder %s111, %s125
    %p127 = scmp.eq.s32.totalorder %s17, 0
    %p128 = por %p126, %p127
    %s129 = ssub.s32 %s11, %s18
    %p130 = scmp.eq.s32.totalorder %s129, 0
    %s132 = sadd.s32 %s131, 1
    %s133 = scalar_select %p130, %s131, %s132
    %p136 = pneg %p130
    %p137 = scmp.eq.s32.totalorder %s11, 1
    %p138 = por %p136, %p137
    %p139 = scmp.ne.s32.totalorder %s131, %s134
    %p140 = scmp.eq.s32.totalorder %s11, 0
    %p141 = por %p139, %p140
    %p142 = scmp.ne.s32.totalorder %s131, %s134
    %p143 = scmp.eq.s32.totalorder %s16, 1
    %p144 = por %p142, %p143
    %p145 = scmp.ne.s32.totalorder %s134, %s135
    %p146 = scmp.eq.s32.totalorder %s16, 0
    %p147 = por %p145, %p146
    %p148 = scmp.ne.s32.totalorder %s134, %s135
    %p149 = scmp.eq.s32.totalorder %s17, 1
    %p150 = por %p148, %p149
    %p152 = scmp.ne.s32.totalorder %s135, %s151
    %p153 = scmp.eq.s32.totalorder %s17, 0
    %p154 = por %p152, %p153
    %p155 = scmp.le.s32.totalorder 1, %s11
    %p156 = scmp.lt.s32.totalorder %s11, 3
    %p157 = pnand %p155, %p156
    %p158 = pneg %p157
    // Predicated region
    $region9: #{bottleneck_forward.1} parent=5 // pred_check
      _
    $region10: #{bottleneck_forward.1} parent=5 // pred_check_branch
      %160 = sbr.rel (%p157) target = $region12
    $region11: #{bottleneck_forward.1} parent=5 // pred_region
      %s161 = ssub.s32 %s11, 1
      // Predicated region
      $region13: #{bottleneck_forward.1} parent=11 // pred_check
        %p162 = pneg %p58
      $region14: #{bottleneck_forward.1} parent=11 // pred_check_branch
        %164 = sbr.rel (%p162) target = $region16
      $region15: #{bottleneck_forward.1} parent=11 // pred_region
        _
      $region16: #{bottleneck_forward.1} parent=11 // pred_fallthru
        _
      // Predicated region
      $region17: #{bottleneck_forward.1} parent=11 // pred_check
        %p165 = pneg %p79
      $region18: #{bottleneck_forward.1} parent=11 // pred_check_branch
        %167 = sbr.rel (%p165) target = $region20
      $region19: #{bottleneck_forward.1} parent=11 // pred_region
        _
      $region20: #{bottleneck_forward.1} parent=11 // pred_fallthru
        _
      // Predicated region
      $region21: #{bottleneck_forward.1} parent=11 // pred_check
        %p168 = pneg %p100
      $region22: #{bottleneck_forward.1} parent=11 // pred_check_branch
        %170 = sbr.rel (%p168) target = $region24
      $region23: #{bottleneck_forward.1} parent=11 // pred_region
        _
      $region24: #{bottleneck_forward.1} parent=11 // pred_fallthru
        _
      // Predicated region
      $region25: #{bottleneck_forward.1} parent=11 // pred_check
        %p171 = pneg %p121
      $region26: #{bottleneck_forward.1} parent=11 // pred_check_branch
        %173 = sbr.rel (%p171) target = $region28
      $region27: #{bottleneck_forward.1} parent=11 // pred_region
        _
      $region28: #{bottleneck_forward.1} parent=11 // pred_fallthru
        _
    $region12: #{bottleneck_forward.1} parent=5 // pred_fallthru
      _
    %p174 = scmp.lt.s32.totalorder %s11, 2
    // Predicated region
    $region29: #{bottleneck_forward.1} parent=5 // pred_check
      %p175 = pneg %p174
    $region30: #{bottleneck_forward.1} parent=5 // pred_check_branch
      %177 = sbr.rel (%p175) target = $region32
    $region31: #{bottleneck_forward.1} parent=5 // pred_region
      // Predicated region
      $region33: #{bottleneck_forward.1} parent=31 // pred_check
        %p178 = pneg %p31
      $region34: #{bottleneck_forward.1} parent=31 // pred_check_branch
        %180 = sbr.rel (%p178) target = $region36
      $region35: #{bottleneck_forward.1} parent=31 // pred_region
        %p181 = scmp.lt.s32.totalorder %s11, 1
        %s182 = scalar_select %p181, %s11, 1
        %s183 = smul.addr %s182, 32
        %s184 = smul.addr %s183, 4
        %s185 = scalar_lea.vmem %s0, %s184
      $region36: #{bottleneck_forward.1} parent=31 // pred_fallthru
        _
    $region32: #{bottleneck_forward.1} parent=5 // pred_fallthru
      _
    %p186 = scmp.le.s32.totalorder 1, %s11
    %p187 = scmp.lt.s32.totalorder %s11, 3
    %p188 = pnand %p186, %p187
    %p189 = pneg %p188
    // Predicated region
    $region37: #{bottleneck_forward.1} parent=5 // pred_check
      _
    $region38: #{bottleneck_forward.1} parent=5 // pred_check_branch
      %191 = sbr.rel (%p188) target = $region40
    $region39: #{bottleneck_forward.1} parent=5 // pred_region
      %s192 = ssub.s32 %s11, 1
      %p193 = scmp.lt.s32.totalorder %s16, 1
      %s194 = scalar_select %p193, %s16, 1
      %s195 = smul.addr %s194, 32
      %s196 = smul.addr %s195, 4
      %s197 = scalar_lea.vmem %s0, %s196
      %p198 = pneg %p37
      %p199 = pneg %p34
      %p200 = pneg %p58
      %p201 = pneg %p55
      %p202 = pneg %p79
      %p203 = pneg %p76
      %p204 = pneg %p100
      %p205 = pneg %p97
      %p206 = pneg %p121
      %p207 = pneg %p118
      %p208 = pneg %p147
      %p209 = pneg %p144
      %p210 = scmp.lt.s32.totalorder %s16, 1
      %s211 = scalar_select %p210, %s16, 1
      %s212 = smul.addr %s211, 32
      %s213 = smul.addr %s212, 8
      %s214 = scalar_lea.vmem %s5, %s213
      %p215 = scmp.lt.s32.totalorder %s16, 1
      %s216 = scalar_select %p215, %s16, 1
      %s217 = smul.addr %s216, 32
      %s218 = smul.addr %s217, 4
      %s219 = scalar_lea.vmem %s0, %s218
      %p220 = scmp.lt.s32.totalorder %s16, 1
      %s221 = scalar_select %p220, %s16, 1
      %s222 = smul.addr %s221, 32
      %s223 = smul.addr %s222, 8
      %s224 = scalar_lea.vmem %s5, %s223
      %v226 = vld [vmem:[%s219] sm:$0xf]
      %v227 = vld [vmem:[%s219 + $0x4] sm:$0xf]
      %v228 = vld [vmem:[%s219 + $0x8] sm:$0xf]
      %v229 = vld [vmem:[%s219 + $0xc] sm:$0xf]
      %v230 = vld [vmem:[%s219 + $0x10] sm:$0xf]
      %v231 = vld [vmem:[%s219 + $0x14] sm:$0xf]
      %v232 = vld [vmem:[%s219 + $0x18] sm:$0xf]
      %v233 = vld [vmem:[%s219 + $0x1c] sm:$0xf]
      %v234 = vld [vmem:[%s219 + $0x20] sm:$0xf]
      %v235 = vld [vmem:[%s219 + $0x24] sm:$0xf]
      %v236 = vld [vmem:[%s219 + $0x28] sm:$0xf]
      %v237 = vld [vmem:[%s219 + $0x2c] sm:$0xf]
      %v238 = vld [vmem:[%s219 + $0x30] sm:$0xf]
      %v239 = vld [vmem:[%s219 + $0x34] sm:$0xf]
      %v240 = vld [vmem:[%s219 + $0x38] sm:$0xf]
      %v241 = vld [vmem:[%s219 + $0x3c] sm:$0xf]
      %v242 = vld [vmem:[%s219 + $0x40] sm:$0xf]
      %v243 = vld [vmem:[%s219 + $0x44] sm:$0xf]
      %v244 = vld [vmem:[%s219 + $0x48] sm:$0xf]
      %v245 = vld [vmem:[%s219 + $0x4c] sm:$0xf]
      %v246 = vld [vmem:[%s219 + $0x50] sm:$0xf]
      %v247 = vld [vmem:[%s219 + $0x54] sm:$0xf]
      %v248 = vld [vmem:[%s219 + $0x58] sm:$0xf]
      %v249 = vld [vmem:[%s219 + $0x5c] sm:$0xf]
      %v250 = vld [vmem:[%s219 + $0x60] sm:$0xf]
      %v251 = vld [vmem:[%s219 + $0x64] sm:$0xf]
      %v252 = vld [vmem:[%s219 + $0x68] sm:$0xf]
      %v253 = vld [vmem:[%s219 + $0x6c] sm:$0xf]
      %v254 = vld [vmem:[%s219 + $0x70] sm:$0xf]
      %v255 = vld [vmem:[%s219 + $0x74] sm:$0xf]
      %v256 = vld [vmem:[%s219 + $0x78] sm:$0xf]
      %v257 = vld [vmem:[%s219 + $0x7c] sm:$0xf]
      %v258 = vld [vmem:[%s1] sm:$0xf]
      %v259 = vld [vmem:[%s1 + $0x4] sm:$0xf]
      %v260 = vld [vmem:[%s1 + $0x8] sm:$0xf]
      %v261 = vld [vmem:[%s1 + $0xc] sm:$0xf]
      %v262 = vld [vmem:[%s1 + $0x10] sm:$0xf]
      %v263 = vld [vmem:[%s1 + $0x14] sm:$0xf]
      %v264 = vld [vmem:[%s1 + $0x18] sm:$0xf]
      %v265 = vld [vmem:[%s1 + $0x1c] sm:$0xf]
      %v266 = vld [vmem:[%s1 + $0x20] sm:$0xf]
      %v267 = vld [vmem:[%s1 + $0x24] sm:$0xf]
      %v268 = vld [vmem:[%s1 + $0x28] sm:$0xf]
      %v269 = vld [vmem:[%s1 + $0x2c] sm:$0xf]
      %v270 = vld [vmem:[%s1 + $0x30] sm:$0xf]
      %v271 = vld [vmem:[%s1 + $0x34] sm:$0xf]
      %v272 = vld [vmem:[%s1 + $0x38] sm:$0xf]
      %v273 = vld [vmem:[%s1 + $0x3c] sm:$0xf]
      %v274 = vld [vmem:[%s2] sm:$0x1]
      %v276 = vlaneseq
      %v277 = vshrl.u32 %v276, 7
      %v278 = vsub.s32 0, %v277
      %v279 = vrot.slane %v274, %v278
      %v313 = vunpack.c.l.b16 %v226
      %v314 = vunpack.c.l.b16 %v227
      %v315 = vunpack.c.l.b16 %v228
      %v316 = vunpack.c.l.b16 %v229
      %v317 = vunpack.c.l.b16 %v230
      %v318 = vunpack.c.l.b16 %v231
      %v319 = vunpack.c.l.b16 %v232
      %v320 = vunpack.c.l.b16 %v233
      %v321 = vunpack.c.l.b16 %v234
      %v322 = vunpack.c.l.b16 %v235
      %v323 = vunpack.c.l.b16 %v236
      %v324 = vunpack.c.l.b16 %v237
      %v325 = vunpack.c.l.b16 %v238
      %v326 = vunpack.c.l.b16 %v239
      %v327 = vunpack.c.l.b16 %v240
      %v328 = vunpack.c.l.b16 %v241
      %v329 = vunpack.c.l.b16 %v242
      %v330 = vunpack.c.l.b16 %v243
      %v331 = vunpack.c.l.b16 %v244
      %v332 = vunpack.c.l.b16 %v245
      %v333 = vunpack.c.l.b16 %v246
      %v334 = vunpack.c.l.b16 %v247
      %v335 = vunpack.c.l.b16 %v248
      %v336 = vunpack.c.l.b16 %v249
      %v337 = vunpack.c.l.b16 %v250
      %v338 = vunpack.c.l.b16 %v251
      %v339 = vunpack.c.l.b16 %v252
      %v340 = vunpack.c.l.b16 %v253
      %v341 = vunpack.c.l.b16 %v254
      %v342 = vunpack.c.l.b16 %v255
      %v343 = vunpack.c.l.b16 %v256
      %v344 = vunpack.c.l.b16 %v257
      %v345 = vpack.c.b16 %v314, %v313
      %v346 = vpack.c.b16 %v316, %v315
      %v347 = vpack.c.b16 %v318, %v317
      %v348 = vpack.c.b16 %v320, %v319
      %v349 = vpack.c.b16 %v322, %v321
      %v350 = vpack.c.b16 %v324, %v323
      %v351 = vpack.c.b16 %v326, %v325
      %v352 = vpack.c.b16 %v328, %v327
      %v353 = vpack.c.b16 %v330, %v329
      %v354 = vpack.c.b16 %v332, %v331
      %v355 = vpack.c.b16 %v334, %v333
      %v356 = vpack.c.b16 %v336, %v335
      %v357 = vpack.c.b16 %v338, %v337
      %v358 = vpack.c.b16 %v340, %v339
      %v359 = vpack.c.b16 %v342, %v341
      %v360 = vpack.c.b16 %v344, %v343
      %v393 = vunpack.c.l.b16 %v258
      %v394 = vunpack.c.l.b16 %v259
      %v395 = vunpack.c.l.b16 %v260
      %v396 = vunpack.c.l.b16 %v261
      %v397 = vunpack.c.l.b16 %v262
      %v398 = vunpack.c.l.b16 %v263
      %v399 = vunpack.c.l.b16 %v264
      %v400 = vunpack.c.l.b16 %v265
      %v401 = vunpack.c.l.b16 %v266
      %v402 = vunpack.c.l.b16 %v267
      %v403 = vunpack.c.l.b16 %v268
      %v404 = vunpack.c.l.b16 %v269
      %v405 = vunpack.c.l.b16 %v270
      %v406 = vunpack.c.l.b16 %v271
      %v407 = vunpack.c.l.b16 %v272
      %v408 = vunpack.c.l.b16 %v273
      %v409 = vpack.c.b16 %v394, %v393
      %v410 = vpack.c.b16 %v396, %v395
      %v411 = vpack.c.b16 %v398, %v397
      %v412 = vpack.c.b16 %v400, %v399
      %v413 = vpack.c.b16 %v402, %v401
      %v414 = vpack.c.b16 %v404, %v403
      %v415 = vpack.c.b16 %v406, %v405
      %v416 = vpack.c.b16 %v408, %v407
      %425 = vmatprep.subr.bf16.mxu0 0
      %426 = vmatpush1.bf16.msra.mxu0 %v416
      %427 = vmatprep.subr.bf16.mxu0 0
      %428 = vmatpush1.bf16.msra.mxu0 %v415
      %429 = vmatprep.subr.bf16.mxu0 0
      %430 = vmatpush1.bf16.msra.mxu0 %v414
      %431 = vmatprep.subr.bf16.mxu0 0
      %432 = vmatpush1.bf16.msra.mxu0 %v413
      %433 = vmatprep.subr.bf16.mxu0 0
      %434 = vmatpush1.bf16.msra.mxu0 %v412
      %435 = vmatprep.subr.bf16.mxu0 0
      %436 = vmatpush1.bf16.msra.mxu0 %v411
      %437 = vmatprep.subr.bf16.mxu0 0
      %438 = vmatpush1.bf16.msra.mxu0 %v410
      %439 = vmatprep.subr.bf16.mxu0 0
      %440 = vmatpush1.bf16.msra.mxu0 %v409
      %441 = vmatprep.subr.bf16.mxu0 0
      %442 = vmatpush2.bf16.msra.mxu0 0
      %443 = vmatprep.subr.bf16.mxu0 0
      %444 = vmatpush2.bf16.msra.mxu0 0
      %445 = vmatprep.subr.bf16.mxu0 0
      %446 = vmatpush2.bf16.msra.mxu0 0
      %447 = vmatprep.subr.bf16.mxu0 0
      %448 = vmatpush2.bf16.msra.mxu0 0
      %449 = vmatprep.subr.bf16.mxu0 0
      %450 = vmatpush2.bf16.msra.mxu0 0
      %451 = vmatprep.subr.bf16.mxu0 0
      %452 = vmatpush2.bf16.msra.mxu0 0
      %453 = vmatprep.subr.bf16.mxu0 0
      %454 = vmatpush2.bf16.msra.mxu0 0
      %455 = vmatprep.subr.bf16.mxu0 0
      %456 = vmatpush2.bf16.msra.mxu0 0
      %457 = vmatprep.mubr.bf16.mxu0 0
      %458 = vmatmul.mubr.bf16.gmra.mxu0 %v345
      %v459 = vpop.f32.mrf.mxu0
      %v460 = vadd.f32 %v279, %v459
      %v461 = vpop.f32.mrf.mxu0
      %v462 = vpop.f32.mrf.mxu0
      %v463 = vadd.f32 %v279, %v462
      %v464 = vpop.f32.mrf.mxu0
      %465 = vmatprep.mubr.bf16.mxu0 0
      %466 = vmatmul.mubr.bf16.gmra.mxu0 %v346
      %v467 = vpop.f32.mrf.mxu0
      %v468 = vadd.f32 %v279, %v467
      %v469 = vpop.f32.mrf.mxu0
      %v470 = vpop.f32.mrf.mxu0
      %v471 = vadd.f32 %v279, %v470
      %v472 = vpop.f32.mrf.mxu0
      %473 = vmatprep.mubr.bf16.mxu0 0
      %474 = vmatmul.mubr.bf16.gmra.mxu0 %v347
      %v475 = vpop.f32.mrf.mxu0
      %v476 = vadd.f32 %v279, %v475
      %v477 = vpop.f32.mrf.mxu0
      %v478 = vpop.f32.mrf.mxu0
      %v479 = vadd.f32 %v279, %v478
      %v480 = vpop.f32.mrf.mxu0
      %481 = vmatprep.mubr.bf16.mxu0 0
      %482 = vmatmul.mubr.bf16.gmra.mxu0 %v348
      %v483 = vpop.f32.mrf.mxu0
      %v484 = vadd.f32 %v279, %v483
      %v485 = vpop.f32.mrf.mxu0
      %v486 = vpop.f32.mrf.mxu0
      %v487 = vadd.f32 %v279, %v486
      %v488 = vpop.f32.mrf.mxu0
      %489 = vmatprep.mubr.bf16.mxu0 0
      %490 = vmatmul.mubr.bf16.gmra.mxu0 %v349
      %v491 = vpop.f32.mrf.mxu0
      %v492 = vadd.f32 %v279, %v491
      %v493 = vpop.f32.mrf.mxu0
      %v494 = vpop.f32.mrf.mxu0
      %v495 = vadd.f32 %v279, %v494
      %v496 = vpop.f32.mrf.mxu0
      %497 = vmatprep.mubr.bf16.mxu0 0
      %498 = vmatmul.mubr.bf16.gmra.mxu0 %v350
      %v499 = vpop.f32.mrf.mxu0
      %v500 = vadd.f32 %v279, %v499
      %v501 = vpop.f32.mrf.mxu0
      %v502 = vpop.f32.mrf.mxu0
      %v503 = vadd.f32 %v279, %v502
      %v504 = vpop.f32.mrf.mxu0
      %505 = vmatprep.mubr.bf16.mxu0 0
      %506 = vmatmul.mubr.bf16.gmra.mxu0 %v351
      %v507 = vpop.f32.mrf.mxu0
      %v508 = vadd.f32 %v279, %v507
      %v509 = vpop.f32.mrf.mxu0
      %v510 = vpop.f32.mrf.mxu0
      %v511 = vadd.f32 %v279, %v510
      %v512 = vpop.f32.mrf.mxu0
      %513 = vmatprep.mubr.bf16.mxu0 0
      %514 = vmatmul.mubr.bf16.gmra.mxu0 %v352
      %v515 = vpop.f32.mrf.mxu0
      %v516 = vadd.f32 %v279, %v515
      %v517 = vpop.f32.mrf.mxu0
      %v518 = vpop.f32.mrf.mxu0
      %v519 = vadd.f32 %v279, %v518
      %v520 = vpop.f32.mrf.mxu0
      %521 = vmatprep.mubr.bf16.mxu0 0
      %522 = vmatmul.mubr.bf16.gmra.mxu0 %v353
      %v523 = vpop.f32.mrf.mxu0
      %v524 = vadd.f32 %v279, %v523
      %v525 = vpop.f32.mrf.mxu0
      %v526 = vpop.f32.mrf.mxu0
      %v527 = vadd.f32 %v279, %v526
      %v528 = vpop.f32.mrf.mxu0
      %529 = vmatprep.mubr.bf16.mxu0 0
      %530 = vmatmul.mubr.bf16.gmra.mxu0 %v354
      %v531 = vpop.f32.mrf.mxu0
      %v532 = vadd.f32 %v279, %v531
      %v533 = vpop.f32.mrf.mxu0
      %v534 = vpop.f32.mrf.mxu0
      %v535 = vadd.f32 %v279, %v534
      %v536 = vpop.f32.mrf.mxu0
      %537 = vmatprep.mubr.bf16.mxu0 0
      %538 = vmatmul.mubr.bf16.gmra.mxu0 %v355
      %v539 = vpop.f32.mrf.mxu0
      %v540 = vadd.f32 %v279, %v539
      %v541 = vpop.f32.mrf.mxu0
      %v542 = vpop.f32.mrf.mxu0
      %v543 = vadd.f32 %v279, %v542
      %v544 = vpop.f32.mrf.mxu0
      %545 = vmatprep.mubr.bf16.mxu0 0
      %546 = vmatmul.mubr.bf16.gmra.mxu0 %v356
      %v547 = vpop.f32.mrf.mxu0
      %v548 = vadd.f32 %v279, %v547
      %v549 = vpop.f32.mrf.mxu0
      %v550 = vpop.f32.mrf.mxu0
      %v551 = vadd.f32 %v279, %v550
      %v552 = vpop.f32.mrf.mxu0
      %553 = vmatprep.mubr.bf16.mxu0 0
      %554 = vmatmul.mubr.bf16.gmra.mxu0 %v357
      %v555 = vpop.f32.mrf.mxu0
      %v556 = vadd.f32 %v279, %v555
      %v557 = vpop.f32.mrf.mxu0
      %v558 = vpop.f32.mrf.mxu0
      %v559 = vadd.f32 %v279, %v558
      %v560 = vpop.f32.mrf.mxu0
      %561 = vmatprep.mubr.bf16.mxu0 0
      %562 = vmatmul.mubr.bf16.gmra.mxu0 %v358
      %v563 = vpop.f32.mrf.mxu0
      %v564 = vadd.f32 %v279, %v563
      %v565 = vpop.f32.mrf.mxu0
      %v566 = vpop.f32.mrf.mxu0
      %v567 = vadd.f32 %v279, %v566
      %v568 = vpop.f32.mrf.mxu0
      %569 = vmatprep.mubr.bf16.mxu0 0
      %570 = vmatmul.mubr.bf16.gmra.mxu0 %v359
      %v571 = vpop.f32.mrf.mxu0
      %v572 = vadd.f32 %v279, %v571
      %v573 = vpop.f32.mrf.mxu0
      %v574 = vpop.f32.mrf.mxu0
      %v575 = vadd.f32 %v279, %v574
      %v576 = vpop.f32.mrf.mxu0
      %577 = vmatprep.mubr.bf16.mxu0 0
      %578 = vmatmul.mubr.bf16.gmra.mxu0 %v360
      %v579 = vpop.f32.mrf.mxu0
      %v580 = vadd.f32 %v279, %v579
      %v581 = vpop.f32.mrf.mxu0
      %v582 = vpop.f32.mrf.mxu0
      %v583 = vadd.f32 %v279, %v582
      %v584 = vpop.f32.mrf.mxu0
      %585 = vdwg.mxu0
      %v586 = vsub.f32 0.0, %v460
      %v587 = vsub.f32 0.0, %v463
      %v588 = vsub.f32 0.0, %v468
      %v589 = vsub.f32 0.0, %v471
      %v590 = vsub.f32 0.0, %v476
      %v591 = vsub.f32 0.0, %v479
      %v592 = vsub.f32 0.0, %v484
      %v593 = vsub.f32 0.0, %v487
      %v594 = vsub.f32 0.0, %v492
      %v595 = vsub.f32 0.0, %v495
      %v596 = vsub.f32 0.0, %v500
      %v597 = vsub.f32 0.0, %v503
      %v598 = vsub.f32 0.0, %v508
      %v599 = vsub.f32 0.0, %v511
      %v600 = vsub.f32 0.0, %v516
      %v601 = vsub.f32 0.0, %v519
      %v602 = vsub.f32 0.0, %v524
      %v603 = vsub.f32 0.0, %v527
      %v604 = vsub.f32 0.0, %v532
      %v605 = vsub.f32 0.0, %v535
      %v606 = vsub.f32 0.0, %v540
      %v607 = vsub.f32 0.0, %v543
      %v608 = vsub.f32 0.0, %v548
      %v609 = vsub.f32 0.0, %v551
      %v610 = vsub.f32 0.0, %v556
      %v611 = vsub.f32 0.0, %v559
      %v612 = vsub.f32 0.0, %v564
      %v613 = vsub.f32 0.0, %v567
      %v614 = vsub.f32 0.0, %v572
      %v615 = vsub.f32 0.0, %v575
      %v616 = vsub.f32 0.0, %v580
      %v617 = vsub.f32 0.0, %v583
      %v618 = vmul.f32 %v586, 1.442695
      %v619 = vpow.pop %v618
      %v620 = vmul.f32 %v587, 1.442695
      %v621 = vpow.pop %v620
      %v622 = vmul.f32 %v588, 1.442695
      %v623 = vpow.pop %v622
      %v624 = vmul.f32 %v589, 1.442695
      %v625 = vpow.pop %v624
      %v626 = vmul.f32 %v590, 1.442695
      %v627 = vpow.pop %v626
      %v628 = vmul.f32 %v591, 1.442695
      %v629 = vpow.pop %v628
      %v630 = vmul.f32 %v592, 1.442695
      %v631 = vpow.pop %v630
      %v632 = vmul.f32 %v593, 1.442695
      %v633 = vpow.pop %v632
      %v634 = vmul.f32 %v594, 1.442695
      %v635 = vpow.pop %v634
      %v636 = vmul.f32 %v595, 1.442695
      %v637 = vpow.pop %v636
      %v638 = vmul.f32 %v596, 1.442695
      %v639 = vpow.pop %v638
      %v640 = vmul.f32 %v597, 1.442695
      %v641 = vpow.pop %v640
      %v642 = vmul.f32 %v598, 1.442695
      %v643 = vpow.pop %v642
      %v644 = vmul.f32 %v599, 1.442695
      %v645 = vpow.pop %v644
      %v646 = vmul.f32 %v600, 1.442695
      %v647 = vpow.pop %v646
      %v648 = vmul.f32 %v601, 1.442695
      %v649 = vpow.pop %v648
      %v650 = vmul.f32 %v602, 1.442695
      %v651 = vpow.pop %v650
      %v652 = vmul.f32 %v603, 1.442695
      %v653 = vpow.pop %v652
      %v654 = vmul.f32 %v604, 1.442695
      %v655 = vpow.pop %v654
      %v656 = vmul.f32 %v605, 1.442695
      %v657 = vpow.pop %v656
      %v658 = vmul.f32 %v606, 1.442695
      %v659 = vpow.pop %v658
      %v660 = vmul.f32 %v607, 1.442695
      %v661 = vpow.pop %v660
      %v662 = vmul.f32 %v608, 1.442695
      %v663 = vpow.pop %v662
      %v664 = vmul.f32 %v609, 1.442695
      %v665 = vpow.pop %v664
      %v666 = vmul.f32 %v610, 1.442695
      %v667 = vpow.pop %v666
      %v668 = vmul.f32 %v611, 1.442695
      %v669 = vpow.pop %v668
      %v670 = vmul.f32 %v612, 1.442695
      %v671 = vpow.pop %v670
      %v672 = vmul.f32 %v613, 1.442695
      %v673 = vpow.pop %v672
      %v674 = vmul.f32 %v614, 1.442695
      %v675 = vpow.pop %v674
      %v676 = vmul.f32 %v615, 1.442695
      %v677 = vpow.pop %v676
      %v678 = vmul.f32 %v616, 1.442695
      %v679 = vpow.pop %v678
      %v680 = vmul.f32 %v617, 1.442695
      %v681 = vpow.pop %v680
      %v682 = vadd.f32 %v619, 1.0
      %v683 = vadd.f32 %v621, 1.0
      %v684 = vadd.f32 %v623, 1.0
      %v685 = vadd.f32 %v625, 1.0
      %v686 = vadd.f32 %v627, 1.0
      %v687 = vadd.f32 %v629, 1.0
      %v688 = vadd.f32 %v631, 1.0
      %v689 = vadd.f32 %v633, 1.0
      %v690 = vadd.f32 %v635, 1.0
      %v691 = vadd.f32 %v637, 1.0
      %v692 = vadd.f32 %v639, 1.0
      %v693 = vadd.f32 %v641, 1.0
      %v694 = vadd.f32 %v643, 1.0
      %v695 = vadd.f32 %v645, 1.0
      %v696 = vadd.f32 %v647, 1.0
      %v697 = vadd.f32 %v649, 1.0
      %v698 = vadd.f32 %v651, 1.0
      %v699 = vadd.f32 %v653, 1.0
      %v700 = vadd.f32 %v655, 1.0
      %v701 = vadd.f32 %v657, 1.0
      %v702 = vadd.f32 %v659, 1.0
      %v703 = vadd.f32 %v661, 1.0
      %v704 = vadd.f32 %v663, 1.0
      %v705 = vadd.f32 %v665, 1.0
      %v706 = vadd.f32 %v667, 1.0
      %v707 = vadd.f32 %v669, 1.0
      %v708 = vadd.f32 %v671, 1.0
      %v709 = vadd.f32 %v673, 1.0
      %v710 = vadd.f32 %v675, 1.0
      %v711 = vadd.f32 %v677, 1.0
      %v712 = vadd.f32 %v679, 1.0
      %v713 = vadd.f32 %v681, 1.0
      %v714 = vrcp.pop %v682
      %v715 = vrcp.pop %v683
      %v716 = vrcp.pop %v684
      %v717 = vrcp.pop %v685
      %v718 = vrcp.pop %v686
      %v719 = vrcp.pop %v687
      %v720 = vrcp.pop %v688
      %v721 = vrcp.pop %v689
      %v722 = vrcp.pop %v690
      %v723 = vrcp.pop %v691
      %v724 = vrcp.pop %v692
      %v725 = vrcp.pop %v693
      %v726 = vrcp.pop %v694
      %v727 = vrcp.pop %v695
      %v728 = vrcp.pop %v696
      %v729 = vrcp.pop %v697
      %v730 = vrcp.pop %v698
      %v731 = vrcp.pop %v699
      %v732 = vrcp.pop %v700
      %v733 = vrcp.pop %v701
      %v734 = vrcp.pop %v702
      %v735 = vrcp.pop %v703
      %v736 = vrcp.pop %v704
      %v737 = vrcp.pop %v705
      %v738 = vrcp.pop %v706
      %v739 = vrcp.pop %v707
      %v740 = vrcp.pop %v708
      %v741 = vrcp.pop %v709
      %v742 = vrcp.pop %v710
      %v743 = vrcp.pop %v711
      %v744 = vrcp.pop %v712
      %v745 = vrcp.pop %v713
      %v746 = vmul.f32 %v460, %v714
      %v747 = vmul.f32 %v463, %v715
      %v748 = vmul.f32 %v468, %v716
      %v749 = vmul.f32 %v471, %v717
      %v750 = vmul.f32 %v476, %v718
      %v751 = vmul.f32 %v479, %v719
      %v752 = vmul.f32 %v484, %v720
      %v753 = vmul.f32 %v487, %v721
      %v754 = vmul.f32 %v492, %v722
      %v755 = vmul.f32 %v495, %v723
      %v756 = vmul.f32 %v500, %v724
      %v757 = vmul.f32 %v503, %v725
      %v758 = vmul.f32 %v508, %v726
      %v759 = vmul.f32 %v511, %v727
      %v760 = vmul.f32 %v516, %v728
      %v761 = vmul.f32 %v519, %v729
      %v762 = vmul.f32 %v524, %v730
      %v763 = vmul.f32 %v527, %v731
      %v764 = vmul.f32 %v532, %v732
      %v765 = vmul.f32 %v535, %v733
      %v766 = vmul.f32 %v540, %v734
      %v767 = vmul.f32 %v543, %v735
      %v768 = vmul.f32 %v548, %v736
      %v769 = vmul.f32 %v551, %v737
      %v770 = vmul.f32 %v556, %v738
      %v771 = vmul.f32 %v559, %v739
      %v772 = vmul.f32 %v564, %v740
      %v773 = vmul.f32 %v567, %v741
      %v774 = vmul.f32 %v572, %v742
      %v775 = vmul.f32 %v575, %v743
      %v776 = vmul.f32 %v580, %v744
      %v777 = vmul.f32 %v583, %v745
      %v778 = vpack.c.bf16 %v747, %v746
      %v779 = vpack.c.bf16 %v749, %v748
      %v780 = vpack.c.bf16 %v751, %v750
      %v781 = vpack.c.bf16 %v753, %v752
      %v782 = vpack.c.bf16 %v755, %v754
      %v783 = vpack.c.bf16 %v757, %v756
      %v784 = vpack.c.bf16 %v759, %v758
      %v785 = vpack.c.bf16 %v761, %v760
      %v786 = vpack.c.bf16 %v763, %v762
      %v787 = vpack.c.bf16 %v765, %v764
      %v788 = vpack.c.bf16 %v767, %v766
      %v789 = vpack.c.bf16 %v769, %v768
      %v790 = vpack.c.bf16 %v771, %v770
      %v791 = vpack.c.bf16 %v773, %v772
      %v792 = vpack.c.bf16 %v775, %v774
      %v793 = vpack.c.bf16 %v777, %v776
      %794 = vst [vmem:[#allocation2] sm:$0xf] 0
      %795 = vst [vmem:[#allocation2 + $0x4] sm:$0xf] 0
      %796 = vst [vmem:[#allocation2 + $0x8] sm:$0xf] 0
      %s797 = scalar_lea.vmem [#allocation2], 204
      %798 = vst [vmem:[%s797] sm:$0xf] 0
      %799 = vst [vmem:[%s797 + $0x4] sm:$0xf] 0
      %800 = vst [vmem:[%s797 + $0x8] sm:$0xf] 0
      %vm801 = vcmask 1040384
      %vm802 = vsmask.f32 256
      %vm803 = vmand %vm801, %vm802
      %v804 = vld [vmem:[#allocation2] sm:$0x1]
      %v805 = vsel %vm803, 0, %v804
      %806 = vst [vmem:[#allocation2] sm:$0x1] %v805
      %v807 = vld [vmem:[#allocation2 + $0xc] sm:$0x1]
      %v808 = vsel %vm803, 0, %v807
      %809 = vst [vmem:[#allocation2 + $0xc] sm:$0x1] %v808
      %v810 = vld [vmem:[#allocation2 + $0x18] sm:$0x1]
      %v811 = vsel %vm803, 0, %v810
      %812 = vst [vmem:[#allocation2 + $0x18] sm:$0x1] %v811
      %v813 = vld [vmem:[#allocation2 + $0x24] sm:$0x1]
      %v814 = vsel %vm803, 0, %v813
      %815 = vst [vmem:[#allocation2 + $0x24] sm:$0x1] %v814
      %v816 = vld [vmem:[#allocation2 + $0x30] sm:$0x1]
      %v817 = vsel %vm803, 0, %v816
      %818 = vst [vmem:[#allocation2 + $0x30] sm:$0x1] %v817
      %v819 = vld [vmem:[#allocation2 + $0x3c] sm:$0x1]
      %v820 = vsel %vm803, 0, %v819
      %821 = vst [vmem:[#allocation2 + $0x3c] sm:$0x1] %v820
      %v822 = vld [vmem:[#allocation2 + $0x48] sm:$0x1]
      %v823 = vsel %vm803, 0, %v822
      %824 = vst [vmem:[#allocation2 + $0x48] sm:$0x1] %v823
      %v825 = vld [vmem:[#allocation2 + $0x54] sm:$0x1]
      %v826 = vsel %vm803, 0, %v825
      %827 = vst [vmem:[#allocation2 + $0x54] sm:$0x1] %v826
      %v828 = vld [vmem:[#allocation2 + $0x60] sm:$0x1]
      %v829 = vsel %vm803, 0, %v828
      %830 = vst [vmem:[#allocation2 + $0x60] sm:$0x1] %v829
      %v831 = vld [vmem:[#allocation2 + $0x6c] sm:$0x1]
      %v832 = vsel %vm803, 0, %v831
      %833 = vst [vmem:[#allocation2 + $0x6c] sm:$0x1] %v832
      %v834 = vld [vmem:[#allocation2 + $0x78] sm:$0x1]
      %v835 = vsel %vm803, 0, %v834
      %836 = vst [vmem:[#allocation2 + $0x78] sm:$0x1] %v835
      %v837 = vld [vmem:[#allocation2 + $0x84] sm:$0x1]
      %v838 = vsel %vm803, 0, %v837
      %839 = vst [vmem:[#allocation2 + $0x84] sm:$0x1] %v838
      %v840 = vld [vmem:[#allocation2 + $0x90] sm:$0x1]
      %v841 = vsel %vm803, 0, %v840
      %842 = vst [vmem:[#allocation2 + $0x90] sm:$0x1] %v841
      %v843 = vld [vmem:[#allocation2 + $0x9c] sm:$0x1]
      %v844 = vsel %vm803, 0, %v843
      %845 = vst [vmem:[#allocation2 + $0x9c] sm:$0x1] %v844
      %v846 = vld [vmem:[#allocation2 + $0xa8] sm:$0x1]
      %v847 = vsel %vm803, 0, %v846
      %848 = vst [vmem:[#allocation2 + $0xa8] sm:$0x1] %v847
      %v849 = vld [vmem:[#allocation2 + $0xb4] sm:$0x1]
      %v850 = vsel %vm803, 0, %v849
      %851 = vst [vmem:[#allocation2 + $0xb4] sm:$0x1] %v850
      %v852 = vld [vmem:[#allocation2 + $0xc0] sm:$0x1]
      %v853 = vsel %vm803, 0, %v852
      %854 = vst [vmem:[#allocation2 + $0xc0] sm:$0x1] %v853
      %v855 = vld [vmem:[#allocation2 + $0xcc] sm:$0x1]
      %v856 = vsel %vm803, 0, %v855
      %857 = vst [vmem:[#allocation2 + $0xcc] sm:$0x1] %v856
      %vm858 = vcmask 1043456
      %vm859 = vsmask.f32 7938
      %vm860 = vmand %vm858, %vm859
      %v861 = vld [vmem:[#allocation2 + $0x8] sm:$0xf]
      %v862 = vsel %vm860, 0, %v861
      %863 = vst [vmem:[#allocation2 + $0x8] sm:$0xf] %v862
      %v864 = vld [vmem:[#allocation2 + $0x14] sm:$0xf]
      %v865 = vsel %vm860, 0, %v864
      %866 = vst [vmem:[#allocation2 + $0x14] sm:$0xf] %v865
      %v867 = vld [vmem:[#allocation2 + $0x20] sm:$0xf]
      %v868 = vsel %vm860, 0, %v867
      %869 = vst [vmem:[#allocation2 + $0x20] sm:$0xf] %v868
      %v870 = vld [vmem:[#allocation2 + $0x2c] sm:$0xf]
      %v871 = vsel %vm860, 0, %v870
      %872 = vst [vmem:[#allocation2 + $0x2c] sm:$0xf] %v871
      %v873 = vld [vmem:[#allocation2 + $0x38] sm:$0xf]
      %v874 = vsel %vm860, 0, %v873
      %875 = vst [vmem:[#allocation2 + $0x38] sm:$0xf] %v874
      %v876 = vld [vmem:[#allocation2 + $0x44] sm:$0xf]
      %v877 = vsel %vm860, 0, %v876
      %878 = vst [vmem:[#allocation2 + $0x44] sm:$0xf] %v877
      %v879 = vld [vmem:[#allocation2 + $0x50] sm:$0xf]
      %v880 = vsel %vm860, 0, %v879
      %881 = vst [vmem:[#allocation2 + $0x50] sm:$0xf] %v880
      %v882 = vld [vmem:[#allocation2 + $0x5c] sm:$0xf]
      %v883 = vsel %vm860, 0, %v882
      %884 = vst [vmem:[#allocation2 + $0x5c] sm:$0xf] %v883
      %v885 = vld [vmem:[#allocation2 + $0x68] sm:$0xf]
      %v886 = vsel %vm860, 0, %v885
      %887 = vst [vmem:[#allocation2 + $0x68] sm:$0xf] %v886
      %v888 = vld [vmem:[#allocation2 + $0x74] sm:$0xf]
      %v889 = vsel %vm860, 0, %v888
      %890 = vst [vmem:[#allocation2 + $0x74] sm:$0xf] %v889
      %v891 = vld [vmem:[#allocation2 + $0x80] sm:$0xf]
      %v892 = vsel %vm860, 0, %v891
      %893 = vst [vmem:[#allocation2 + $0x80] sm:$0xf] %v892
      %v894 = vld [vmem:[#allocation2 + $0x8c] sm:$0xf]
      %v895 = vsel %vm860, 0, %v894
      %896 = vst [vmem:[#allocation2 + $0x8c] sm:$0xf] %v895
      %v897 = vld [vmem:[#allocation2 + $0x98] sm:$0xf]
      %v898 = vsel %vm860, 0, %v897
      %899 = vst [vmem:[#allocation2 + $0x98] sm:$0xf] %v898
      %v900 = vld [vmem:[#allocation2 + $0xa4] sm:$0xf]
      %v901 = vsel %vm860, 0, %v900
      %902 = vst [vmem:[#allocation2 + $0xa4] sm:$0xf] %v901
      %v903 = vld [vmem:[#allocation2 + $0xb0] sm:$0xf]
      %v904 = vsel %vm860, 0, %v903
      %905 = vst [vmem:[#allocation2 + $0xb0] sm:$0xf] %v904
      %v906 = vld [vmem:[#allocation2 + $0xbc] sm:$0xf]
      %v907 = vsel %vm860, 0, %v906
      %908 = vst [vmem:[#allocation2 + $0xbc] sm:$0xf] %v907
      %v909 = vld [vmem:[#allocation2 + $0xc8] sm:$0xf]
      %v910 = vsel %vm860, 0, %v909
      %911 = vst [vmem:[#allocation2 + $0xc8] sm:$0xf] %v910
      %v912 = vld [vmem:[#allocation2 + $0xd4] sm:$0xf]
      %v913 = vsel %vm860, 0, %v912
      %914 = vst [vmem:[#allocation2 + $0xd4] sm:$0xf] %v913
      %v931 = vunpack.c.l.b16 %v778
      %v932 = vunpack.c.h.b16 %v778
      %v933 = vunpack.c.l.b16 %v779
      %v934 = vunpack.c.h.b16 %v779
      %v935 = vunpack.c.l.b16 %v780
      %v936 = vunpack.c.h.b16 %v780
      %v937 = vunpack.c.l.b16 %v781
      %v938 = vunpack.c.h.b16 %v781
      %v939 = vunpack.c.l.b16 %v782
      %v940 = vunpack.c.h.b16 %v782
      %v941 = vunpack.c.l.b16 %v783
      %v942 = vunpack.c.h.b16 %v783
      %v943 = vunpack.c.l.b16 %v784
      %v944 = vunpack.c.h.b16 %v784
      %v945 = vunpack.c.l.b16 %v785
      %v946 = vunpack.c.h.b16 %v785
      %v947 = vunpack.c.l.b16 %v786
      %v948 = vunpack.c.h.b16 %v786
      %v949 = vunpack.c.l.b16 %v787
      %v950 = vunpack.c.h.b16 %v787
      %v951 = vunpack.c.l.b16 %v788
      %v952 = vunpack.c.h.b16 %v788
      %v953 = vunpack.c.l.b16 %v789
      %v954 = vunpack.c.h.b16 %v789
      %v955 = vunpack.c.l.b16 %v790
      %v956 = vunpack.c.h.b16 %v790
      %v957 = vunpack.c.l.b16 %v791
      %v958 = vunpack.c.h.b16 %v791
      %v959 = vunpack.c.l.b16 %v792
      %v960 = vunpack.c.h.b16 %v792
      %v961 = vunpack.c.l.b16 %v793
      %v962 = vunpack.c.h.b16 %v793
      %v963 = vpack.c.b16 %v931, %v931
      %v964 = vpack.c.b16 %v932, %v932
      %v965 = vpack.c.b16 %v933, %v933
      %v966 = vpack.c.b16 %v934, %v934
      %v967 = vpack.c.b16 %v935, %v935
      %v968 = vpack.c.b16 %v936, %v936
      %v969 = vpack.c.b16 %v937, %v937
      %v970 = vpack.c.b16 %v938, %v938
      %v971 = vpack.c.b16 %v939, %v939
      %v972 = vpack.c.b16 %v940, %v940
      %v973 = vpack.c.b16 %v941, %v941
      %v974 = vpack.c.b16 %v942, %v942
      %v975 = vpack.c.b16 %v943, %v943
      %v976 = vpack.c.b16 %v944, %v944
      %v977 = vpack.c.b16 %v945, %v945
      %v978 = vpack.c.b16 %v946, %v946
      %v979 = vpack.c.b16 %v947, %v947
      %v980 = vpack.c.b16 %v948, %v948
      %v981 = vpack.c.b16 %v949, %v949
      %v982 = vpack.c.b16 %v950, %v950
      %v983 = vpack.c.b16 %v951, %v951
      %v984 = vpack.c.b16 %v952, %v952
      %v985 = vpack.c.b16 %v953, %v953
      %v986 = vpack.c.b16 %v954, %v954
      %v987 = vpack.c.b16 %v955, %v955
      %v988 = vpack.c.b16 %v956, %v956
      %v989 = vpack.c.b16 %v957, %v957
      %v990 = vpack.c.b16 %v958, %v958
      %v991 = vpack.c.b16 %v959, %v959
      %v992 = vpack.c.b16 %v960, %v960
      %v993 = vpack.c.b16 %v961, %v961
      %v994 = vpack.c.b16 %v962, %v962
      %vm995 = vsmask.f32 4368
      %vm996 = vmor %vm802, %vm995
      %v998 = vshrl.u32 %v963, 16
      %v1000 = vrot.slane %v998, 7
      %v1001 = vshll.u32 %v963, 16
      %v1003 = vor.u32 %v1000, %v1001
      %v1004 = vrot.slane %v1000, 4
      %v1006 = vshrl.u32 %v964, 16
      %v1008 = vrot.slane %v1006, 7
      %v1009 = vshll.u32 %v964, 16
      %v1011 = vor.u32 %v1008, %v1009
      %v1012 = vsel %vm996, %v1004, %v1011
      %v1013 = vrot.slane %v1008, 4
      %v1015 = vshrl.u32 %v965, 16
      %v1017 = vrot.slane %v1015, 7
      %v1018 = vshll.u32 %v965, 16
      %v1020 = vor.u32 %v1017, %v1018
      %v1021 = vrot.slane %v1017, 4
      %v1023 = vshrl.u32 %v966, 16
      %v1025 = vrot.slane %v1023, 7
      %v1026 = vshll.u32 %v966, 16
      %v1028 = vor.u32 %v1025, %v1026
      %v1029 = vsel %vm996, %v1021, %v1028
      %v1030 = vrot.slane %v1025, 4
      %v1032 = vshrl.u32 %v967, 16
      %v1034 = vrot.slane %v1032, 7
      %v1035 = vshll.u32 %v967, 16
      %v1037 = vor.u32 %v1034, %v1035
      %v1038 = vrot.slane %v1034, 4
      %v1040 = vshrl.u32 %v968, 16
      %v1042 = vrot.slane %v1040, 7
      %v1043 = vshll.u32 %v968, 16
      %v1045 = vor.u32 %v1042, %v1043
      %v1046 = vsel %vm996, %v1038, %v1045
      %v1047 = vrot.slane %v1042, 4
      %v1049 = vshrl.u32 %v969, 16
      %v1051 = vrot.slane %v1049, 7
      %v1052 = vshll.u32 %v969, 16
      %v1054 = vor.u32 %v1051, %v1052
      %v1055 = vrot.slane %v1051, 4
      %v1057 = vshrl.u32 %v970, 16
      %v1059 = vrot.slane %v1057, 7
      %v1060 = vshll.u32 %v970, 16
      %v1062 = vor.u32 %v1059, %v1060
      %v1063 = vsel %vm996, %v1055, %v1062
      %v1064 = vrot.slane %v1059, 4
      %v1066 = vshrl.u32 %v971, 16
      %v1068 = vrot.slane %v1066, 7
      %v1069 = vshll.u32 %v971, 16
      %v1071 = vor.u32 %v1068, %v1069
      %v1072 = vrot.slane %v1068, 4
      %v1074 = vshrl.u32 %v972, 16
      %v1076 = vrot.slane %v1074, 7
      %v1077 = vshll.u32 %v972, 16
      %v1079 = vor.u32 %v1076, %v1077
      %v1080 = vsel %vm996, %v1072, %v1079
      %v1081 = vrot.slane %v1076, 4
      %v1083 = vshrl.u32 %v973, 16
      %v1085 = vrot.slane %v1083, 7
      %v1086 = vshll.u32 %v973, 16
      %v1088 = vor.u32 %v1085, %v1086
      %v1089 = vrot.slane %v1085, 4
      %v1091 = vshrl.u32 %v974, 16
      %v1093 = vrot.slane %v1091, 7
      %v1094 = vshll.u32 %v974, 16
      %v1096 = vor.u32 %v1093, %v1094
      %v1097 = vsel %vm996, %v1089, %v1096
      %v1098 = vrot.slane %v1093, 4
      %v1100 = vshrl.u32 %v975, 16
      %v1102 = vrot.slane %v1100, 7
      %v1103 = vshll.u32 %v975, 16
      %v1105 = vor.u32 %v1102, %v1103
      %v1106 = vrot.slane %v1102, 4
      %v1108 = vshrl.u32 %v976, 16
      %v1110 = vrot.slane %v1108, 7
      %v1111 = vshll.u32 %v976, 16
      %v1113 = vor.u32 %v1110, %v1111
      %v1114 = vsel %vm996, %v1106, %v1113
      %v1115 = vrot.slane %v1110, 4
      %v1117 = vshrl.u32 %v977, 16
      %v1119 = vrot.slane %v1117, 7
      %v1120 = vshll.u32 %v977, 16
      %v1122 = vor.u32 %v1119, %v1120
      %v1123 = vrot.slane %v1119, 4
      %v1125 = vshrl.u32 %v978, 16
      %v1127 = vrot.slane %v1125, 7
      %v1128 = vshll.u32 %v978, 16
      %v1130 = vor.u32 %v1127, %v1128
      %v1131 = vsel %vm996, %v1123, %v1130
      %v1132 = vrot.slane %v1127, 4
      %v1134 = vshrl.u32 %v979, 16
      %v1136 = vrot.slane %v1134, 7
      %v1137 = vshll.u32 %v979, 16
      %v1139 = vor.u32 %v1136, %v1137
      %v1140 = vrot.slane %v1136, 4
      %v1142 = vshrl.u32 %v980, 16
      %v1144 = vrot.slane %v1142, 7
      %v1145 = vshll.u32 %v980, 16
      %v1147 = vor.u32 %v1144, %v1145
      %v1148 = vsel %vm996, %v1140, %v1147
      %v1149 = vrot.slane %v1144, 4
      %v1151 = vshrl.u32 %v981, 16
      %v1153 = vrot.slane %v1151, 7
      %v1154 = vshll.u32 %v981, 16
      %v1156 = vor.u32 %v1153, %v1154
      %v1157 = vrot.slane %v1153, 4
      %v1159 = vshrl.u32 %v982, 16
      %v1161 = vrot.slane %v1159, 7
      %v1162 = vshll.u32 %v982, 16
      %v1164 = vor.u32 %v1161, %v1162
      %v1165 = vsel %vm996, %v1157, %v1164
      %v1166 = vrot.slane %v1161, 4
      %v1168 = vshrl.u32 %v983, 16
      %v1170 = vrot.slane %v1168, 7
      %v1171 = vshll.u32 %v983, 16
      %v1173 = vor.u32 %v1170, %v1171
      %v1174 = vrot.slane %v1170, 4
      %v1176 = vshrl.u32 %v984, 16
      %v1178 = vrot.slane %v1176, 7
      %v1179 = vshll.u32 %v984, 16
      %v1181 = vor.u32 %v1178, %v1179
      %v1182 = vsel %vm996, %v1174, %v1181
      %v1183 = vrot.slane %v1178, 4
      %v1185 = vshrl.u32 %v985, 16
      %v1187 = vrot.slane %v1185, 7
      %v1188 = vshll.u32 %v985, 16
      %v1190 = vor.u32 %v1187, %v1188
      %v1191 = vrot.slane %v1187, 4
      %v1193 = vshrl.u32 %v986, 16
      %v1195 = vrot.slane %v1193, 7
      %v1196 = vshll.u32 %v986, 16
      %v1198 = vor.u32 %v1195, %v1196
      %v1199 = vsel %vm996, %v1191, %v1198
      %v1200 = vrot.slane %v1195, 4
      %v1202 = vshrl.u32 %v987, 16
      %v1204 = vrot.slane %v1202, 7
      %v1205 = vshll.u32 %v987, 16
      %v1207 = vor.u32 %v1204, %v1205
      %v1208 = vrot.slane %v1204, 4
      %v1210 = vshrl.u32 %v988, 16
      %v1212 = vrot.slane %v1210, 7
      %v1213 = vshll.u32 %v988, 16
      %v1215 = vor.u32 %v1212, %v1213
      %v1216 = vsel %vm996, %v1208, %v1215
      %v1217 = vrot.slane %v1212, 4
      %v1219 = vshrl.u32 %v989, 16
      %v1221 = vrot.slane %v1219, 7
      %v1222 = vshll.u32 %v989, 16
      %v1224 = vor.u32 %v1221, %v1222
      %v1225 = vrot.slane %v1221, 4
      %v1227 = vshrl.u32 %v990, 16
      %v1229 = vrot.slane %v1227, 7
      %v1230 = vshll.u32 %v990, 16
      %v1232 = vor.u32 %v1229, %v1230
      %v1233 = vsel %vm996, %v1225, %v1232
      %v1234 = vrot.slane %v1229, 4
      %v1236 = vshrl.u32 %v991, 16
      %v1238 = vrot.slane %v1236, 7
      %v1239 = vshll.u32 %v991, 16
      %v1241 = vor.u32 %v1238, %v1239
      %v1242 = vrot.slane %v1238, 4
      %v1244 = vshrl.u32 %v992, 16
      %v1246 = vrot.slane %v1244, 7
      %v1247 = vshll.u32 %v992, 16
      %v1249 = vor.u32 %v1246, %v1247
      %v1250 = vsel %vm996, %v1242, %v1249
      %v1251 = vrot.slane %v1246, 4
      %v1253 = vshrl.u32 %v993, 16
      %v1255 = vrot.slane %v1253, 7
      %v1256 = vshll.u32 %v993, 16
      %v1258 = vor.u32 %v1255, %v1256
      %v1259 = vrot.slane %v1255, 4
      %v1261 = vshrl.u32 %v994, 16
      %v1263 = vrot.slane %v1261, 7
      %v1264 = vshll.u32 %v994, 16
      %v1266 = vor.u32 %v1263, %v1264
      %v1267 = vsel %vm996, %v1259, %v1266
      %v1268 = vrot.slane %v1263, 4
      %s1317 = scalar_lea.vmem [#allocation2], 12
      %v1318 = vld [vmem:[%s1317] sm:$0xf]
      %v1319 = vsel %vm860, %v1003, %v1318
      %1320 = vst [vmem:[%s1317] sm:$0xf] %v1319
      %1321 = vst [vmem:[%s1317 + $0x4] sm:$0xf] %v1012
      %v1322 = vld [vmem:[%s1317 + $0x8] sm:$0x1]
      %v1323 = vsel %vm803, %v1013, %v1322
      %1324 = vst [vmem:[%s1317 + $0x8] sm:$0x1] %v1323
      %v1325 = vld [vmem:[%s1317 + $0xc] sm:$0xf]
      %v1326 = vsel %vm860, %v1020, %v1325
      %1327 = vst [vmem:[%s1317 + $0xc] sm:$0xf] %v1326
      %1328 = vst [vmem:[%s1317 + $0x10] sm:$0xf] %v1029
      %v1329 = vld [vmem:[%s1317 + $0x14] sm:$0x1]
      %v1330 = vsel %vm803, %v1030, %v1329
      %1331 = vst [vmem:[%s1317 + $0x14] sm:$0x1] %v1330
      %v1332 = vld [vmem:[%s1317 + $0x18] sm:$0xf]
      %v1333 = vsel %vm860, %v1037, %v1332
      %1334 = vst [vmem:[%s1317 + $0x18] sm:$0xf] %v1333
      %1335 = vst [vmem:[%s1317 + $0x1c] sm:$0xf] %v1046
      %v1336 = vld [vmem:[%s1317 + $0x20] sm:$0x1]
      %v1337 = vsel %vm803, %v1047, %v1336
      %1338 = vst [vmem:[%s1317 + $0x20] sm:$0x1] %v1337
      %v1339 = vld [vmem:[%s1317 + $0x24] sm:$0xf]
      %v1340 = vsel %vm860, %v1054, %v1339
      %1341 = vst [vmem:[%s1317 + $0x24] sm:$0xf] %v1340
      %1342 = vst [vmem:[%s1317 + $0x28] sm:$0xf] %v1063
      %v1343 = vld [vmem:[%s1317 + $0x2c] sm:$0x1]
      %v1344 = vsel %vm803, %v1064, %v1343
      %1345 = vst [vmem:[%s1317 + $0x2c] sm:$0x1] %v1344
      %v1346 = vld [vmem:[%s1317 + $0x30] sm:$0xf]
      %v1347 = vsel %vm860, %v1071, %v1346
      %1348 = vst [vmem:[%s1317 + $0x30] sm:$0xf] %v1347
      %1349 = vst [vmem:[%s1317 + $0x34] sm:$0xf] %v1080
      %v1350 = vld [vmem:[%s1317 + $0x38] sm:$0x1]
      %v1351 = vsel %vm803, %v1081, %v1350
      %1352 = vst [vmem:[%s1317 + $0x38] sm:$0x1] %v1351
      %v1353 = vld [vmem:[%s1317 + $0x3c] sm:$0xf]
      %v1354 = vsel %vm860, %v1088, %v1353
      %1355 = vst [vmem:[%s1317 + $0x3c] sm:$0xf] %v1354
      %1356 = vst [vmem:[%s1317 + $0x40] sm:$0xf] %v1097
      %v1357 = vld [vmem:[%s1317 + $0x44] sm:$0x1]
      %v1358 = vsel %vm803, %v1098, %v1357
      %1359 = vst [vmem:[%s1317 + $0x44] sm:$0x1] %v1358
      %v1360 = vld [vmem:[%s1317 + $0x48] sm:$0xf]
      %v1361 = vsel %vm860, %v1105, %v1360
      %1362 = vst [vmem:[%s1317 + $0x48] sm:$0xf] %v1361
      %1363 = vst [vmem:[%s1317 + $0x4c] sm:$0xf] %v1114
      %v1364 = vld [vmem:[%s1317 + $0x50] sm:$0x1]
      %v1365 = vsel %vm803, %v1115, %v1364
      %1366 = vst [vmem:[%s1317 + $0x50] sm:$0x1] %v1365
      %v1367 = vld [vmem:[%s1317 + $0x54] sm:$0xf]
      %v1368 = vsel %vm860, %v1122, %v1367
      %1369 = vst [vmem:[%s1317 + $0x54] sm:$0xf] %v1368
      %1370 = vst [vmem:[%s1317 + $0x58] sm:$0xf] %v1131
      %v1371 = vld [vmem:[%s1317 + $0x5c] sm:$0x1]
      %v1372 = vsel %vm803, %v1132, %v1371
      %1373 = vst [vmem:[%s1317 + $0x5c] sm:$0x1] %v1372
      %v1374 = vld [vmem:[%s1317 + $0x60] sm:$0xf]
      %v1375 = vsel %vm860, %v1139, %v1374
      %1376 = vst [vmem:[%s1317 + $0x60] sm:$0xf] %v1375
      %1377 = vst [vmem:[%s1317 + $0x64] sm:$0xf] %v1148
      %v1378 = vld [vmem:[%s1317 + $0x68] sm:$0x1]
      %v1379 = vsel %vm803, %v1149, %v1378
      %1380 = vst [vmem:[%s1317 + $0x68] sm:$0x1] %v1379
      %v1381 = vld [vmem:[%s1317 + $0x6c] sm:$0xf]
      %v1382 = vsel %vm860, %v1156, %v1381
      %1383 = vst [vmem:[%s1317 + $0x6c] sm:$0xf] %v1382
      %1384 = vst [vmem:[%s1317 + $0x70] sm:$0xf] %v1165
      %v1385 = vld [vmem:[%s1317 + $0x74] sm:$0x1]
      %v1386 = vsel %vm803, %v1166, %v1385
      %1387 = vst [vmem:[%s1317 + $0x74] sm:$0x1] %v1386
      %v1388 = vld [vmem:[%s1317 + $0x78] sm:$0xf]
      %v1389 = vsel %vm860, %v1173, %v1388
      %1390 = vst [vmem:[%s1317 + $0x78] sm:$0xf] %v1389
      %1391 = vst [vmem:[%s1317 + $0x7c] sm:$0xf] %v1182
      %v1392 = vld [vmem:[%s1317 + $0x80] sm:$0x1]
      %v1393 = vsel %vm803, %v1183, %v1392
      %1394 = vst [vmem:[%s1317 + $0x80] sm:$0x1] %v1393
      %v1395 = vld [vmem:[%s1317 + $0x84] sm:$0xf]
      %v1396 = vsel %vm860, %v1190, %v1395
      %1397 = vst [vmem:[%s1317 + $0x84] sm:$0xf] %v1396
      %1398 = vst [vmem:[%s1317 + $0x88] sm:$0xf] %v1199
      %v1399 = vld [vmem:[%s1317 + $0x8c] sm:$0x1]
      %v1400 = vsel %vm803, %v1200, %v1399
      %1401 = vst [vmem:[%s1317 + $0x8c] sm:$0x1] %v1400
      %v1402 = vld [vmem:[%s1317 + $0x90] sm:$0xf]
      %v1403 = vsel %vm860, %v1207, %v1402
      %1404 = vst [vmem:[%s1317 + $0x90] sm:$0xf] %v1403
      %1405 = vst [vmem:[%s1317 + $0x94] sm:$0xf] %v1216
      %v1406 = vld [vmem:[%s1317 + $0x98] sm:$0x1]
      %v1407 = vsel %vm803, %v1217, %v1406
      %1408 = vst [vmem:[%s1317 + $0x98] sm:$0x1] %v1407
      %v1409 = vld [vmem:[%s1317 + $0x9c] sm:$0xf]
      %v1410 = vsel %vm860, %v1224, %v1409
      %1411 = vst [vmem:[%s1317 + $0x9c] sm:$0xf] %v1410
      %1412 = vst [vmem:[%s1317 + $0xa0] sm:$0xf] %v1233
      %v1413 = vld [vmem:[%s1317 + $0xa4] sm:$0x1]
      %v1414 = vsel %vm803, %v1234, %v1413
      %1415 = vst [vmem:[%s1317 + $0xa4] sm:$0x1] %v1414
      %v1416 = vld [vmem:[%s1317 + $0xa8] sm:$0xf]
      %v1417 = vsel %vm860, %v1241, %v1416
      %1418 = vst [vmem:[%s1317 + $0xa8] sm:$0xf] %v1417
      %1419 = vst [vmem:[%s1317 + $0xac] sm:$0xf] %v1250
      %v1420 = vld [vmem:[%s1317 + $0xb0] sm:$0x1]
      %v1421 = vsel %vm803, %v1251, %v1420
      %1422 = vst [vmem:[%s1317 + $0xb0] sm:$0x1] %v1421
      %v1423 = vld [vmem:[%s1317 + $0xb4] sm:$0xf]
      %v1424 = vsel %vm860, %v1258, %v1423
      %1425 = vst [vmem:[%s1317 + $0xb4] sm:$0xf] %v1424
      %1426 = vst [vmem:[%s1317 + $0xb8] sm:$0xf] %v1267
      %v1427 = vld [vmem:[%s1317 + $0xbc] sm:$0x1]
      %v1428 = vsel %vm803, %v1268, %v1427
      %1429 = vst [vmem:[%s1317 + $0xbc] sm:$0x1] %v1428
      %v1430 = vld [vmem:[#allocation2] sm:$0xf]
      %v1431 = vld [vmem:[#allocation2 + $0x4] sm:$0xf]
      %v1432 = vld [vmem:[#allocation2 + $0xc] sm:$0xf]
      %v1433 = vld [vmem:[#allocation2 + $0x10] sm:$0xf]
      %v1434 = vld [vmem:[#allocation2 + $0x18] sm:$0xf]
      %v1435 = vld [vmem:[#allocation2 + $0x1c] sm:$0xf]
      %v1436 = vld [vmem:[#allocation2 + $0x24] sm:$0xf]
      %v1437 = vld [vmem:[#allocation2 + $0x28] sm:$0xf]
      %v1438 = vld [vmem:[#allocation2 + $0x30] sm:$0xf]
      %v1439 = vld [vmem:[#allocation2 + $0x34] sm:$0xf]
      %v1440 = vld [vmem:[#allocation2 + $0x3c] sm:$0xf]
      %v1441 = vld [vmem:[#allocation2 + $0x40] sm:$0xf]
      %v1442 = vld [vmem:[#allocation2 + $0x48] sm:$0xf]
      %v1443 = vld [vmem:[#allocation2 + $0x4c] sm:$0xf]
      %v1444 = vld [vmem:[#allocation2 + $0x54] sm:$0xf]
      %v1445 = vld [vmem:[#allocation2 + $0x58] sm:$0xf]
      %v1446 = vld [vmem:[#allocation2 + $0x60] sm:$0xf]
      %v1447 = vld [vmem:[#allocation2 + $0x64] sm:$0xf]
      %v1448 = vld [vmem:[#allocation2 + $0x6c] sm:$0xf]
      %v1449 = vld [vmem:[#allocation2 + $0x70] sm:$0xf]
      %v1450 = vld [vmem:[#allocation2 + $0x78] sm:$0xf]
      %v1451 = vld [vmem:[#allocation2 + $0x7c] sm:$0xf]
      %v1452 = vld [vmem:[#allocation2 + $0x84] sm:$0xf]
      %v1453 = vld [vmem:[#allocation2 + $0x88] sm:$0xf]
      %v1454 = vld [vmem:[#allocation2 + $0x90] sm:$0xf]
      %v1455 = vld [vmem:[#allocation2 + $0x94] sm:$0xf]
      %v1456 = vld [vmem:[#allocation2 + $0x9c] sm:$0xf]
      %v1457 = vld [vmem:[#allocation2 + $0xa0] sm:$0xf]
      %v1458 = vld [vmem:[#allocation2 + $0xa8] sm:$0xf]
      %v1459 = vld [vmem:[#allocation2 + $0xac] sm:$0xf]
      %v1460 = vld [vmem:[#allocation2 + $0xb4] sm:$0xf]
      %v1461 = vld [vmem:[#allocation2 + $0xb8] sm:$0xf]
      %1462 = vst [vmem:[#allocation3] sm:$0xf] %v1430
      %1463 = vst [vmem:[#allocation3 + $0x24] sm:$0xf] %v1431
      %1464 = vst [vmem:[#allocation3 + $0x48] sm:$0xf] %v1432
      %1465 = vst [vmem:[#allocation3 + $0x6c] sm:$0xf] %v1433
      %1466 = vst [vmem:[#allocation3 + $0x90] sm:$0xf] %v1434
      %1467 = vst [vmem:[#allocation3 + $0xb4] sm:$0xf] %v1435
      %1468 = vst [vmem:[#allocation3 + $0xd8] sm:$0xf] %v1436
      %1469 = vst [vmem:[#allocation3 + $0xfc] sm:$0xf] %v1437
      %1470 = vst [vmem:[#allocation3 + $0x120] sm:$0xf] %v1438
      %1471 = vst [vmem:[#allocation3 + $0x144] sm:$0xf] %v1439
      %1472 = vst [vmem:[#allocation3 + $0x168] sm:$0xf] %v1440
      %1473 = vst [vmem:[#allocation3 + $0x18c] sm:$0xf] %v1441
      %1474 = vst [vmem:[#allocation3 + $0x1b0] sm:$0xf] %v1442
      %1475 = vst [vmem:[#allocation3 + $0x1d4] sm:$0xf] %v1443
      %1476 = vst [vmem:[#allocation3 + $0x1f8] sm:$0xf] %v1444
      %1477 = vst [vmem:[#allocation3 + $0x21c] sm:$0xf] %v1445
      %1478 = vst [vmem:[#allocation3 + $0x240] sm:$0xf] %v1446
      %1479 = vst [vmem:[#allocation3 + $0x264] sm:$0xf] %v1447
      %1480 = vst [vmem:[#allocation3 + $0x288] sm:$0xf] %v1448
      %1481 = vst [vmem:[#allocation3 + $0x2ac] sm:$0xf] %v1449
      %1482 = vst [vmem:[#allocation3 + $0x2d0] sm:$0xf] %v1450
      %1483 = vst [vmem:[#allocation3 + $0x2f4] sm:$0xf] %v1451
      %1484 = vst [vmem:[#allocation3 + $0x318] sm:$0xf] %v1452
      %1485 = vst [vmem:[#allocation3 + $0x33c] sm:$0xf] %v1453
      %1486 = vst [vmem:[#allocation3 + $0x360] sm:$0xf] %v1454
      %1487 = vst [vmem:[#allocation3 + $0x384] sm:$0xf] %v1455
      %1488 = vst [vmem:[#allocation3 + $0x3a8] sm:$0xf] %v1456
      %1489 = vst [vmem:[#allocation3 + $0x3cc] sm:$0xf] %v1457
      %1490 = vst [vmem:[#allocation3 + $0x3f0] sm:$0xf] %v1458
      %1491 = vst [vmem:[#allocation3 + $0x414] sm:$0xf] %v1459
      %1492 = vst [vmem:[#allocation3 + $0x438] sm:$0xf] %v1460
      %1493 = vst [vmem:[#allocation3 + $0x45c] sm:$0xf] %v1461
      %v1494 = vld [vmem:[#allocation2] sm:$0xf]
      %v1495 = vld [vmem:[#allocation2 + $0x4] sm:$0xf]
      %v1496 = vld [vmem:[#allocation2 + $0x8] sm:$0x1]
      %v1497 = vld [vmem:[#allocation2 + $0xc] sm:$0xf]
      %v1498 = vld [vmem:[#allocation2 + $0x10] sm:$0xf]
      %v1499 = vld [vmem:[#allocation2 + $0x14] sm:$0x1]
      %v1500 = vld [vmem:[#allocation2 + $0x18] sm:$0xf]
      %v1501 = vld [vmem:[#allocation2 + $0x1c] sm:$0xf]
      %v1502 = vld [vmem:[#allocation2 + $0x20] sm:$0x1]
      %v1503 = vld [vmem:[#allocation2 + $0x24] sm:$0xf]
      %v1504 = vld [vmem:[#allocation2 + $0x28] sm:$0xf]
      %v1505 = vld [vmem:[#allocation2 + $0x2c] sm:$0x1]
      %v1506 = vld [vmem:[#allocation2 + $0x30] sm:$0xf]
      %v1507 = vld [vmem:[#allocation2 + $0x34] sm:$0xf]
      %v1508 = vld [vmem:[#allocation2 + $0x38] sm:$0x1]
      %v1509 = vld [vmem:[#allocation2 + $0x3c] sm:$0xf]
      %v1510 = vld [vmem:[#allocation2 + $0x40] sm:$0xf]
      %v1511 = vld [vmem:[#allocation2 + $0x44] sm:$0x1]
      %v1512 = vld [vmem:[#allocation2 + $0x48] sm:$0xf]
      %v1513 = vld [vmem:[#allocation2 + $0x4c] sm:$0xf]
      %v1514 = vld [vmem:[#allocation2 + $0x50] sm:$0x1]
      %v1515 = vld [vmem:[#allocation2 + $0x54] sm:$0xf]
      %v1516 = vld [vmem:[#allocation2 + $0x58] sm:$0xf]
      %v1517 = vld [vmem:[#allocation2 + $0x5c] sm:$0x1]
      %v1518 = vld [vmem:[#allocation2 + $0x60] sm:$0xf]
      %v1519 = vld [vmem:[#allocation2 + $0x64] sm:$0xf]
      %v1520 = vld [vmem:[#allocation2 + $0x68] sm:$0x1]
      %v1521 = vld [vmem:[#allocation2 + $0x6c] sm:$0xf]
      %v1522 = vld [vmem:[#allocation2 + $0x70] sm:$0xf]
      %v1523 = vld [vmem:[#allocation2 + $0x74] sm:$0x1]
      %v1524 = vld [vmem:[#allocation2 + $0x78] sm:$0xf]
      %v1525 = vld [vmem:[#allocation2 + $0x7c] sm:$0xf]
      %v1526 = vld [vmem:[#allocation2 + $0x80] sm:$0x1]
      %v1527 = vld [vmem:[#allocation2 + $0x84] sm:$0xf]
      %v1528 = vld [vmem:[#allocation2 + $0x88] sm:$0xf]
      %v1529 = vld [vmem:[#allocation2 + $0x8c] sm:$0x1]
      %v1530 = vld [vmem:[#allocation2 + $0x90] sm:$0xf]
      %v1531 = vld [vmem:[#allocation2 + $0x94] sm:$0xf]
      %v1532 = vld [vmem:[#allocation2 + $0x98] sm:$0x1]
      %v1533 = vld [vmem:[#allocation2 + $0x9c] sm:$0xf]
      %v1534 = vld [vmem:[#allocation2 + $0xa0] sm:$0xf]
      %v1535 = vld [vmem:[#allocation2 + $0xa4] sm:$0x1]
      %v1536 = vld [vmem:[#allocation2 + $0xa8] sm:$0xf]
      %v1537 = vld [vmem:[#allocation2 + $0xac] sm:$0xf]
      %v1538 = vld [vmem:[#allocation2 + $0xb0] sm:$0x1]
      %v1539 = vld [vmem:[#allocation2 + $0xb4] sm:$0xf]
      %v1540 = vld [vmem:[#allocation2 + $0xb8] sm:$0xf]
      %v1541 = vld [vmem:[#allocation2 + $0xbc] sm:$0x1]
      %vm1542 = vsmask.f32 3328
      %vm1543 = vsmask.f32 7440
      %vm1544 = vmor %vm1542, %vm1543
      %v1546 = vshrl.u32 %v1494, 16
      %v1548 = vrot.slane %v1546, 4
      %v1549 = vshll.u32 %v1494, 16
      %v1551 = vrot.slane %v1549, 5
      %v1552 = vor.u32 %v1548, %v1551
      %v1553 = vrot.slane %v1552, 4
      %v1555 = vshll.u32 %v1495, 16
      %v1557 = vrot.slane %v1555, 5
      %v1558 = vsel %vm1544, %v1553, %v1557
      %v1559 = vshrl.u32 %v1495, 16
      %v1561 = vrot.slane %v1559, 4
      %v1562 = vor.u32 %v1561, %v1557
      %v1563 = vrot.slane %v1562, 4
      %v1565 = vshll.u32 %v1496, 16
      %v1567 = vrot.slane %v1565, 5
      %v1568 = vsel %vm1544, %v1563, %v1567
      %v1570 = vshrl.u32 %v1497, 16
      %v1572 = vrot.slane %v1570, 4
      %v1573 = vshll.u32 %v1497, 16
      %v1575 = vrot.slane %v1573, 5
      %v1576 = vor.u32 %v1572, %v1575
      %v1577 = vrot.slane %v1576, 4
      %v1579 = vshll.u32 %v1498, 16
      %v1581 = vrot.slane %v1579, 5
      %v1582 = vsel %vm1544, %v1577, %v1581
      %v1583 = vshrl.u32 %v1498, 16
      %v1585 = vrot.slane %v1583, 4
      %v1586 = vor.u32 %v1585, %v1581
      %v1587 = vrot.slane %v1586, 4
      %v1589 = vshll.u32 %v1499, 16
      %v1591 = vrot.slane %v1589, 5
      %v1592 = vsel %vm1544, %v1587, %v1591
      %v1594 = vshrl.u32 %v1500, 16
      %v1596 = vrot.slane %v1594, 4
      %v1597 = vshll.u32 %v1500, 16
      %v1599 = vrot.slane %v1597, 5
      %v1600 = vor.u32 %v1596, %v1599
      %v1601 = vrot.slane %v1600, 4
      %v1603 = vshll.u32 %v1501, 16
      %v1605 = vrot.slane %v1603, 5
      %v1606 = vsel %vm1544, %v1601, %v1605
      %v1607 = vshrl.u32 %v1501, 16
      %v1609 = vrot.slane %v1607, 4
      %v1610 = vor.u32 %v1609, %v1605
      %v1611 = vrot.slane %v1610, 4
      %v1613 = vshll.u32 %v1502, 16
      %v1615 = vrot.slane %v1613, 5
      %v1616 = vsel %vm1544, %v1611, %v1615
      %v1618 = vshrl.u32 %v1503, 16
      %v1620 = vrot.slane %v1618, 4
      %v1621 = vshll.u32 %v1503, 16
      %v1623 = vrot.slane %v1621, 5
      %v1624 = vor.u32 %v1620, %v1623
      %v1625 = vrot.slane %v1624, 4
      %v1627 = vshll.u32 %v1504, 16
      %v1629 = vrot.slane %v1627, 5
      %v1630 = vsel %vm1544, %v1625, %v1629
      %v1631 = vshrl.u32 %v1504, 16
      %v1633 = vrot.slane %v1631, 4
      %v1634 = vor.u32 %v1633, %v1629
      %v1635 = vrot.slane %v1634, 4
      %v1637 = vshll.u32 %v1505, 16
      %v1639 = vrot.slane %v1637, 5
      %v1640 = vsel %vm1544, %v1635, %v1639
      %v1642 = vshrl.u32 %v1506, 16
      %v1644 = vrot.slane %v1642, 4
      %v1645 = vshll.u32 %v1506, 16
      %v1647 = vrot.slane %v1645, 5
      %v1648 = vor.u32 %v1644, %v1647
      %v1649 = vrot.slane %v1648, 4
      %v1651 = vshll.u32 %v1507, 16
      %v1653 = vrot.slane %v1651, 5
      %v1654 = vsel %vm1544, %v1649, %v1653
      %v1655 = vshrl.u32 %v1507, 16
      %v1657 = vrot.slane %v1655, 4
      %v1658 = vor.u32 %v1657, %v1653
      %v1659 = vrot.slane %v1658, 4
      %v1661 = vshll.u32 %v1508, 16
      %v1663 = vrot.slane %v1661, 5
      %v1664 = vsel %vm1544, %v1659, %v1663
      %v1666 = vshrl.u32 %v1509, 16
      %v1668 = vrot.slane %v1666, 4
      %v1669 = vshll.u32 %v1509, 16
      %v1671 = vrot.slane %v1669, 5
      %v1672 = vor.u32 %v1668, %v1671
      %v1673 = vrot.slane %v1672, 4
      %v1675 = vshll.u32 %v1510, 16
      %v1677 = vrot.slane %v1675, 5
      %v1678 = vsel %vm1544, %v1673, %v1677
      %v1679 = vshrl.u32 %v1510, 16
      %v1681 = vrot.slane %v1679, 4
      %v1682 = vor.u32 %v1681, %v1677
      %v1683 = vrot.slane %v1682, 4
      %v1685 = vshll.u32 %v1511, 16
      %v1687 = vrot.slane %v1685, 5
      %v1688 = vsel %vm1544, %v1683, %v1687
      %v1690 = vshrl.u32 %v1512, 16
      %v1692 = vrot.slane %v1690, 4
      %v1693 = vshll.u32 %v1512, 16
      %v1695 = vrot.slane %v1693, 5
      %v1696 = vor.u32 %v1692, %v1695
      %v1697 = vrot.slane %v1696, 4
      %v1699 = vshll.u32 %v1513, 16
      %v1701 = vrot.slane %v1699, 5
      %v1702 = vsel %vm1544, %v1697, %v1701
      %v1703 = vshrl.u32 %v1513, 16
      %v1705 = vrot.slane %v1703, 4
      %v1706 = vor.u32 %v1705, %v1701
      %v1707 = vrot.slane %v1706, 4
      %v1709 = vshll.u32 %v1514, 16
      %v1711 = vrot.slane %v1709, 5
      %v1712 = vsel %vm1544, %v1707, %v1711
      %v1714 = vshrl.u32 %v1515, 16
      %v1716 = vrot.slane %v1714, 4
      %v1717 = vshll.u32 %v1515, 16
      %v1719 = vrot.slane %v1717, 5
      %v1720 = vor.u32 %v1716, %v1719
      %v1721 = vrot.slane %v1720, 4
      %v1723 = vshll.u32 %v1516, 16
      %v1725 = vrot.slane %v1723, 5
      %v1726 = vsel %vm1544, %v1721, %v1725
      %v1727 = vshrl.u32 %v1516, 16
      %v1729 = vrot.slane %v1727, 4
      %v1730 = vor.u32 %v1729, %v1725
      %v1731 = vrot.slane %v1730, 4
      %v1733 = vshll.u32 %v1517, 16
      %v1735 = vrot.slane %v1733, 5
      %v1736 = vsel %vm1544, %v1731, %v1735
      %v1738 = vshrl.u32 %v1518, 16
      %v1740 = vrot.slane %v1738, 4
      %v1741 = vshll.u32 %v1518, 16
      %v1743 = vrot.slane %v1741, 5
      %v1744 = vor.u32 %v1740, %v1743
      %v1745 = vrot.slane %v1744, 4
      %v1747 = vshll.u32 %v1519, 16
      %v1749 = vrot.slane %v1747, 5
      %v1750 = vsel %vm1544, %v1745, %v1749
      %v1751 = vshrl.u32 %v1519, 16
      %v1753 = vrot.slane %v1751, 4
      %v1754 = vor.u32 %v1753, %v1749
      %v1755 = vrot.slane %v1754, 4
      %v1757 = vshll.u32 %v1520, 16
      %v1759 = vrot.slane %v1757, 5
      %v1760 = vsel %vm1544, %v1755, %v1759
      %v1762 = vshrl.u32 %v1521, 16
      %v1764 = vrot.slane %v1762, 4
      %v1765 = vshll.u32 %v1521, 16
      %v1767 = vrot.slane %v1765, 5
      %v1768 = vor.u32 %v1764, %v1767
      %v1769 = vrot.slane %v1768, 4
      %v1771 = vshll.u32 %v1522, 16
      %v1773 = vrot.slane %v1771, 5
      %v1774 = vsel %vm1544, %v1769, %v1773
      %v1775 = vshrl.u32 %v1522, 16
      %v1777 = vrot.slane %v1775, 4
      %v1778 = vor.u32 %v1777, %v1773
      %v1779 = vrot.slane %v1778, 4
      %v1781 = vshll.u32 %v1523, 16
      %v1783 = vrot.slane %v1781, 5
      %v1784 = vsel %vm1544, %v1779, %v1783
      %v1786 = vshrl.u32 %v1524, 16
      %v1788 = vrot.slane %v1786, 4
      %v1789 = vshll.u32 %v1524, 16
      %v1791 = vrot.slane %v1789, 5
      %v1792 = vor.u32 %v1788, %v1791
      %v1793 = vrot.slane %v1792, 4
      %v1795 = vshll.u32 %v1525, 16
      %v1797 = vrot.slane %v1795, 5
      %v1798 = vsel %vm1544, %v1793, %v1797
      %v1799 = vshrl.u32 %v1525, 16
      %v1801 = vrot.slane %v1799, 4
      %v1802 = vor.u32 %v1801, %v1797
      %v1803 = vrot.slane %v1802, 4
      %v1805 = vshll.u32 %v1526, 16
      %v1807 = vrot.slane %v1805, 5
      %v1808 = vsel %vm1544, %v1803, %v1807
      %v1810 = vshrl.u32 %v1527, 16
      %v1812 = vrot.slane %v1810, 4
      %v1813 = vshll.u32 %v1527, 16
      %v1815 = vrot.slane %v1813, 5
      %v1816 = vor.u32 %v1812, %v1815
      %v1817 = vrot.slane %v1816, 4
      %v1819 = vshll.u32 %v1528, 16
      %v1821 = vrot.slane %v1819, 5
      %v1822 = vsel %vm1544, %v1817, %v1821
      %v1823 = vshrl.u32 %v1528, 16
      %v1825 = vrot.slane %v1823, 4
      %v1826 = vor.u32 %v1825, %v1821
      %v1827 = vrot.slane %v1826, 4
      %v1829 = vshll.u32 %v1529, 16
      %v1831 = vrot.slane %v1829, 5
      %v1832 = vsel %vm1544, %v1827, %v1831
      %v1834 = vshrl.u32 %v1530, 16
      %v1836 = vrot.slane %v1834, 4
      %v1837 = vshll.u32 %v1530, 16
      %v1839 = vrot.slane %v1837, 5
      %v1840 = vor.u32 %v1836, %v1839
      %v1841 = vrot.slane %v1840, 4
      %v1843 = vshll.u32 %v1531, 16
      %v1845 = vrot.slane %v1843, 5
      %v1846 = vsel %vm1544, %v1841, %v1845
      %v1847 = vshrl.u32 %v1531, 16
      %v1849 = vrot.slane %v1847, 4
      %v1850 = vor.u32 %v1849, %v1845
      %v1851 = vrot.slane %v1850, 4
      %v1853 = vshll.u32 %v1532, 16
      %v1855 = vrot.slane %v1853, 5
      %v1856 = vsel %vm1544, %v1851, %v1855
      %v1858 = vshrl.u32 %v1533, 16
      %v1860 = vrot.slane %v1858, 4
      %v1861 = vshll.u32 %v1533, 16
      %v1863 = vrot.slane %v1861, 5
      %v1864 = vor.u32 %v1860, %v1863
      %v1865 = vrot.slane %v1864, 4
      %v1867 = vshll.u32 %v1534, 16
      %v1869 = vrot.slane %v1867, 5
      %v1870 = vsel %vm1544, %v1865, %v1869
      %v1871 = vshrl.u32 %v1534, 16
      %v1873 = vrot.slane %v1871, 4
      %v1874 = vor.u32 %v1873, %v1869
      %v1875 = vrot.slane %v1874, 4
      %v1877 = vshll.u32 %v1535, 16
      %v1879 = vrot.slane %v1877, 5
      %v1880 = vsel %vm1544, %v1875, %v1879
      %v1882 = vshrl.u32 %v1536, 16
      %v1884 = vrot.slane %v1882, 4
      %v1885 = vshll.u32 %v1536, 16
      %v1887 = vrot.slane %v1885, 5
      %v1888 = vor.u32 %v1884, %v1887
      %v1889 = vrot.slane %v1888, 4
      %v1891 = vshll.u32 %v1537, 16
      %v1893 = vrot.slane %v1891, 5
      %v1894 = vsel %vm1544, %v1889, %v1893
      %v1895 = vshrl.u32 %v1537, 16
      %v1897 = vrot.slane %v1895, 4
      %v1898 = vor.u32 %v1897, %v1893
      %v1899 = vrot.slane %v1898, 4
      %v1901 = vshll.u32 %v1538, 16
      %v1903 = vrot.slane %v1901, 5
      %v1904 = vsel %vm1544, %v1899, %v1903
      %v1906 = vshrl.u32 %v1539, 16
      %v1908 = vrot.slane %v1906, 4
      %v1909 = vshll.u32 %v1539, 16
      %v1911 = vrot.slane %v1909, 5
      %v1912 = vor.u32 %v1908, %v1911
      %v1913 = vrot.slane %v1912, 4
      %v1915 = vshll.u32 %v1540, 16
      %v1917 = vrot.slane %v1915, 5
      %v1918 = vsel %vm1544, %v1913, %v1917
      %v1919 = vshrl.u32 %v1540, 16
      %v1921 = vrot.slane %v1919, 4
      %v1922 = vor.u32 %v1921, %v1917
      %v1923 = vrot.slane %v1922, 4
      %v1925 = vshll.u32 %v1541, 16
      %v1927 = vrot.slane %v1925, 5
      %v1928 = vsel %vm1544, %v1923, %v1927
      %1961 = vst [vmem:[#allocation3 + $0x4] sm:$0xf] %v1558
      %1962 = vst [vmem:[#allocation3 + $0x28] sm:$0xf] %v1568
      %1963 = vst [vmem:[#allocation3 + $0x4c] sm:$0xf] %v1582
      %1964 = vst [vmem:[#allocation3 + $0x70] sm:$0xf] %v1592
      %1965 = vst [vmem:[#allocation3 + $0x94] sm:$0xf] %v1606
      %1966 = vst [vmem:[#allocation3 + $0xb8] sm:$0xf] %v1616
      %1967 = vst [vmem:[#allocation3 + $0xdc] sm:$0xf] %v1630
      %1968 = vst [vmem:[#allocation3 + $0x100] sm:$0xf] %v1640
      %1969 = vst [vmem:[#allocation3 + $0x124] sm:$0xf] %v1654
      %1970 = vst [vmem:[#allocation3 + $0x148] sm:$0xf] %v1664
      %1971 = vst [vmem:[#allocation3 + $0x16c] sm:$0xf] %v1678
      %1972 = vst [vmem:[#allocation3 + $0x190] sm:$0xf] %v1688
      %1973 = vst [vmem:[#allocation3 + $0x1b4] sm:$0xf] %v1702
      %1974 = vst [vmem:[#allocation3 + $0x1d8] sm:$0xf] %v1712
      %1975 = vst [vmem:[#allocation3 + $0x1fc] sm:$0xf] %v1726
      %1976 = vst [vmem:[#allocation3 + $0x220] sm:$0xf] %v1736
      %1977 = vst [vmem:[#allocation3 + $0x244] sm:$0xf] %v1750
      %1978 = vst [vmem:[#allocation3 + $0x268] sm:$0xf] %v1760
      %1979 = vst [vmem:[#allocation3 + $0x28c] sm:$0xf] %v1774
      %1980 = vst [vmem:[#allocation3 + $0x2b0] sm:$0xf] %v1784
      %1981 = vst [vmem:[#allocation3 + $0x2d4] sm:$0xf] %v1798
      %1982 = vst [vmem:[#allocation3 + $0x2f8] sm:$0xf] %v1808
      %1983 = vst [vmem:[#allocation3 + $0x31c] sm:$0xf] %v1822
      %1984 = vst [vmem:[#allocation3 + $0x340] sm:$0xf] %v1832
      %1985 = vst [vmem:[#allocation3 + $0x364] sm:$0xf] %v1846
      %1986 = vst [vmem:[#allocation3 + $0x388] sm:$0xf] %v1856
      %1987 = vst [vmem:[#allocation3 + $0x3ac] sm:$0xf] %v1870
      %1988 = vst [vmem:[#allocation3 + $0x3d0] sm:$0xf] %v1880
      %1989 = vst [vmem:[#allocation3 + $0x3f4] sm:$0xf] %v1894
      %1990 = vst [vmem:[#allocation3 + $0x418] sm:$0xf] %v1904
      %1991 = vst [vmem:[#allocation3 + $0x43c] sm:$0xf] %v1918
      %1992 = vst [vmem:[#allocation3 + $0x460] sm:$0xf] %v1928
      %v1993 = vld [vmem:[#allocation2] sm:$0xe]
      %v1994 = vld [vmem:[#allocation2 + $0x4] sm:$0xf]
      %v1995 = vld [vmem:[#allocation2 + $0x8] sm:$0x1]
      %v1996 = vld [vmem:[#allocation2 + $0xc] sm:$0xe]
      %v1997 = vld [vmem:[#allocation2 + $0x10] sm:$0xf]
      %v1998 = vld [vmem:[#allocation2 + $0x14] sm:$0x1]
      %v1999 = vld [vmem:[#allocation2 + $0x18] sm:$0xe]
      %v2000 = vld [vmem:[#allocation2 + $0x1c] sm:$0xf]
      %v2001 = vld [vmem:[#allocation2 + $0x20] sm:$0x1]
      %v2002 = vld [vmem:[#allocation2 + $0x24] sm:$0xe]
      %v2003 = vld [vmem:[#allocation2 + $0x28] sm:$0xf]
      %v2004 = vld [vmem:[#allocation2 + $0x2c] sm:$0x1]
      %v2005 = vld [vmem:[#allocation2 + $0x30] sm:$0xe]
      %v2006 = vld [vmem:[#allocation2 + $0x34] sm:$0xf]
      %v2007 = vld [vmem:[#allocation2 + $0x38] sm:$0x1]
      %v2008 = vld [vmem:[#allocation2 + $0x3c] sm:$0xe]
      %v2009 = vld [vmem:[#allocation2 + $0x40] sm:$0xf]
      %v2010 = vld [vmem:[#allocation2 + $0x44] sm:$0x1]
      %v2011 = vld [vmem:[#allocation2 + $0x48] sm:$0xe]
      %v2012 = vld [vmem:[#allocation2 + $0x4c] sm:$0xf]
      %v2013 = vld [vmem:[#allocation2 + $0x50] sm:$0x1]
      %v2014 = vld [vmem:[#allocation2 + $0x54] sm:$0xe]
      %v2015 = vld [vmem:[#allocation2 + $0x58] sm:$0xf]
      %v2016 = vld [vmem:[#allocation2 + $0x5c] sm:$0x1]
      %v2017 = vld [vmem:[#allocation2 + $0x60] sm:$0xe]
      %v2018 = vld [vmem:[#allocation2 + $0x64] sm:$0xf]
      %v2019 = vld [vmem:[#allocation2 + $0x68] sm:$0x1]
      %v2020 = vld [vmem:[#allocation2 + $0x6c] sm:$0xe]
      %v2021 = vld [vmem:[#allocation2 + $0x70] sm:$0xf]
      %v2022 = vld [vmem:[#allocation2 + $0x74] sm:$0x1]
      %v2023 = vld [vmem:[#allocation2 + $0x78] sm:$0xe]
      %v2024 = vld [vmem:[#allocation2 + $0x7c] sm:$0xf]
      %v2025 = vld [vmem:[#allocation2 + $0x80] sm:$0x1]
      %v2026 = vld [vmem:[#allocation2 + $0x84] sm:$0xe]
      %v2027 = vld [vmem:[#allocation2 + $0x88] sm:$0xf]
      %v2028 = vld [vmem:[#allocation2 + $0x8c] sm:$0x1]
      %v2029 = vld [vmem:[#allocation2 + $0x90] sm:$0xe]
      %v2030 = vld [vmem:[#allocation2 + $0x94] sm:$0xf]
      %v2031 = vld [vmem:[#allocation2 + $0x98] sm:$0x1]
      %v2032 = vld [vmem:[#allocation2 + $0x9c] sm:$0xe]
      %v2033 = vld [vmem:[#allocation2 + $0xa0] sm:$0xf]
      %v2034 = vld [vmem:[#allocation2 + $0xa4] sm:$0x1]
      %v2035 = vld [vmem:[#allocation2 + $0xa8] sm:$0xe]
      %v2036 = vld [vmem:[#allocation2 + $0xac] sm:$0xf]
      %v2037 = vld [vmem:[#allocation2 + $0xb0] sm:$0x1]
      %v2038 = vld [vmem:[#allocation2 + $0xb4] sm:$0xe]
      %v2039 = vld [vmem:[#allocation2 + $0xb8] sm:$0xf]
      %v2040 = vld [vmem:[#allocation2 + $0xbc] sm:$0x1]
      %vm2089 = vcmask 1042432
      %vm2090 = vcmask 1046532
      %vm2091 = vmor %vm2089, %vm2090
      %v2092 = vrot.slane %v1993, 5
      %v2093 = vrot.slane %v2092, 4
      %v2094 = vrot.slane %v1994, 5
      %v2095 = vsel %vm2091, %v2093, %v2094
      %v2096 = vrot.slane %v2094, 4
      %v2097 = vrot.slane %v1995, 5
      %v2098 = vsel %vm2091, %v2096, %v2097
      %v2099 = vrot.slane %v1996, 5
      %v2100 = vrot.slane %v2099, 4
      %v2101 = vrot.slane %v1997, 5
      %v2102 = vsel %vm2091, %v2100, %v2101
      %v2103 = vrot.slane %v2101, 4
      %v2104 = vrot.slane %v1998, 5
      %v2105 = vsel %vm2091, %v2103, %v2104
      %v2106 = vrot.slane %v1999, 5
      %v2107 = vrot.slane %v2106, 4
      %v2108 = vrot.slane %v2000, 5
      %v2109 = vsel %vm2091, %v2107, %v2108
      %v2110 = vrot.slane %v2108, 4
      %v2111 = vrot.slane %v2001, 5
      %v2112 = vsel %vm2091, %v2110, %v2111
      %v2113 = vrot.slane %v2002, 5
      %v2114 = vrot.slane %v2113, 4
      %v2115 = vrot.slane %v2003, 5
      %v2116 = vsel %vm2091, %v2114, %v2115
      %v2117 = vrot.slane %v2115, 4
      %v2118 = vrot.slane %v2004, 5
      %v2119 = vsel %vm2091, %v2117, %v2118
      %v2120 = vrot.slane %v2005, 5
      %v2121 = vrot.slane %v2120, 4
      %v2122 = vrot.slane %v2006, 5
      %v2123 = vsel %vm2091, %v2121, %v2122
      %v2124 = vrot.slane %v2122, 4
      %v2125 = vrot.slane %v2007, 5
      %v2126 = vsel %vm2091, %v2124, %v2125
      %v2127 = vrot.slane %v2008, 5
      %v2128 = vrot.slane %v2127, 4
      %v2129 = vrot.slane %v2009, 5
      %v2130 = vsel %vm2091, %v2128, %v2129
      %v2131 = vrot.slane %v2129, 4
      %v2132 = vrot.slane %v2010, 5
      %v2133 = vsel %vm2091, %v2131, %v2132
      %v2134 = vrot.slane %v2011, 5
      %v2135 = vrot.slane %v2134, 4
      %v2136 = vrot.slane %v2012, 5
      %v2137 = vsel %vm2091, %v2135, %v2136
      %v2138 = vrot.slane %v2136, 4
      %v2139 = vrot.slane %v2013, 5
      %v2140 = vsel %vm2091, %v2138, %v2139
      %v2141 = vrot.slane %v2014, 5
      %v2142 = vrot.slane %v2141, 4
      %v2143 = vrot.slane %v2015, 5
      %v2144 = vsel %vm2091, %v2142, %v2143
      %v2145 = vrot.slane %v2143, 4
      %v2146 = vrot.slane %v2016, 5
      %v2147 = vsel %vm2091, %v2145, %v2146
      %v2148 = vrot.slane %v2017, 5
      %v2149 = vrot.slane %v2148, 4
      %v2150 = vrot.slane %v2018, 5
      %v2151 = vsel %vm2091, %v2149, %v2150
      %v2152 = vrot.slane %v2150, 4
      %v2153 = vrot.slane %v2019, 5
      %v2154 = vsel %vm2091, %v2152, %v2153
      %v2155 = vrot.slane %v2020, 5
      %v2156 = vrot.slane %v2155, 4
      %v2157 = vrot.slane %v2021, 5
      %v2158 = vsel %vm2091, %v2156, %v2157
      %v2159 = vrot.slane %v2157, 4
      %v2160 = vrot.slane %v2022, 5
      %v2161 = vsel %vm2091, %v2159, %v2160
      %v2162 = vrot.slane %v2023, 5
      %v2163 = vrot.slane %v2162, 4
      %v2164 = vrot.slane %v2024, 5
      %v2165 = vsel %vm2091, %v2163, %v2164
      %v2166 = vrot.slane %v2164, 4
      %v2167 = vrot.slane %v2025, 5
      %v2168 = vsel %vm2091, %v2166, %v2167
      %v2169 = vrot.slane %v2026, 5
      %v2170 = vrot.slane %v2169, 4
      %v2171 = vrot.slane %v2027, 5
      %v2172 = vsel %vm2091, %v2170, %v2171
      %v2173 = vrot.slane %v2171, 4
      %v2174 = vrot.slane %v2028, 5
      %v2175 = vsel %vm2091, %v2173, %v2174
      %v2176 = vrot.slane %v2029, 5
      %v2177 = vrot.slane %v2176, 4
      %v2178 = vrot.slane %v2030, 5
      %v2179 = vsel %vm2091, %v2177, %v2178
      %v2180 = vrot.slane %v2178, 4
      %v2181 = vrot.slane %v2031, 5
      %v2182 = vsel %vm2091, %v2180, %v2181
      %v2183 = vrot.slane %v2032, 5
      %v2184 = vrot.slane %v2183, 4
      %v2185 = vrot.slane %v2033, 5
      %v2186 = vsel %vm2091, %v2184, %v2185
      %v2187 = vrot.slane %v2185, 4
      %v2188 = vrot.slane %v2034, 5
      %v2189 = vsel %vm2091, %v2187, %v2188
      %v2190 = vrot.slane %v2035, 5
      %v2191 = vrot.slane %v2190, 4
      %v2192 = vrot.slane %v2036, 5
      %v2193 = vsel %vm2091, %v2191, %v2192
      %v2194 = vrot.slane %v2192, 4
      %v2195 = vrot.slane %v2037, 5
      %v2196 = vsel %vm2091, %v2194, %v2195
      %v2197 = vrot.slane %v2038, 5
      %v2198 = vrot.slane %v2197, 4
      %v2199 = vrot.slane %v2039, 5
      %v2200 = vsel %vm2091, %v2198, %v2199
      %v2201 = vrot.slane %v2199, 4
      %v2202 = vrot.slane %v2040, 5
      %v2203 = vsel %vm2091, %v2201, %v2202
      %2236 = vst [vmem:[#allocation3 + $0x8] sm:$0xf] %v2095
      %2237 = vst [vmem:[#allocation3 + $0x2c] sm:$0xf] %v2098
      %2238 = vst [vmem:[#allocation3 + $0x50] sm:$0xf] %v2102
      %2239 = vst [vmem:[#allocation3 + $0x74] sm:$0xf] %v2105
      %2240 = vst [vmem:[#allocation3 + $0x98] sm:$0xf] %v2109
      %2241 = vst [vmem:[#allocation3 + $0xbc] sm:$0xf] %v2112
      %2242 = vst [vmem:[#allocation3 + $0xe0] sm:$0xf] %v2116
      %2243 = vst [vmem:[#allocation3 + $0x104] sm:$0xf] %v2119
      %2244 = vst [vmem:[#allocation3 + $0x128] sm:$0xf] %v2123
      %2245 = vst [vmem:[#allocation3 + $0x14c] sm:$0xf] %v2126
      %2246 = vst [vmem:[#allocation3 + $0x170] sm:$0xf] %v2130
      %2247 = vst [vmem:[#allocation3 + $0x194] sm:$0xf] %v2133
      %2248 = vst [vmem:[#allocation3 + $0x1b8] sm:$0xf] %v2137
      %2249 = vst [vmem:[#allocation3 + $0x1dc] sm:$0xf] %v2140
      %2250 = vst [vmem:[#allocation3 + $0x200] sm:$0xf] %v2144
      %2251 = vst [vmem:[#allocation3 + $0x224] sm:$0xf] %v2147
      %2252 = vst [vmem:[#allocation3 + $0x248] sm:$0xf] %v2151
      %2253 = vst [vmem:[#allocation3 + $0x26c] sm:$0xf] %v2154
      %2254 = vst [vmem:[#allocation3 + $0x290] sm:$0xf] %v2158
      %2255 = vst [vmem:[#allocation3 + $0x2b4] sm:$0xf] %v2161
      %2256 = vst [vmem:[#allocation3 + $0x2d8] sm:$0xf] %v2165
      %2257 = vst [vmem:[#allocation3 + $0x2fc] sm:$0xf] %v2168
      %2258 = vst [vmem:[#allocation3 + $0x320] sm:$0xf] %v2172
      %2259 = vst [vmem:[#allocation3 + $0x344] sm:$0xf] %v2175
      %2260 = vst [vmem:[#allocation3 + $0x368] sm:$0xf] %v2179
      %2261 = vst [vmem:[#allocation3 + $0x38c] sm:$0xf] %v2182
      %2262 = vst [vmem:[#allocation3 + $0x3b0] sm:$0xf] %v2186
      %2263 = vst [vmem:[#allocation3 + $0x3d4] sm:$0xf] %v2189
      %2264 = vst [vmem:[#allocation3 + $0x3f8] sm:$0xf] %v2193
      %2265 = vst [vmem:[#allocation3 + $0x41c] sm:$0xf] %v2196
      %2266 = vst [vmem:[#allocation3 + $0x440] sm:$0xf] %v2200
      %2267 = vst [vmem:[#allocation3 + $0x464] sm:$0xf] %v2203
      %v2268 = vld [vmem:[%s1317] sm:$0xf]
      %v2269 = vld [vmem:[%s1317 + $0x4] sm:$0xf]
      %v2270 = vld [vmem:[%s1317 + $0xc] sm:$0xf]
      %v2271 = vld [vmem:[%s1317 + $0x10] sm:$0xf]
      %v2272 = vld [vmem:[%s1317 + $0x18] sm:$0xf]
      %v2273 = vld [vmem:[%s1317 + $0x1c] sm:$0xf]
      %v2274 = vld [vmem:[%s1317 + $0x24] sm:$0xf]
      %v2275 = vld [vmem:[%s1317 + $0x28] sm:$0xf]
      %v2276 = vld [vmem:[%s1317 + $0x30] sm:$0xf]
      %v2277 = vld [vmem:[%s1317 + $0x34] sm:$0xf]
      %v2278 = vld [vmem:[%s1317 + $0x3c] sm:$0xf]
      %v2279 = vld [vmem:[%s1317 + $0x40] sm:$0xf]
      %v2280 = vld [vmem:[%s1317 + $0x48] sm:$0xf]
      %v2281 = vld [vmem:[%s1317 + $0x4c] sm:$0xf]
      %v2282 = vld [vmem:[%s1317 + $0x54] sm:$0xf]
      %v2283 = vld [vmem:[%s1317 + $0x58] sm:$0xf]
      %v2284 = vld [vmem:[%s1317 + $0x60] sm:$0xf]
      %v2285 = vld [vmem:[%s1317 + $0x64] sm:$0xf]
      %v2286 = vld [vmem:[%s1317 + $0x6c] sm:$0xf]
      %v2287 = vld [vmem:[%s1317 + $0x70] sm:$0xf]
      %v2288 = vld [vmem:[%s1317 + $0x78] sm:$0xf]
      %v2289 = vld [vmem:[%s1317 + $0x7c] sm:$0xf]
      %v2290 = vld [vmem:[%s1317 + $0x84] sm:$0xf]
      %v2291 = vld [vmem:[%s1317 + $0x88] sm:$0xf]
      %v2292 = vld [vmem:[%s1317 + $0x90] sm:$0xf]
      %v2293 = vld [vmem:[%s1317 + $0x94] sm:$0xf]
      %v2294 = vld [vmem:[%s1317 + $0x9c] sm:$0xf]
      %v2295 = vld [vmem:[%s1317 + $0xa0] sm:$0xf]
      %v2296 = vld [vmem:[%s1317 + $0xa8] sm:$0xf]
      %v2297 = vld [vmem:[%s1317 + $0xac] sm:$0xf]
      %v2298 = vld [vmem:[%s1317 + $0xb4] sm:$0xf]
      %v2299 = vld [vmem:[%s1317 + $0xb8] sm:$0xf]
      %2300 = vst [vmem:[#allocation3 + $0xc] sm:$0xf] %v2268
      %2301 = vst [vmem:[#allocation3 + $0x30] sm:$0xf] %v2269
      %2302 = vst [vmem:[#allocation3 + $0x54] sm:$0xf] %v2270
      %2303 = vst [vmem:[#allocation3 + $0x78] sm:$0xf] %v2271
      %2304 = vst [vmem:[#allocation3 + $0x9c] sm:$0xf] %v2272
      %2305 = vst [vmem:[#allocation3 + $0xc0] sm:$0xf] %v2273
      %2306 = vst [vmem:[#allocation3 + $0xe4] sm:$0xf] %v2274
      %2307 = vst [vmem:[#allocation3 + $0x108] sm:$0xf] %v2275
      %2308 = vst [vmem:[#allocation3 + $0x12c] sm:$0xf] %v2276
      %2309 = vst [vmem:[#allocation3 + $0x150] sm:$0xf] %v2277
      %2310 = vst [vmem:[#allocation3 + $0x174] sm:$0xf] %v2278
      %2311 = vst [vmem:[#allocation3 + $0x198] sm:$0xf] %v2279
      %2312 = vst [vmem:[#allocation3 + $0x1bc] sm:$0xf] %v2280
      %2313 = vst [vmem:[#allocation3 + $0x1e0] sm:$0xf] %v2281
      %2314 = vst [vmem:[#allocation3 + $0x204] sm:$0xf] %v2282
      %2315 = vst [vmem:[#allocation3 + $0x228] sm:$0xf] %v2283
      %2316 = vst [vmem:[#allocation3 + $0x24c] sm:$0xf] %v2284
      %2317 = vst [vmem:[#allocation3 + $0x270] sm:$0xf] %v2285
      %2318 = vst [vmem:[#allocation3 + $0x294] sm:$0xf] %v2286
      %2319 = vst [vmem:[#allocation3 + $0x2b8] sm:$0xf] %v2287
      %2320 = vst [vmem:[#allocation3 + $0x2dc] sm:$0xf] %v2288
      %2321 = vst [vmem:[#allocation3 + $0x300] sm:$0xf] %v2289
      %2322 = vst [vmem:[#allocation3 + $0x324] sm:$0xf] %v2290
      %2323 = vst [vmem:[#allocation3 + $0x348] sm:$0xf] %v2291
      %2324 = vst [vmem:[#allocation3 + $0x36c] sm:$0xf] %v2292
      %2325 = vst [vmem:[#allocation3 + $0x390] sm:$0xf] %v2293
      %2326 = vst [vmem:[#allocation3 + $0x3b4] sm:$0xf] %v2294
      %2327 = vst [vmem:[#allocation3 + $0x3d8] sm:$0xf] %v2295
      %2328 = vst [vmem:[#allocation3 + $0x3fc] sm:$0xf] %v2296
      %2329 = vst [vmem:[#allocation3 + $0x420] sm:$0xf] %v2297
      %2330 = vst [vmem:[#allocation3 + $0x444] sm:$0xf] %v2298
      %2331 = vst [vmem:[#allocation3 + $0x468] sm:$0xf] %v2299
      %v2332 = vld [vmem:[%s1317] sm:$0xf]
      %v2333 = vld [vmem:[%s1317 + $0x4] sm:$0xf]
      %v2334 = vld [vmem:[%s1317 + $0x8] sm:$0x1]
      %v2335 = vld [vmem:[%s1317 + $0xc] sm:$0xf]
      %v2336 = vld [vmem:[%s1317 + $0x10] sm:$0xf]
      %v2337 = vld [vmem:[%s1317 + $0x14] sm:$0x1]
      %v2338 = vld [vmem:[%s1317 + $0x18] sm:$0xf]
      %v2339 = vld [vmem:[%s1317 + $0x1c] sm:$0xf]
      %v2340 = vld [vmem:[%s1317 + $0x20] sm:$0x1]
      %v2341 = vld [vmem:[%s1317 + $0x24] sm:$0xf]
      %v2342 = vld [vmem:[%s1317 + $0x28] sm:$0xf]
      %v2343 = vld [vmem:[%s1317 + $0x2c] sm:$0x1]
      %v2344 = vld [vmem:[%s1317 + $0x30] sm:$0xf]
      %v2345 = vld [vmem:[%s1317 + $0x34] sm:$0xf]
      %v2346 = vld [vmem:[%s1317 + $0x38] sm:$0x1]
      %v2347 = vld [vmem:[%s1317 + $0x3c] sm:$0xf]
      %v2348 = vld [vmem:[%s1317 + $0x40] sm:$0xf]
      %v2349 = vld [vmem:[%s1317 + $0x44] sm:$0x1]
      %v2350 = vld [vmem:[%s1317 + $0x48] sm:$0xf]
      %v2351 = vld [vmem:[%s1317 + $0x4c] sm:$0xf]
      %v2352 = vld [vmem:[%s1317 + $0x50] sm:$0x1]
      %v2353 = vld [vmem:[%s1317 + $0x54] sm:$0xf]
      %v2354 = vld [vmem:[%s1317 + $0x58] sm:$0xf]
      %v2355 = vld [vmem:[%s1317 + $0x5c] sm:$0x1]
      %v2356 = vld [vmem:[%s1317 + $0x60] sm:$0xf]
      %v2357 = vld [vmem:[%s1317 + $0x64] sm:$0xf]
      %v2358 = vld [vmem:[%s1317 + $0x68] sm:$0x1]
      %v2359 = vld [vmem:[%s1317 + $0x6c] sm:$0xf]
      %v2360 = vld [vmem:[%s1317 + $0x70] sm:$0xf]
      %v2361 = vld [vmem:[%s1317 + $0x74] sm:$0x1]
      %v2362 = vld [vmem:[%s1317 + $0x78] sm:$0xf]
      %v2363 = vld [vmem:[%s1317 + $0x7c] sm:$0xf]
      %v2364 = vld [vmem:[%s1317 + $0x80] sm:$0x1]
      %v2365 = vld [vmem:[%s1317 + $0x84] sm:$0xf]
      %v2366 = vld [vmem:[%s1317 + $0x88] sm:$0xf]
      %v2367 = vld [vmem:[%s1317 + $0x8c] sm:$0x1]
      %v2368 = vld [vmem:[%s1317 + $0x90] sm:$0xf]
      %v2369 = vld [vmem:[%s1317 + $0x94] sm:$0xf]
      %v2370 = vld [vmem:[%s1317 + $0x98] sm:$0x1]
      %v2371 = vld [vmem:[%s1317 + $0x9c] sm:$0xf]
      %v2372 = vld [vmem:[%s1317 + $0xa0] sm:$0xf]
      %v2373 = vld [vmem:[%s1317 + $0xa4] sm:$0x1]
      %v2374 = vld [vmem:[%s1317 + $0xa8] sm:$0xf]
      %v2375 = vld [vmem:[%s1317 + $0xac] sm:$0xf]
      %v2376 = vld [vmem:[%s1317 + $0xb0] sm:$0x1]
      %v2377 = vld [vmem:[%s1317 + $0xb4] sm:$0xf]
      %v2378 = vld [vmem:[%s1317 + $0xb8] sm:$0xf]
      %v2379 = vld [vmem:[%s1317 + $0xbc] sm:$0x1]
      %v2381 = vshrl.u32 %v2332, 16
      %v2383 = vrot.slane %v2381, 4
      %v2384 = vshll.u32 %v2332, 16
      %v2386 = vrot.slane %v2384, 5
      %v2387 = vor.u32 %v2383, %v2386
      %v2388 = vrot.slane %v2387, 4
      %v2390 = vshll.u32 %v2333, 16
      %v2392 = vrot.slane %v2390, 5
      %v2393 = vsel %vm1544, %v2388, %v2392
      %v2394 = vshrl.u32 %v2333, 16
      %v2396 = vrot.slane %v2394, 4
      %v2397 = vor.u32 %v2396, %v2392
      %v2398 = vrot.slane %v2397, 4
      %v2400 = vshll.u32 %v2334, 16
      %v2402 = vrot.slane %v2400, 5
      %v2403 = vsel %vm1544, %v2398, %v2402
      %v2405 = vshrl.u32 %v2335, 16
      %v2407 = vrot.slane %v2405, 4
      %v2408 = vshll.u32 %v2335, 16
      %v2410 = vrot.slane %v2408, 5
      %v2411 = vor.u32 %v2407, %v2410
      %v2412 = vrot.slane %v2411, 4
      %v2414 = vshll.u32 %v2336, 16
      %v2416 = vrot.slane %v2414, 5
      %v2417 = vsel %vm1544, %v2412, %v2416
      %v2418 = vshrl.u32 %v2336, 16
      %v2420 = vrot.slane %v2418, 4
      %v2421 = vor.u32 %v2420, %v2416
      %v2422 = vrot.slane %v2421, 4
      %v2424 = vshll.u32 %v2337, 16
      %v2426 = vrot.slane %v2424, 5
      %v2427 = vsel %vm1544, %v2422, %v2426
      %v2429 = vshrl.u32 %v2338, 16
      %v2431 = vrot.slane %v2429, 4
      %v2432 = vshll.u32 %v2338, 16
      %v2434 = vrot.slane %v2432, 5
      %v2435 = vor.u32 %v2431, %v2434
      %v2436 = vrot.slane %v2435, 4
      %v2438 = vshll.u32 %v2339, 16
      %v2440 = vrot.slane %v2438, 5
      %v2441 = vsel %vm1544, %v2436, %v2440
      %v2442 = vshrl.u32 %v2339, 16
      %v2444 = vrot.slane %v2442, 4
      %v2445 = vor.u32 %v2444, %v2440
      %v2446 = vrot.slane %v2445, 4
      %v2448 = vshll.u32 %v2340, 16
      %v2450 = vrot.slane %v2448, 5
      %v2451 = vsel %vm1544, %v2446, %v2450
      %v2453 = vshrl.u32 %v2341, 16
      %v2455 = vrot.slane %v2453, 4
      %v2456 = vshll.u32 %v2341, 16
      %v2458 = vrot.slane %v2456, 5
      %v2459 = vor.u32 %v2455, %v2458
      %v2460 = vrot.slane %v2459, 4
      %v2462 = vshll.u32 %v2342, 16
      %v2464 = vrot.slane %v2462, 5
      %v2465 = vsel %vm1544, %v2460, %v2464
      %v2466 = vshrl.u32 %v2342, 16
      %v2468 = vrot.slane %v2466, 4
      %v2469 = vor.u32 %v2468, %v2464
      %v2470 = vrot.slane %v2469, 4
      %v2472 = vshll.u32 %v2343, 16
      %v2474 = vrot.slane %v2472, 5
      %v2475 = vsel %vm1544, %v2470, %v2474
      %v2477 = vshrl.u32 %v2344, 16
      %v2479 = vrot.slane %v2477, 4
      %v2480 = vshll.u32 %v2344, 16
      %v2482 = vrot.slane %v2480, 5
      %v2483 = vor.u32 %v2479, %v2482
      %v2484 = vrot.slane %v2483, 4
      %v2486 = vshll.u32 %v2345, 16
      %v2488 = vrot.slane %v2486, 5
      %v2489 = vsel %vm1544, %v2484, %v2488
      %v2490 = vshrl.u32 %v2345, 16
      %v2492 = vrot.slane %v2490, 4
      %v2493 = vor.u32 %v2492, %v2488
      %v2494 = vrot.slane %v2493, 4
      %v2496 = vshll.u32 %v2346, 16
      %v2498 = vrot.slane %v2496, 5
      %v2499 = vsel %vm1544, %v2494, %v2498
      %v2501 = vshrl.u32 %v2347, 16
      %v2503 = vrot.slane %v2501, 4
      %v2504 = vshll.u32 %v2347, 16
      %v2506 = vrot.slane %v2504, 5
      %v2507 = vor.u32 %v2503, %v2506
      %v2508 = vrot.slane %v2507, 4
      %v2510 = vshll.u32 %v2348, 16
      %v2512 = vrot.slane %v2510, 5
      %v2513 = vsel %vm1544, %v2508, %v2512
      %v2514 = vshrl.u32 %v2348, 16
      %v2516 = vrot.slane %v2514, 4
      %v2517 = vor.u32 %v2516, %v2512
      %v2518 = vrot.slane %v2517, 4
      %v2520 = vshll.u32 %v2349, 16
      %v2522 = vrot.slane %v2520, 5
      %v2523 = vsel %vm1544, %v2518, %v2522
      %v2525 = vshrl.u32 %v2350, 16
      %v2527 = vrot.slane %v2525, 4
      %v2528 = vshll.u32 %v2350, 16
      %v2530 = vrot.slane %v2528, 5
      %v2531 = vor.u32 %v2527, %v2530
      %v2532 = vrot.slane %v2531, 4
      %v2534 = vshll.u32 %v2351, 16
      %v2536 = vrot.slane %v2534, 5
      %v2537 = vsel %vm1544, %v2532, %v2536
      %v2538 = vshrl.u32 %v2351, 16
      %v2540 = vrot.slane %v2538, 4
      %v2541 = vor.u32 %v2540, %v2536
      %v2542 = vrot.slane %v2541, 4
      %v2544 = vshll.u32 %v2352, 16
      %v2546 = vrot.slane %v2544, 5
      %v2547 = vsel %vm1544, %v2542, %v2546
      %v2549 = vshrl.u32 %v2353, 16
      %v2551 = vrot.slane %v2549, 4
      %v2552 = vshll.u32 %v2353, 16
      %v2554 = vrot.slane %v2552, 5
      %v2555 = vor.u32 %v2551, %v2554
      %v2556 = vrot.slane %v2555, 4
      %v2558 = vshll.u32 %v2354, 16
      %v2560 = vrot.slane %v2558, 5
      %v2561 = vsel %vm1544, %v2556, %v2560
      %v2562 = vshrl.u32 %v2354, 16
      %v2564 = vrot.slane %v2562, 4
      %v2565 = vor.u32 %v2564, %v2560
      %v2566 = vrot.slane %v2565, 4
      %v2568 = vshll.u32 %v2355, 16
      %v2570 = vrot.slane %v2568, 5
      %v2571 = vsel %vm1544, %v2566, %v2570
      %v2573 = vshrl.u32 %v2356, 16
      %v2575 = vrot.slane %v2573, 4
      %v2576 = vshll.u32 %v2356, 16
      %v2578 = vrot.slane %v2576, 5
      %v2579 = vor.u32 %v2575, %v2578
      %v2580 = vrot.slane %v2579, 4
      %v2582 = vshll.u32 %v2357, 16
      %v2584 = vrot.slane %v2582, 5
      %v2585 = vsel %vm1544, %v2580, %v2584
      %v2586 = vshrl.u32 %v2357, 16
      %v2588 = vrot.slane %v2586, 4
      %v2589 = vor.u32 %v2588, %v2584
      %v2590 = vrot.slane %v2589, 4
      %v2592 = vshll.u32 %v2358, 16
      %v2594 = vrot.slane %v2592, 5
      %v2595 = vsel %vm1544, %v2590, %v2594
      %v2597 = vshrl.u32 %v2359, 16
      %v2599 = vrot.slane %v2597, 4
      %v2600 = vshll.u32 %v2359, 16
      %v2602 = vrot.slane %v2600, 5
      %v2603 = vor.u32 %v2599, %v2602
      %v2604 = vrot.slane %v2603, 4
      %v2606 = vshll.u32 %v2360, 16
      %v2608 = vrot.slane %v2606, 5
      %v2609 = vsel %vm1544, %v2604, %v2608
      %v2610 = vshrl.u32 %v2360, 16
      %v2612 = vrot.slane %v2610, 4
      %v2613 = vor.u32 %v2612, %v2608
      %v2614 = vrot.slane %v2613, 4
      %v2616 = vshll.u32 %v2361, 16
      %v2618 = vrot.slane %v2616, 5
      %v2619 = vsel %vm1544, %v2614, %v2618
      %v2621 = vshrl.u32 %v2362, 16
      %v2623 = vrot.slane %v2621, 4
      %v2624 = vshll.u32 %v2362, 16
      %v2626 = vrot.slane %v2624, 5
      %v2627 = vor.u32 %v2623, %v2626
      %v2628 = vrot.slane %v2627, 4
      %v2630 = vshll.u32 %v2363, 16
      %v2632 = vrot.slane %v2630, 5
      %v2633 = vsel %vm1544, %v2628, %v2632
      %v2634 = vshrl.u32 %v2363, 16
      %v2636 = vrot.slane %v2634, 4
      %v2637 = vor.u32 %v2636, %v2632
      %v2638 = vrot.slane %v2637, 4
      %v2640 = vshll.u32 %v2364, 16
      %v2642 = vrot.slane %v2640, 5
      %v2643 = vsel %vm1544, %v2638, %v2642
      %v2645 = vshrl.u32 %v2365, 16
      %v2647 = vrot.slane %v2645, 4
      %v2648 = vshll.u32 %v2365, 16
      %v2650 = vrot.slane %v2648, 5
      %v2651 = vor.u32 %v2647, %v2650
      %v2652 = vrot.slane %v2651, 4
      %v2654 = vshll.u32 %v2366, 16
      %v2656 = vrot.slane %v2654, 5
      %v2657 = vsel %vm1544, %v2652, %v2656
      %v2658 = vshrl.u32 %v2366, 16
      %v2660 = vrot.slane %v2658, 4
      %v2661 = vor.u32 %v2660, %v2656
      %v2662 = vrot.slane %v2661, 4
      %v2664 = vshll.u32 %v2367, 16
      %v2666 = vrot.slane %v2664, 5
      %v2667 = vsel %vm1544, %v2662, %v2666
      %v2669 = vshrl.u32 %v2368, 16
      %v2671 = vrot.slane %v2669, 4
      %v2672 = vshll.u32 %v2368, 16
      %v2674 = vrot.slane %v2672, 5
      %v2675 = vor.u32 %v2671, %v2674
      %v2676 = vrot.slane %v2675, 4
      %v2678 = vshll.u32 %v2369, 16
      %v2680 = vrot.slane %v2678, 5
      %v2681 = vsel %vm1544, %v2676, %v2680
      %v2682 = vshrl.u32 %v2369, 16
      %v2684 = vrot.slane %v2682, 4
      %v2685 = vor.u32 %v2684, %v2680
      %v2686 = vrot.slane %v2685, 4
      %v2688 = vshll.u32 %v2370, 16
      %v2690 = vrot.slane %v2688, 5
      %v2691 = vsel %vm1544, %v2686, %v2690
      %v2693 = vshrl.u32 %v2371, 16
      %v2695 = vrot.slane %v2693, 4
      %v2696 = vshll.u32 %v2371, 16
      %v2698 = vrot.slane %v2696, 5
      %v2699 = vor.u32 %v2695, %v2698
      %v2700 = vrot.slane %v2699, 4
      %v2702 = vshll.u32 %v2372, 16
      %v2704 = vrot.slane %v2702, 5
      %v2705 = vsel %vm1544, %v2700, %v2704
      %v2706 = vshrl.u32 %v2372, 16
      %v2708 = vrot.slane %v2706, 4
      %v2709 = vor.u32 %v2708, %v2704
      %v2710 = vrot.slane %v2709, 4
      %v2712 = vshll.u32 %v2373, 16
      %v2714 = vrot.slane %v2712, 5
      %v2715 = vsel %vm1544, %v2710, %v2714
      %v2717 = vshrl.u32 %v2374, 16
      %v2719 = vrot.slane %v2717, 4
      %v2720 = vshll.u32 %v2374, 16
      %v2722 = vrot.slane %v2720, 5
      %v2723 = vor.u32 %v2719, %v2722
      %v2724 = vrot.slane %v2723, 4
      %v2726 = vshll.u32 %v2375, 16
      %v2728 = vrot.slane %v2726, 5
      %v2729 = vsel %vm1544, %v2724, %v2728
      %v2730 = vshrl.u32 %v2375, 16
      %v2732 = vrot.slane %v2730, 4
      %v2733 = vor.u32 %v2732, %v2728
      %v2734 = vrot.slane %v2733, 4
      %v2736 = vshll.u32 %v2376, 16
      %v2738 = vrot.slane %v2736, 5
      %v2739 = vsel %vm1544, %v2734, %v2738
      %v2741 = vshrl.u32 %v2377, 16
      %v2743 = vrot.slane %v2741, 4
      %v2744 = vshll.u32 %v2377, 16
      %v2746 = vrot.slane %v2744, 5
      %v2747 = vor.u32 %v2743, %v2746
      %v2748 = vrot.slane %v2747, 4
      %v2750 = vshll.u32 %v2378, 16
      %v2752 = vrot.slane %v2750, 5
      %v2753 = vsel %vm1544, %v2748, %v2752
      %v2754 = vshrl.u32 %v2378, 16
      %v2756 = vrot.slane %v2754, 4
      %v2757 = vor.u32 %v2756, %v2752
      %v2758 = vrot.slane %v2757, 4
      %v2760 = vshll.u32 %v2379, 16
      %v2762 = vrot.slane %v2760, 5
      %v2763 = vsel %vm1544, %v2758, %v2762
      %2796 = vst [vmem:[#allocation3 + $0x10] sm:$0xf] %v2393
      %2797 = vst [vmem:[#allocation3 + $0x34] sm:$0xf] %v2403
      %2798 = vst [vmem:[#allocation3 + $0x58] sm:$0xf] %v2417
      %2799 = vst [vmem:[#allocation3 + $0x7c] sm:$0xf] %v2427
      %2800 = vst [vmem:[#allocation3 + $0xa0] sm:$0xf] %v2441
      %2801 = vst [vmem:[#allocation3 + $0xc4] sm:$0xf] %v2451
      %2802 = vst [vmem:[#allocation3 + $0xe8] sm:$0xf] %v2465
      %2803 = vst [vmem:[#allocation3 + $0x10c] sm:$0xf] %v2475
      %2804 = vst [vmem:[#allocation3 + $0x130] sm:$0xf] %v2489
      %2805 = vst [vmem:[#allocation3 + $0x154] sm:$0xf] %v2499
      %2806 = vst [vmem:[#allocation3 + $0x178] sm:$0xf] %v2513
      %2807 = vst [vmem:[#allocation3 + $0x19c] sm:$0xf] %v2523
      %2808 = vst [vmem:[#allocation3 + $0x1c0] sm:$0xf] %v2537
      %2809 = vst [vmem:[#allocation3 + $0x1e4] sm:$0xf] %v2547
      %2810 = vst [vmem:[#allocation3 + $0x208] sm:$0xf] %v2561
      %2811 = vst [vmem:[#allocation3 + $0x22c] sm:$0xf] %v2571
      %2812 = vst [vmem:[#allocation3 + $0x250] sm:$0xf] %v2585
      %2813 = vst [vmem:[#allocation3 + $0x274] sm:$0xf] %v2595
      %2814 = vst [vmem:[#allocation3 + $0x298] sm:$0xf] %v2609
      %2815 = vst [vmem:[#allocation3 + $0x2bc] sm:$0xf] %v2619
      %2816 = vst [vmem:[#allocation3 + $0x2e0] sm:$0xf] %v2633
      %2817 = vst [vmem:[#allocation3 + $0x304] sm:$0xf] %v2643
      %2818 = vst [vmem:[#allocation3 + $0x328] sm:$0xf] %v2657
      %2819 = vst [vmem:[#allocation3 + $0x34c] sm:$0xf] %v2667
      %2820 = vst [vmem:[#allocation3 + $0x370] sm:$0xf] %v2681
      %2821 = vst [vmem:[#allocation3 + $0x394] sm:$0xf] %v2691
      %2822 = vst [vmem:[#allocation3 + $0x3b8] sm:$0xf] %v2705
      %2823 = vst [vmem:[#allocation3 + $0x3dc] sm:$0xf] %v2715
      %2824 = vst [vmem:[#allocation3 + $0x400] sm:$0xf] %v2729
      %2825 = vst [vmem:[#allocation3 + $0x424] sm:$0xf] %v2739
      %2826 = vst [vmem:[#allocation3 + $0x448] sm:$0xf] %v2753
      %2827 = vst [vmem:[#allocation3 + $0x46c] sm:$0xf] %v2763
      %v2828 = vld [vmem:[%s1317] sm:$0xe]
      %v2829 = vld [vmem:[%s1317 + $0x4] sm:$0xf]
      %v2830 = vld [vmem:[%s1317 + $0x8] sm:$0x1]
      %v2831 = vld [vmem:[%s1317 + $0xc] sm:$0xe]
      %v2832 = vld [vmem:[%s1317 + $0x10] sm:$0xf]
      %v2833 = vld [vmem:[%s1317 + $0x14] sm:$0x1]
      %v2834 = vld [vmem:[%s1317 + $0x18] sm:$0xe]
      %v2835 = vld [vmem:[%s1317 + $0x1c] sm:$0xf]
      %v2836 = vld [vmem:[%s1317 + $0x20] sm:$0x1]
      %v2837 = vld [vmem:[%s1317 + $0x24] sm:$0xe]
      %v2838 = vld [vmem:[%s1317 + $0x28] sm:$0xf]
      %v2839 = vld [vmem:[%s1317 + $0x2c] sm:$0x1]
      %v2840 = vld [vmem:[%s1317 + $0x30] sm:$0xe]
      %v2841 = vld [vmem:[%s1317 + $0x34] sm:$0xf]
      %v2842 = vld [vmem:[%s1317 + $0x38] sm:$0x1]
      %v2843 = vld [vmem:[%s1317 + $0x3c] sm:$0xe]
      %v2844 = vld [vmem:[%s1317 + $0x40] sm:$0xf]
      %v2845 = vld [vmem:[%s1317 + $0x44] sm:$0x1]
      %v2846 = vld [vmem:[%s1317 + $0x48] sm:$0xe]
      %v2847 = vld [vmem:[%s1317 + $0x4c] sm:$0xf]
      %v2848 = vld [vmem:[%s1317 + $0x50] sm:$0x1]
      %v2849 = vld [vmem:[%s1317 + $0x54] sm:$0xe]
      %v2850 = vld [vmem:[%s1317 + $0x58] sm:$0xf]
      %v2851 = vld [vmem:[%s1317 + $0x5c] sm:$0x1]
      %v2852 = vld [vmem:[%s1317 + $0x60] sm:$0xe]
      %v2853 = vld [vmem:[%s1317 + $0x64] sm:$0xf]
      %v2854 = vld [vmem:[%s1317 + $0x68] sm:$0x1]
      %v2855 = vld [vmem:[%s1317 + $0x6c] sm:$0xe]
      %v2856 = vld [vmem:[%s1317 + $0x70] sm:$0xf]
      %v2857 = vld [vmem:[%s1317 + $0x74] sm:$0x1]
      %v2858 = vld [vmem:[%s1317 + $0x78] sm:$0xe]
      %v2859 = vld [vmem:[%s1317 + $0x7c] sm:$0xf]
      %v2860 = vld [vmem:[%s1317 + $0x80] sm:$0x1]
      %v2861 = vld [vmem:[%s1317 + $0x84] sm:$0xe]
      %v2862 = vld [vmem:[%s1317 + $0x88] sm:$0xf]
      %v2863 = vld [vmem:[%s1317 + $0x8c] sm:$0x1]
      %v2864 = vld [vmem:[%s1317 + $0x90] sm:$0xe]
      %v2865 = vld [vmem:[%s1317 + $0x94] sm:$0xf]
      %v2866 = vld [vmem:[%s1317 + $0x98] sm:$0x1]
      %v2867 = vld [vmem:[%s1317 + $0x9c] sm:$0xe]
      %v2868 = vld [vmem:[%s1317 + $0xa0] sm:$0xf]
      %v2869 = vld [vmem:[%s1317 + $0xa4] sm:$0x1]
      %v2870 = vld [vmem:[%s1317 + $0xa8] sm:$0xe]
      %v2871 = vld [vmem:[%s1317 + $0xac] sm:$0xf]
      %v2872 = vld [vmem:[%s1317 + $0xb0] sm:$0x1]
      %v2873 = vld [vmem:[%s1317 + $0xb4] sm:$0xe]
      %v2874 = vld [vmem:[%s1317 + $0xb8] sm:$0xf]
      %v2875 = vld [vmem:[%s1317 + $0xbc] sm:$0x1]
      %v2924 = vrot.slane %v2828, 5
      %v2925 = vrot.slane %v2924, 4
      %v2926 = vrot.slane %v2829, 5
      %v2927 = vsel %vm2091, %v2925, %v2926
      %v2928 = vrot.slane %v2926, 4
      %v2929 = vrot.slane %v2830, 5
      %v2930 = vsel %vm2091, %v2928, %v2929
      %v2931 = vrot.slane %v2831, 5
      %v2932 = vrot.slane %v2931, 4
      %v2933 = vrot.slane %v2832, 5
      %v2934 = vsel %vm2091, %v2932, %v2933
      %v2935 = vrot.slane %v2933, 4
      %v2936 = vrot.slane %v2833, 5
      %v2937 = vsel %vm2091, %v2935, %v2936
      %v2938 = vrot.slane %v2834, 5
      %v2939 = vrot.slane %v2938, 4
      %v2940 = vrot.slane %v2835, 5
      %v2941 = vsel %vm2091, %v2939, %v2940
      %v2942 = vrot.slane %v2940, 4
      %v2943 = vrot.slane %v2836, 5
      %v2944 = vsel %vm2091, %v2942, %v2943
      %v2945 = vrot.slane %v2837, 5
      %v2946 = vrot.slane %v2945, 4
      %v2947 = vrot.slane %v2838, 5
      %v2948 = vsel %vm2091, %v2946, %v2947
      %v2949 = vrot.slane %v2947, 4
      %v2950 = vrot.slane %v2839, 5
      %v2951 = vsel %vm2091, %v2949, %v2950
      %v2952 = vrot.slane %v2840, 5
      %v2953 = vrot.slane %v2952, 4
      %v2954 = vrot.slane %v2841, 5
      %v2955 = vsel %vm2091, %v2953, %v2954
      %v2956 = vrot.slane %v2954, 4
      %v2957 = vrot.slane %v2842, 5
      %v2958 = vsel %vm2091, %v2956, %v2957
      %v2959 = vrot.slane %v2843, 5
      %v2960 = vrot.slane %v2959, 4
      %v2961 = vrot.slane %v2844, 5
      %v2962 = vsel %vm2091, %v2960, %v2961
      %v2963 = vrot.slane %v2961, 4
      %v2964 = vrot.slane %v2845, 5
      %v2965 = vsel %vm2091, %v2963, %v2964
      %v2966 = vrot.slane %v2846, 5
      %v2967 = vrot.slane %v2966, 4
      %v2968 = vrot.slane %v2847, 5
      %v2969 = vsel %vm2091, %v2967, %v2968
      %v2970 = vrot.slane %v2968, 4
      %v2971 = vrot.slane %v2848, 5
      %v2972 = vsel %vm2091, %v2970, %v2971
      %v2973 = vrot.slane %v2849, 5
      %v2974 = vrot.slane %v2973, 4
      %v2975 = vrot.slane %v2850, 5
      %v2976 = vsel %vm2091, %v2974, %v2975
      %v2977 = vrot.slane %v2975, 4
      %v2978 = vrot.slane %v2851, 5
      %v2979 = vsel %vm2091, %v2977, %v2978
      %v2980 = vrot.slane %v2852, 5
      %v2981 = vrot.slane %v2980, 4
      %v2982 = vrot.slane %v2853, 5
      %v2983 = vsel %vm2091, %v2981, %v2982
      %v2984 = vrot.slane %v2982, 4
      %v2985 = vrot.slane %v2854, 5
      %v2986 = vsel %vm2091, %v2984, %v2985
      %v2987 = vrot.slane %v2855, 5
      %v2988 = vrot.slane %v2987, 4
      %v2989 = vrot.slane %v2856, 5
      %v2990 = vsel %vm2091, %v2988, %v2989
      %v2991 = vrot.slane %v2989, 4
      %v2992 = vrot.slane %v2857, 5
      %v2993 = vsel %vm2091, %v2991, %v2992
      %v2994 = vrot.slane %v2858, 5
      %v2995 = vrot.slane %v2994, 4
      %v2996 = vrot.slane %v2859, 5
      %v2997 = vsel %vm2091, %v2995, %v2996
      %v2998 = vrot.slane %v2996, 4
      %v2999 = vrot.slane %v2860, 5
      %v3000 = vsel %vm2091, %v2998, %v2999
      %v3001 = vrot.slane %v2861, 5
      %v3002 = vrot.slane %v3001, 4
      %v3003 = vrot.slane %v2862, 5
      %v3004 = vsel %vm2091, %v3002, %v3003
      %v3005 = vrot.slane %v3003, 4
      %v3006 = vrot.slane %v2863, 5
      %v3007 = vsel %vm2091, %v3005, %v3006
      %v3008 = vrot.slane %v2864, 5
      %v3009 = vrot.slane %v3008, 4
      %v3010 = vrot.slane %v2865, 5
      %v3011 = vsel %vm2091, %v3009, %v3010
      %v3012 = vrot.slane %v3010, 4
      %v3013 = vrot.slane %v2866, 5
      %v3014 = vsel %vm2091, %v3012, %v3013
      %v3015 = vrot.slane %v2867, 5
      %v3016 = vrot.slane %v3015, 4
      %v3017 = vrot.slane %v2868, 5
      %v3018 = vsel %vm2091, %v3016, %v3017
      %v3019 = vrot.slane %v3017, 4
      %v3020 = vrot.slane %v2869, 5
      %v3021 = vsel %vm2091, %v3019, %v3020
      %v3022 = vrot.slane %v2870, 5
      %v3023 = vrot.slane %v3022, 4
      %v3024 = vrot.slane %v2871, 5
      %v3025 = vsel %vm2091, %v3023, %v3024
      %v3026 = vrot.slane %v3024, 4
      %v3027 = vrot.slane %v2872, 5
      %v3028 = vsel %vm2091, %v3026, %v3027
      %v3029 = vrot.slane %v2873, 5
      %v3030 = vrot.slane %v3029, 4
      %v3031 = vrot.slane %v2874, 5
      %v3032 = vsel %vm2091, %v3030, %v3031
      %v3033 = vrot.slane %v3031, 4
      %v3034 = vrot.slane %v2875, 5
      %v3035 = vsel %vm2091, %v3033, %v3034
      %3068 = vst [vmem:[#allocation3 + $0x14] sm:$0xf] %v2927
      %3069 = vst [vmem:[#allocation3 + $0x38] sm:$0xf] %v2930
      %3070 = vst [vmem:[#allocation3 + $0x5c] sm:$0xf] %v2934
      %3071 = vst [vmem:[#allocation3 + $0x80] sm:$0xf] %v2937
      %3072 = vst [vmem:[#allocation3 + $0xa4] sm:$0xf] %v2941
      %3073 = vst [vmem:[#allocation3 + $0xc8] sm:$0xf] %v2944
      %3074 = vst [vmem:[#allocation3 + $0xec] sm:$0xf] %v2948
      %3075 = vst [vmem:[#allocation3 + $0x110] sm:$0xf] %v2951
      %3076 = vst [vmem:[#allocation3 + $0x134] sm:$0xf] %v2955
      %3077 = vst [vmem:[#allocation3 + $0x158] sm:$0xf] %v2958
      %3078 = vst [vmem:[#allocation3 + $0x17c] sm:$0xf] %v2962
      %3079 = vst [vmem:[#allocation3 + $0x1a0] sm:$0xf] %v2965
      %3080 = vst [vmem:[#allocation3 + $0x1c4] sm:$0xf] %v2969
      %3081 = vst [vmem:[#allocation3 + $0x1e8] sm:$0xf] %v2972
      %3082 = vst [vmem:[#allocation3 + $0x20c] sm:$0xf] %v2976
      %3083 = vst [vmem:[#allocation3 + $0x230] sm:$0xf] %v2979
      %3084 = vst [vmem:[#allocation3 + $0x254] sm:$0xf] %v2983
      %3085 = vst [vmem:[#allocation3 + $0x278] sm:$0xf] %v2986
      %3086 = vst [vmem:[#allocation3 + $0x29c] sm:$0xf] %v2990
      %3087 = vst [vmem:[#allocation3 + $0x2c0] sm:$0xf] %v2993
      %3088 = vst [vmem:[#allocation3 + $0x2e4] sm:$0xf] %v2997
      %3089 = vst [vmem:[#allocation3 + $0x308] sm:$0xf] %v3000
      %3090 = vst [vmem:[#allocation3 + $0x32c] sm:$0xf] %v3004
      %3091 = vst [vmem:[#allocation3 + $0x350] sm:$0xf] %v3007
      %3092 = vst [vmem:[#allocation3 + $0x374] sm:$0xf] %v3011
      %3093 = vst [vmem:[#allocation3 + $0x398] sm:$0xf] %v3014
      %3094 = vst [vmem:[#allocation3 + $0x3bc] sm:$0xf] %v3018
      %3095 = vst [vmem:[#allocation3 + $0x3e0] sm:$0xf] %v3021
      %3096 = vst [vmem:[#allocation3 + $0x404] sm:$0xf] %v3025
      %3097 = vst [vmem:[#allocation3 + $0x428] sm:$0xf] %v3028
      %3098 = vst [vmem:[#allocation3 + $0x44c] sm:$0xf] %v3032
      %3099 = vst [vmem:[#allocation3 + $0x470] sm:$0xf] %v3035
      %s3100 = scalar_lea.vmem [#allocation2], 24
      %v3101 = vld [vmem:[%s3100] sm:$0xf]
      %v3102 = vld [vmem:[%s3100 + $0x4] sm:$0xf]
      %v3103 = vld [vmem:[%s3100 + $0xc] sm:$0xf]
      %v3104 = vld [vmem:[%s3100 + $0x10] sm:$0xf]
      %v3105 = vld [vmem:[%s3100 + $0x18] sm:$0xf]
      %v3106 = vld [vmem:[%s3100 + $0x1c] sm:$0xf]
      %v3107 = vld [vmem:[%s3100 + $0x24] sm:$0xf]
      %v3108 = vld [vmem:[%s3100 + $0x28] sm:$0xf]
      %v3109 = vld [vmem:[%s3100 + $0x30] sm:$0xf]
      %v3110 = vld [vmem:[%s3100 + $0x34] sm:$0xf]
      %v3111 = vld [vmem:[%s3100 + $0x3c] sm:$0xf]
      %v3112 = vld [vmem:[%s3100 + $0x40] sm:$0xf]
      %v3113 = vld [vmem:[%s3100 + $0x48] sm:$0xf]
      %v3114 = vld [vmem:[%s3100 + $0x4c] sm:$0xf]
      %v3115 = vld [vmem:[%s3100 + $0x54] sm:$0xf]
      %v3116 = vld [vmem:[%s3100 + $0x58] sm:$0xf]
      %v3117 = vld [vmem:[%s3100 + $0x60] sm:$0xf]
      %v3118 = vld [vmem:[%s3100 + $0x64] sm:$0xf]
      %v3119 = vld [vmem:[%s3100 + $0x6c] sm:$0xf]
      %v3120 = vld [vmem:[%s3100 + $0x70] sm:$0xf]
      %v3121 = vld [vmem:[%s3100 + $0x78] sm:$0xf]
      %v3122 = vld [vmem:[%s3100 + $0x7c] sm:$0xf]
      %v3123 = vld [vmem:[%s3100 + $0x84] sm:$0xf]
      %v3124 = vld [vmem:[%s3100 + $0x88] sm:$0xf]
      %v3125 = vld [vmem:[%s3100 + $0x90] sm:$0xf]
      %v3126 = vld [vmem:[%s3100 + $0x94] sm:$0xf]
      %v3127 = vld [vmem:[%s3100 + $0x9c] sm:$0xf]
      %v3128 = vld [vmem:[%s3100 + $0xa0] sm:$0xf]
      %v3129 = vld [vmem:[%s3100 + $0xa8] sm:$0xf]
      %v3130 = vld [vmem:[%s3100 + $0xac] sm:$0xf]
      %v3131 = vld [vmem:[%s3100 + $0xb4] sm:$0xf]
      %v3132 = vld [vmem:[%s3100 + $0xb8] sm:$0xf]
      %3133 = vst [vmem:[#allocation3 + $0x18] sm:$0xf] %v3101
      %3134 = vst [vmem:[#allocation3 + $0x3c] sm:$0xf] %v3102
      %3135 = vst [vmem:[#allocation3 + $0x60] sm:$0xf] %v3103
      %3136 = vst [vmem:[#allocation3 + $0x84] sm:$0xf] %v3104
      %3137 = vst [vmem:[#allocation3 + $0xa8] sm:$0xf] %v3105
      %3138 = vst [vmem:[#allocation3 + $0xcc] sm:$0xf] %v3106
      %3139 = vst [vmem:[#allocation3 + $0xf0] sm:$0xf] %v3107
      %3140 = vst [vmem:[#allocation3 + $0x114] sm:$0xf] %v3108
      %3141 = vst [vmem:[#allocation3 + $0x138] sm:$0xf] %v3109
      %3142 = vst [vmem:[#allocation3 + $0x15c] sm:$0xf] %v3110
      %3143 = vst [vmem:[#allocation3 + $0x180] sm:$0xf] %v3111
      %3144 = vst [vmem:[#allocation3 + $0x1a4] sm:$0xf] %v3112
      %3145 = vst [vmem:[#allocation3 + $0x1c8] sm:$0xf] %v3113
      %3146 = vst [vmem:[#allocation3 + $0x1ec] sm:$0xf] %v3114
      %3147 = vst [vmem:[#allocation3 + $0x210] sm:$0xf] %v3115
      %3148 = vst [vmem:[#allocation3 + $0x234] sm:$0xf] %v3116
      %3149 = vst [vmem:[#allocation3 + $0x258] sm:$0xf] %v3117
      %3150 = vst [vmem:[#allocation3 + $0x27c] sm:$0xf] %v3118
      %3151 = vst [vmem:[#allocation3 + $0x2a0] sm:$0xf] %v3119
      %3152 = vst [vmem:[#allocation3 + $0x2c4] sm:$0xf] %v3120
      %3153 = vst [vmem:[#allocation3 + $0x2e8] sm:$0xf] %v3121
      %3154 = vst [vmem:[#allocation3 + $0x30c] sm:$0xf] %v3122
      %3155 = vst [vmem:[#allocation3 + $0x330] sm:$0xf] %v3123
      %3156 = vst [vmem:[#allocation3 + $0x354] sm:$0xf] %v3124
      %3157 = vst [vmem:[#allocation3 + $0x378] sm:$0xf] %v3125
      %3158 = vst [vmem:[#allocation3 + $0x39c] sm:$0xf] %v3126
      %3159 = vst [vmem:[#allocation3 + $0x3c0] sm:$0xf] %v3127
      %3160 = vst [vmem:[#allocation3 + $0x3e4] sm:$0xf] %v3128
      %3161 = vst [vmem:[#allocation3 + $0x408] sm:$0xf] %v3129
      %3162 = vst [vmem:[#allocation3 + $0x42c] sm:$0xf] %v3130
      %3163 = vst [vmem:[#allocation3 + $0x450] sm:$0xf] %v3131
      %3164 = vst [vmem:[#allocation3 + $0x474] sm:$0xf] %v3132
      %v3165 = vld [vmem:[%s3100] sm:$0xf]
      %v3166 = vld [vmem:[%s3100 + $0x4] sm:$0xf]
      %v3167 = vld [vmem:[%s3100 + $0x8] sm:$0x1]
      %v3168 = vld [vmem:[%s3100 + $0xc] sm:$0xf]
      %v3169 = vld [vmem:[%s3100 + $0x10] sm:$0xf]
      %v3170 = vld [vmem:[%s3100 + $0x14] sm:$0x1]
      %v3171 = vld [vmem:[%s3100 + $0x18] sm:$0xf]
      %v3172 = vld [vmem:[%s3100 + $0x1c] sm:$0xf]
      %v3173 = vld [vmem:[%s3100 + $0x20] sm:$0x1]
      %v3174 = vld [vmem:[%s3100 + $0x24] sm:$0xf]
      %v3175 = vld [vmem:[%s3100 + $0x28] sm:$0xf]
      %v3176 = vld [vmem:[%s3100 + $0x2c] sm:$0x1]
      %v3177 = vld [vmem:[%s3100 + $0x30] sm:$0xf]
      %v3178 = vld [vmem:[%s3100 + $0x34] sm:$0xf]
      %v3179 = vld [vmem:[%s3100 + $0x38] sm:$0x1]
      %v3180 = vld [vmem:[%s3100 + $0x3c] sm:$0xf]
      %v3181 = vld [vmem:[%s3100 + $0x40] sm:$0xf]
      %v3182 = vld [vmem:[%s3100 + $0x44] sm:$0x1]
      %v3183 = vld [vmem:[%s3100 + $0x48] sm:$0xf]
      %v3184 = vld [vmem:[%s3100 + $0x4c] sm:$0xf]
      %v3185 = vld [vmem:[%s3100 + $0x50] sm:$0x1]
      %v3186 = vld [vmem:[%s3100 + $0x54] sm:$0xf]
      %v3187 = vld [vmem:[%s3100 + $0x58] sm:$0xf]
      %v3188 = vld [vmem:[%s3100 + $0x5c] sm:$0x1]
      %v3189 = vld [vmem:[%s3100 + $0x60] sm:$0xf]
      %v3190 = vld [vmem:[%s3100 + $0x64] sm:$0xf]
      %v3191 = vld [vmem:[%s3100 + $0x68] sm:$0x1]
      %v3192 = vld [vmem:[%s3100 + $0x6c] sm:$0xf]
      %v3193 = vld [vmem:[%s3100 + $0x70] sm:$0xf]
      %v3194 = vld [vmem:[%s3100 + $0x74] sm:$0x1]
      %v3195 = vld [vmem:[%s3100 + $0x78] sm:$0xf]
      %v3196 = vld [vmem:[%s3100 + $0x7c] sm:$0xf]
      %v3197 = vld [vmem:[%s3100 + $0x80] sm:$0x1]
      %v3198 = vld [vmem:[%s3100 + $0x84] sm:$0xf]
      %v3199 = vld [vmem:[%s3100 + $0x88] sm:$0xf]
      %v3200 = vld [vmem:[%s3100 + $0x8c] sm:$0x1]
      %v3201 = vld [vmem:[%s3100 + $0x90] sm:$0xf]
      %v3202 = vld [vmem:[%s3100 + $0x94] sm:$0xf]
      %v3203 = vld [vmem:[%s3100 + $0x98] sm:$0x1]
      %v3204 = vld [vmem:[%s3100 + $0x9c] sm:$0xf]
      %v3205 = vld [vmem:[%s3100 + $0xa0] sm:$0xf]
      %v3206 = vld [vmem:[%s3100 + $0xa4] sm:$0x1]
      %v3207 = vld [vmem:[%s3100 + $0xa8] sm:$0xf]
      %v3208 = vld [vmem:[%s3100 + $0xac] sm:$0xf]
      %v3209 = vld [vmem:[%s3100 + $0xb0] sm:$0x1]
      %v3210 = vld [vmem:[%s3100 + $0xb4] sm:$0xf]
      %v3211 = vld [vmem:[%s3100 + $0xb8] sm:$0xf]
      %v3212 = vld [vmem:[%s3100 + $0xbc] sm:$0x1]
      %v3214 = vshrl.u32 %v3165, 16
      %v3216 = vrot.slane %v3214, 4
      %v3217 = vshll.u32 %v3165, 16
      %v3219 = vrot.slane %v3217, 5
      %v3220 = vor.u32 %v3216, %v3219
      %v3221 = vrot.slane %v3220, 4
      %v3223 = vshll.u32 %v3166, 16
      %v3225 = vrot.slane %v3223, 5
      %v3226 = vsel %vm1544, %v3221, %v3225
      %v3227 = vshrl.u32 %v3166, 16
      %v3229 = vrot.slane %v3227, 4
      %v3230 = vor.u32 %v3229, %v3225
      %v3231 = vrot.slane %v3230, 4
      %v3233 = vshll.u32 %v3167, 16
      %v3235 = vrot.slane %v3233, 5
      %v3236 = vsel %vm1544, %v3231, %v3235
      %v3238 = vshrl.u32 %v3168, 16
      %v3240 = vrot.slane %v3238, 4
      %v3241 = vshll.u32 %v3168, 16
      %v3243 = vrot.slane %v3241, 5
      %v3244 = vor.u32 %v3240, %v3243
      %v3245 = vrot.slane %v3244, 4
      %v3247 = vshll.u32 %v3169, 16
      %v3249 = vrot.slane %v3247, 5
      %v3250 = vsel %vm1544, %v3245, %v3249
      %v3251 = vshrl.u32 %v3169, 16
      %v3253 = vrot.slane %v3251, 4
      %v3254 = vor.u32 %v3253, %v3249
      %v3255 = vrot.slane %v3254, 4
      %v3257 = vshll.u32 %v3170, 16
      %v3259 = vrot.slane %v3257, 5
      %v3260 = vsel %vm1544, %v3255, %v3259
      %v3262 = vshrl.u32 %v3171, 16
      %v3264 = vrot.slane %v3262, 4
      %v3265 = vshll.u32 %v3171, 16
      %v3267 = vrot.slane %v3265, 5
      %v3268 = vor.u32 %v3264, %v3267
      %v3269 = vrot.slane %v3268, 4
      %v3271 = vshll.u32 %v3172, 16
      %v3273 = vrot.slane %v3271, 5
      %v3274 = vsel %vm1544, %v3269, %v3273
      %v3275 = vshrl.u32 %v3172, 16
      %v3277 = vrot.slane %v3275, 4
      %v3278 = vor.u32 %v3277, %v3273
      %v3279 = vrot.slane %v3278, 4
      %v3281 = vshll.u32 %v3173, 16
      %v3283 = vrot.slane %v3281, 5
      %v3284 = vsel %vm1544, %v3279, %v3283
      %v3286 = vshrl.u32 %v3174, 16
      %v3288 = vrot.slane %v3286, 4
      %v3289 = vshll.u32 %v3174, 16
      %v3291 = vrot.slane %v3289, 5
      %v3292 = vor.u32 %v3288, %v3291
      %v3293 = vrot.slane %v3292, 4
      %v3295 = vshll.u32 %v3175, 16
      %v3297 = vrot.slane %v3295, 5
      %v3298 = vsel %vm1544, %v3293, %v3297
      %v3299 = vshrl.u32 %v3175, 16
      %v3301 = vrot.slane %v3299, 4
      %v3302 = vor.u32 %v3301, %v3297
      %v3303 = vrot.slane %v3302, 4
      %v3305 = vshll.u32 %v3176, 16
      %v3307 = vrot.slane %v3305, 5
      %v3308 = vsel %vm1544, %v3303, %v3307
      %v3310 = vshrl.u32 %v3177, 16
      %v3312 = vrot.slane %v3310, 4
      %v3313 = vshll.u32 %v3177, 16
      %v3315 = vrot.slane %v3313, 5
      %v3316 = vor.u32 %v3312, %v3315
      %v3317 = vrot.slane %v3316, 4
      %v3319 = vshll.u32 %v3178, 16
      %v3321 = vrot.slane %v3319, 5
      %v3322 = vsel %vm1544, %v3317, %v3321
      %v3323 = vshrl.u32 %v3178, 16
      %v3325 = vrot.slane %v3323, 4
      %v3326 = vor.u32 %v3325, %v3321
      %v3327 = vrot.slane %v3326, 4
      %v3329 = vshll.u32 %v3179, 16
      %v3331 = vrot.slane %v3329, 5
      %v3332 = vsel %vm1544, %v3327, %v3331
      %v3334 = vshrl.u32 %v3180, 16
      %v3336 = vrot.slane %v3334, 4
      %v3337 = vshll.u32 %v3180, 16
      %v3339 = vrot.slane %v3337, 5
      %v3340 = vor.u32 %v3336, %v3339
      %v3341 = vrot.slane %v3340, 4
      %v3343 = vshll.u32 %v3181, 16
      %v3345 = vrot.slane %v3343, 5
      %v3346 = vsel %vm1544, %v3341, %v3345
      %v3347 = vshrl.u32 %v3181, 16
      %v3349 = vrot.slane %v3347, 4
      %v3350 = vor.u32 %v3349, %v3345
      %v3351 = vrot.slane %v3350, 4
      %v3353 = vshll.u32 %v3182, 16
      %v3355 = vrot.slane %v3353, 5
      %v3356 = vsel %vm1544, %v3351, %v3355
      %v3358 = vshrl.u32 %v3183, 16
      %v3360 = vrot.slane %v3358, 4
      %v3361 = vshll.u32 %v3183, 16
      %v3363 = vrot.slane %v3361, 5
      %v3364 = vor.u32 %v3360, %v3363
      %v3365 = vrot.slane %v3364, 4
      %v3367 = vshll.u32 %v3184, 16
      %v3369 = vrot.slane %v3367, 5
      %v3370 = vsel %vm1544, %v3365, %v3369
      %v3371 = vshrl.u32 %v3184, 16
      %v3373 = vrot.slane %v3371, 4
      %v3374 = vor.u32 %v3373, %v3369
      %v3375 = vrot.slane %v3374, 4
      %v3377 = vshll.u32 %v3185, 16
      %v3379 = vrot.slane %v3377, 5
      %v3380 = vsel %vm1544, %v3375, %v3379
      %v3382 = vshrl.u32 %v3186, 16
      %v3384 = vrot.slane %v3382, 4
      %v3385 = vshll.u32 %v3186, 16
      %v3387 = vrot.slane %v3385, 5
      %v3388 = vor.u32 %v3384, %v3387
      %v3389 = vrot.slane %v3388, 4
      %v3391 = vshll.u32 %v3187, 16
      %v3393 = vrot.slane %v3391, 5
      %v3394 = vsel %vm1544, %v3389, %v3393
      %v3395 = vshrl.u32 %v3187, 16
      %v3397 = vrot.slane %v3395, 4
      %v3398 = vor.u32 %v3397, %v3393
      %v3399 = vrot.slane %v3398, 4
      %v3401 = vshll.u32 %v3188, 16
      %v3403 = vrot.slane %v3401, 5
      %v3404 = vsel %vm1544, %v3399, %v3403
      %v3406 = vshrl.u32 %v3189, 16
      %v3408 = vrot.slane %v3406, 4
      %v3409 = vshll.u32 %v3189, 16
      %v3411 = vrot.slane %v3409, 5
      %v3412 = vor.u32 %v3408, %v3411
      %v3413 = vrot.slane %v3412, 4
      %v3415 = vshll.u32 %v3190, 16
      %v3417 = vrot.slane %v3415, 5
      %v3418 = vsel %vm1544, %v3413, %v3417
      %v3419 = vshrl.u32 %v3190, 16
      %v3421 = vrot.slane %v3419, 4
      %v3422 = vor.u32 %v3421, %v3417
      %v3423 = vrot.slane %v3422, 4
      %v3425 = vshll.u32 %v3191, 16
      %v3427 = vrot.slane %v3425, 5
      %v3428 = vsel %vm1544, %v3423, %v3427
      %v3430 = vshrl.u32 %v3192, 16
      %v3432 = vrot.slane %v3430, 4
      %v3433 = vshll.u32 %v3192, 16
      %v3435 = vrot.slane %v3433, 5
      %v3436 = vor.u32 %v3432, %v3435
      %v3437 = vrot.slane %v3436, 4
      %v3439 = vshll.u32 %v3193, 16
      %v3441 = vrot.slane %v3439, 5
      %v3442 = vsel %vm1544, %v3437, %v3441
      %v3443 = vshrl.u32 %v3193, 16
      %v3445 = vrot.slane %v3443, 4
      %v3446 = vor.u32 %v3445, %v3441
      %v3447 = vrot.slane %v3446, 4
      %v3449 = vshll.u32 %v3194, 16
      %v3451 = vrot.slane %v3449, 5
      %v3452 = vsel %vm1544, %v3447, %v3451
      %v3454 = vshrl.u32 %v3195, 16
      %v3456 = vrot.slane %v3454, 4
      %v3457 = vshll.u32 %v3195, 16
      %v3459 = vrot.slane %v3457, 5
      %v3460 = vor.u32 %v3456, %v3459
      %v3461 = vrot.slane %v3460, 4
      %v3463 = vshll.u32 %v3196, 16
      %v3465 = vrot.slane %v3463, 5
      %v3466 = vsel %vm1544, %v3461, %v3465
      %v3467 = vshrl.u32 %v3196, 16
      %v3469 = vrot.slane %v3467, 4
      %v3470 = vor.u32 %v3469, %v3465
      %v3471 = vrot.slane %v3470, 4
      %v3473 = vshll.u32 %v3197, 16
      %v3475 = vrot.slane %v3473, 5
      %v3476 = vsel %vm1544, %v3471, %v3475
      %v3478 = vshrl.u32 %v3198, 16
      %v3480 = vrot.slane %v3478, 4
      %v3481 = vshll.u32 %v3198, 16
      %v3483 = vrot.slane %v3481, 5
      %v3484 = vor.u32 %v3480, %v3483
      %v3485 = vrot.slane %v3484, 4
      %v3487 = vshll.u32 %v3199, 16
      %v3489 = vrot.slane %v3487, 5
      %v3490 = vsel %vm1544, %v3485, %v3489
      %v3491 = vshrl.u32 %v3199, 16
      %v3493 = vrot.slane %v3491, 4
      %v3494 = vor.u32 %v3493, %v3489
      %v3495 = vrot.slane %v3494, 4
      %v3497 = vshll.u32 %v3200, 16
      %v3499 = vrot.slane %v3497, 5
      %v3500 = vsel %vm1544, %v3495, %v3499
      %v3502 = vshrl.u32 %v3201, 16
      %v3504 = vrot.slane %v3502, 4
      %v3505 = vshll.u32 %v3201, 16
      %v3507 = vrot.slane %v3505, 5
      %v3508 = vor.u32 %v3504, %v3507
      %v3509 = vrot.slane %v3508, 4
      %v3511 = vshll.u32 %v3202, 16
      %v3513 = vrot.slane %v3511, 5
      %v3514 = vsel %vm1544, %v3509, %v3513
      %v3515 = vshrl.u32 %v3202, 16
      %v3517 = vrot.slane %v3515, 4
      %v3518 = vor.u32 %v3517, %v3513
      %v3519 = vrot.slane %v3518, 4
      %v3521 = vshll.u32 %v3203, 16
      %v3523 = vrot.slane %v3521, 5
      %v3524 = vsel %vm1544, %v3519, %v3523
      %v3526 = vshrl.u32 %v3204, 16
      %v3528 = vrot.slane %v3526, 4
      %v3529 = vshll.u32 %v3204, 16
      %v3531 = vrot.slane %v3529, 5
      %v3532 = vor.u32 %v3528, %v3531
      %v3533 = vrot.slane %v3532, 4
      %v3535 = vshll.u32 %v3205, 16
      %v3537 = vrot.slane %v3535, 5
      %v3538 = vsel %vm1544, %v3533, %v3537
      %v3539 = vshrl.u32 %v3205, 16
      %v3541 = vrot.slane %v3539, 4
      %v3542 = vor.u32 %v3541, %v3537
      %v3543 = vrot.slane %v3542, 4
      %v3545 = vshll.u32 %v3206, 16
      %v3547 = vrot.slane %v3545, 5
      %v3548 = vsel %vm1544, %v3543, %v3547
      %v3550 = vshrl.u32 %v3207, 16
      %v3552 = vrot.slane %v3550, 4
      %v3553 = vshll.u32 %v3207, 16
      %v3555 = vrot.slane %v3553, 5
      %v3556 = vor.u32 %v3552, %v3555
      %v3557 = vrot.slane %v3556, 4
      %v3559 = vshll.u32 %v3208, 16
      %v3561 = vrot.slane %v3559, 5
      %v3562 = vsel %vm1544, %v3557, %v3561
      %v3563 = vshrl.u32 %v3208, 16
      %v3565 = vrot.slane %v3563, 4
      %v3566 = vor.u32 %v3565, %v3561
      %v3567 = vrot.slane %v3566, 4
      %v3569 = vshll.u32 %v3209, 16
      %v3571 = vrot.slane %v3569, 5
      %v3572 = vsel %vm1544, %v3567, %v3571
      %v3574 = vshrl.u32 %v3210, 16
      %v3576 = vrot.slane %v3574, 4
      %v3577 = vshll.u32 %v3210, 16
      %v3579 = vrot.slane %v3577, 5
      %v3580 = vor.u32 %v3576, %v3579
      %v3581 = vrot.slane %v3580, 4
      %v3583 = vshll.u32 %v3211, 16
      %v3585 = vrot.slane %v3583, 5
      %v3586 = vsel %vm1544, %v3581, %v3585
      %v3587 = vshrl.u32 %v3211, 16
      %v3589 = vrot.slane %v3587, 4
      %v3590 = vor.u32 %v3589, %v3585
      %v3591 = vrot.slane %v3590, 4
      %v3593 = vshll.u32 %v3212, 16
      %v3595 = vrot.slane %v3593, 5
      %v3596 = vsel %vm1544, %v3591, %v3595
      %3629 = vst [vmem:[#allocation3 + $0x1c] sm:$0xf] %v3226
      %3630 = vst [vmem:[#allocation3 + $0x40] sm:$0xf] %v3236
      %3631 = vst [vmem:[#allocation3 + $0x64] sm:$0xf] %v3250
      %3632 = vst [vmem:[#allocation3 + $0x88] sm:$0xf] %v3260
      %3633 = vst [vmem:[#allocation3 + $0xac] sm:$0xf] %v3274
      %3634 = vst [vmem:[#allocation3 + $0xd0] sm:$0xf] %v3284
      %3635 = vst [vmem:[#allocation3 + $0xf4] sm:$0xf] %v3298
      %3636 = vst [vmem:[#allocation3 + $0x118] sm:$0xf] %v3308
      %3637 = vst [vmem:[#allocation3 + $0x13c] sm:$0xf] %v3322
      %3638 = vst [vmem:[#allocation3 + $0x160] sm:$0xf] %v3332
      %3639 = vst [vmem:[#allocation3 + $0x184] sm:$0xf] %v3346
      %3640 = vst [vmem:[#allocation3 + $0x1a8] sm:$0xf] %v3356
      %3641 = vst [vmem:[#allocation3 + $0x1cc] sm:$0xf] %v3370
      %3642 = vst [vmem:[#allocation3 + $0x1f0] sm:$0xf] %v3380
      %3643 = vst [vmem:[#allocation3 + $0x214] sm:$0xf] %v3394
      %3644 = vst [vmem:[#allocation3 + $0x238] sm:$0xf] %v3404
      %3645 = vst [vmem:[#allocation3 + $0x25c] sm:$0xf] %v3418
      %3646 = vst [vmem:[#allocation3 + $0x280] sm:$0xf] %v3428
      %3647 = vst [vmem:[#allocation3 + $0x2a4] sm:$0xf] %v3442
      %3648 = vst [vmem:[#allocation3 + $0x2c8] sm:$0xf] %v3452
      %3649 = vst [vmem:[#allocation3 + $0x2ec] sm:$0xf] %v3466
      %3650 = vst [vmem:[#allocation3 + $0x310] sm:$0xf] %v3476
      %3651 = vst [vmem:[#allocation3 + $0x334] sm:$0xf] %v3490
      %3652 = vst [vmem:[#allocation3 + $0x358] sm:$0xf] %v3500
      %3653 = vst [vmem:[#allocation3 + $0x37c] sm:$0xf] %v3514
      %3654 = vst [vmem:[#allocation3 + $0x3a0] sm:$0xf] %v3524
      %3655 = vst [vmem:[#allocation3 + $0x3c4] sm:$0xf] %v3538
      %3656 = vst [vmem:[#allocation3 + $0x3e8] sm:$0xf] %v3548
      %3657 = vst [vmem:[#allocation3 + $0x40c] sm:$0xf] %v3562
      %3658 = vst [vmem:[#allocation3 + $0x430] sm:$0xf] %v3572
      %3659 = vst [vmem:[#allocation3 + $0x454] sm:$0xf] %v3586
      %3660 = vst [vmem:[#allocation3 + $0x478] sm:$0xf] %v3596
      %v3661 = vld [vmem:[%s3100] sm:$0xe]
      %v3662 = vld [vmem:[%s3100 + $0x4] sm:$0xf]
      %v3663 = vld [vmem:[%s3100 + $0x8] sm:$0x1]
      %v3664 = vld [vmem:[%s3100 + $0xc] sm:$0xe]
      %v3665 = vld [vmem:[%s3100 + $0x10] sm:$0xf]
      %v3666 = vld [vmem:[%s3100 + $0x14] sm:$0x1]
      %v3667 = vld [vmem:[%s3100 + $0x18] sm:$0xe]
      %v3668 = vld [vmem:[%s3100 + $0x1c] sm:$0xf]
      %v3669 = vld [vmem:[%s3100 + $0x20] sm:$0x1]
      %v3670 = vld [vmem:[%s3100 + $0x24] sm:$0xe]
      %v3671 = vld [vmem:[%s3100 + $0x28] sm:$0xf]
      %v3672 = vld [vmem:[%s3100 + $0x2c] sm:$0x1]
      %v3673 = vld [vmem:[%s3100 + $0x30] sm:$0xe]
      %v3674 = vld [vmem:[%s3100 + $0x34] sm:$0xf]
      %v3675 = vld [vmem:[%s3100 + $0x38] sm:$0x1]
      %v3676 = vld [vmem:[%s3100 + $0x3c] sm:$0xe]
      %v3677 = vld [vmem:[%s3100 + $0x40] sm:$0xf]
      %v3678 = vld [vmem:[%s3100 + $0x44] sm:$0x1]
      %v3679 = vld [vmem:[%s3100 + $0x48] sm:$0xe]
      %v3680 = vld [vmem:[%s3100 + $0x4c] sm:$0xf]
      %v3681 = vld [vmem:[%s3100 + $0x50] sm:$0x1]
      %v3682 = vld [vmem:[%s3100 + $0x54] sm:$0xe]
      %v3683 = vld [vmem:[%s3100 + $0x58] sm:$0xf]
      %v3684 = vld [vmem:[%s3100 + $0x5c] sm:$0x1]
      %v3685 = vld [vmem:[%s3100 + $0x60] sm:$0xe]
      %v3686 = vld [vmem:[%s3100 + $0x64] sm:$0xf]
      %v3687 = vld [vmem:[%s3100 + $0x68] sm:$0x1]
      %v3688 = vld [vmem:[%s3100 + $0x6c] sm:$0xe]
      %v3689 = vld [vmem:[%s3100 + $0x70] sm:$0xf]
      %v3690 = vld [vmem:[%s3100 + $0x74] sm:$0x1]
      %v3691 = vld [vmem:[%s3100 + $0x78] sm:$0xe]
      %v3692 = vld [vmem:[%s3100 + $0x7c] sm:$0xf]
      %v3693 = vld [vmem:[%s3100 + $0x80] sm:$0x1]
      %v3694 = vld [vmem:[%s3100 + $0x84] sm:$0xe]
      %v3695 = vld [vmem:[%s3100 + $0x88] sm:$0xf]
      %v3696 = vld [vmem:[%s3100 + $0x8c] sm:$0x1]
      %v3697 = vld [vmem:[%s3100 + $0x90] sm:$0xe]
      %v3698 = vld [vmem:[%s3100 + $0x94] sm:$0xf]
      %v3699 = vld [vmem:[%s3100 + $0x98] sm:$0x1]
      %v3700 = vld [vmem:[%s3100 + $0x9c] sm:$0xe]
      %v3701 = vld [vmem:[%s3100 + $0xa0] sm:$0xf]
      %v3702 = vld [vmem:[%s3100 + $0xa4] sm:$0x1]
      %v3703 = vld [vmem:[%s3100 + $0xa8] sm:$0xe]
      %v3704 = vld [vmem:[%s3100 + $0xac] sm:$0xf]
      %v3705 = vld [vmem:[%s3100 + $0xb0] sm:$0x1]
      %v3706 = vld [vmem:[%s3100 + $0xb4] sm:$0xe]
      %v3707 = vld [vmem:[%s3100 + $0xb8] sm:$0xf]
      %v3708 = vld [vmem:[%s3100 + $0xbc] sm:$0x1]
      %v3757 = vrot.slane %v3661, 5
      %v3758 = vrot.slane %v3757, 4
      %v3759 = vrot.slane %v3662, 5
      %v3760 = vsel %vm2091, %v3758, %v3759
      %v3761 = vrot.slane %v3759, 4
      %v3762 = vrot.slane %v3663, 5
      %v3763 = vsel %vm2091, %v3761, %v3762
      %v3764 = vrot.slane %v3664, 5
      %v3765 = vrot.slane %v3764, 4
      %v3766 = vrot.slane %v3665, 5
      %v3767 = vsel %vm2091, %v3765, %v3766
      %v3768 = vrot.slane %v3766, 4
      %v3769 = vrot.slane %v3666, 5
      %v3770 = vsel %vm2091, %v3768, %v3769
      %v3771 = vrot.slane %v3667, 5
      %v3772 = vrot.slane %v3771, 4
      %v3773 = vrot.slane %v3668, 5
      %v3774 = vsel %vm2091, %v3772, %v3773
      %v3775 = vrot.slane %v3773, 4
      %v3776 = vrot.slane %v3669, 5
      %v3777 = vsel %vm2091, %v3775, %v3776
      %v3778 = vrot.slane %v3670, 5
      %v3779 = vrot.slane %v3778, 4
      %v3780 = vrot.slane %v3671, 5
      %v3781 = vsel %vm2091, %v3779, %v3780
      %v3782 = vrot.slane %v3780, 4
      %v3783 = vrot.slane %v3672, 5
      %v3784 = vsel %vm2091, %v3782, %v3783
      %v3785 = vrot.slane %v3673, 5
      %v3786 = vrot.slane %v3785, 4
      %v3787 = vrot.slane %v3674, 5
      %v3788 = vsel %vm2091, %v3786, %v3787
      %v3789 = vrot.slane %v3787, 4
      %v3790 = vrot.slane %v3675, 5
      %v3791 = vsel %vm2091, %v3789, %v3790
      %v3792 = vrot.slane %v3676, 5
      %v3793 = vrot.slane %v3792, 4
      %v3794 = vrot.slane %v3677, 5
      %v3795 = vsel %vm2091, %v3793, %v3794
      %v3796 = vrot.slane %v3794, 4
      %v3797 = vrot.slane %v3678, 5
      %v3798 = vsel %vm2091, %v3796, %v3797
      %v3799 = vrot.slane %v3679, 5
      %v3800 = vrot.slane %v3799, 4
      %v3801 = vrot.slane %v3680, 5
      %v3802 = vsel %vm2091, %v3800, %v3801
      %v3803 = vrot.slane %v3801, 4
      %v3804 = vrot.slane %v3681, 5
      %v3805 = vsel %vm2091, %v3803, %v3804
      %v3806 = vrot.slane %v3682, 5
      %v3807 = vrot.slane %v3806, 4
      %v3808 = vrot.slane %v3683, 5
      %v3809 = vsel %vm2091, %v3807, %v3808
      %v3810 = vrot.slane %v3808, 4
      %v3811 = vrot.slane %v3684, 5
      %v3812 = vsel %vm2091, %v3810, %v3811
      %v3813 = vrot.slane %v3685, 5
      %v3814 = vrot.slane %v3813, 4
      %v3815 = vrot.slane %v3686, 5
      %v3816 = vsel %vm2091, %v3814, %v3815
      %v3817 = vrot.slane %v3815, 4
      %v3818 = vrot.slane %v3687, 5
      %v3819 = vsel %vm2091, %v3817, %v3818
      %v3820 = vrot.slane %v3688, 5
      %v3821 = vrot.slane %v3820, 4
      %v3822 = vrot.slane %v3689, 5
      %v3823 = vsel %vm2091, %v3821, %v3822
      %v3824 = vrot.slane %v3822, 4
      %v3825 = vrot.slane %v3690, 5
      %v3826 = vsel %vm2091, %v3824, %v3825
      %v3827 = vrot.slane %v3691, 5
      %v3828 = vrot.slane %v3827, 4
      %v3829 = vrot.slane %v3692, 5
      %v3830 = vsel %vm2091, %v3828, %v3829
      %v3831 = vrot.slane %v3829, 4
      %v3832 = vrot.slane %v3693, 5
      %v3833 = vsel %vm2091, %v3831, %v3832
      %v3834 = vrot.slane %v3694, 5
      %v3835 = vrot.slane %v3834, 4
      %v3836 = vrot.slane %v3695, 5
      %v3837 = vsel %vm2091, %v3835, %v3836
      %v3838 = vrot.slane %v3836, 4
      %v3839 = vrot.slane %v3696, 5
      %v3840 = vsel %vm2091, %v3838, %v3839
      %v3841 = vrot.slane %v3697, 5
      %v3842 = vrot.slane %v3841, 4
      %v3843 = vrot.slane %v3698, 5
      %v3844 = vsel %vm2091, %v3842, %v3843
      %v3845 = vrot.slane %v3843, 4
      %v3846 = vrot.slane %v3699, 5
      %v3847 = vsel %vm2091, %v3845, %v3846
      %v3848 = vrot.slane %v3700, 5
      %v3849 = vrot.slane %v3848, 4
      %v3850 = vrot.slane %v3701, 5
      %v3851 = vsel %vm2091, %v3849, %v3850
      %v3852 = vrot.slane %v3850, 4
      %v3853 = vrot.slane %v3702, 5
      %v3854 = vsel %vm2091, %v3852, %v3853
      %v3855 = vrot.slane %v3703, 5
      %v3856 = vrot.slane %v3855, 4
      %v3857 = vrot.slane %v3704, 5
      %v3858 = vsel %vm2091, %v3856, %v3857
      %v3859 = vrot.slane %v3857, 4
      %v3860 = vrot.slane %v3705, 5
      %v3861 = vsel %vm2091, %v3859, %v3860
      %v3862 = vrot.slane %v3706, 5
      %v3863 = vrot.slane %v3862, 4
      %v3864 = vrot.slane %v3707, 5
      %v3865 = vsel %vm2091, %v3863, %v3864
      %v3866 = vrot.slane %v3864, 4
      %v3867 = vrot.slane %v3708, 5
      %v3868 = vsel %vm2091, %v3866, %v3867
      %3901 = vst [vmem:[#allocation3 + $0x20] sm:$0xf] %v3760
      %3902 = vst [vmem:[#allocation3 + $0x44] sm:$0xf] %v3763
      %3903 = vst [vmem:[#allocation3 + $0x68] sm:$0xf] %v3767
      %3904 = vst [vmem:[#allocation3 + $0x8c] sm:$0xf] %v3770
      %3905 = vst [vmem:[#allocation3 + $0xb0] sm:$0xf] %v3774
      %3906 = vst [vmem:[#allocation3 + $0xd4] sm:$0xf] %v3777
      %3907 = vst [vmem:[#allocation3 + $0xf8] sm:$0xf] %v3781
      %3908 = vst [vmem:[#allocation3 + $0x11c] sm:$0xf] %v3784
      %3909 = vst [vmem:[#allocation3 + $0x140] sm:$0xf] %v3788
      %3910 = vst [vmem:[#allocation3 + $0x164] sm:$0xf] %v3791
      %3911 = vst [vmem:[#allocation3 + $0x188] sm:$0xf] %v3795
      %3912 = vst [vmem:[#allocation3 + $0x1ac] sm:$0xf] %v3798
      %3913 = vst [vmem:[#allocation3 + $0x1d0] sm:$0xf] %v3802
      %3914 = vst [vmem:[#allocation3 + $0x1f4] sm:$0xf] %v3805
      %3915 = vst [vmem:[#allocation3 + $0x218] sm:$0xf] %v3809
      %3916 = vst [vmem:[#allocation3 + $0x23c] sm:$0xf] %v3812
      %3917 = vst [vmem:[#allocation3 + $0x260] sm:$0xf] %v3816
      %3918 = vst [vmem:[#allocation3 + $0x284] sm:$0xf] %v3819
      %3919 = vst [vmem:[#allocation3 + $0x2a8] sm:$0xf] %v3823
      %3920 = vst [vmem:[#allocation3 + $0x2cc] sm:$0xf] %v3826
      %3921 = vst [vmem:[#allocation3 + $0x2f0] sm:$0xf] %v3830
      %3922 = vst [vmem:[#allocation3 + $0x314] sm:$0xf] %v3833
      %3923 = vst [vmem:[#allocation3 + $0x338] sm:$0xf] %v3837
      %3924 = vst [vmem:[#allocation3 + $0x35c] sm:$0xf] %v3840
      %3925 = vst [vmem:[#allocation3 + $0x380] sm:$0xf] %v3844
      %3926 = vst [vmem:[#allocation3 + $0x3a4] sm:$0xf] %v3847
      %3927 = vst [vmem:[#allocation3 + $0x3c8] sm:$0xf] %v3851
      %3928 = vst [vmem:[#allocation3 + $0x3ec] sm:$0xf] %v3854
      %3929 = vst [vmem:[#allocation3 + $0x410] sm:$0xf] %v3858
      %3930 = vst [vmem:[#allocation3 + $0x434] sm:$0xf] %v3861
      %3931 = vst [vmem:[#allocation3 + $0x458] sm:$0xf] %v3865
      %3932 = vst [vmem:[#allocation3 + $0x47c] sm:$0xf] %v3868
      %v3933 = vld [vmem:[#allocation3] sm:$0xff]
      %v3934 = vld [vmem:[#allocation3 + $0x8] sm:$0xff]
      %v3935 = vld [vmem:[#allocation3 + $0x10] sm:$0xff]
      %v3936 = vld [vmem:[#allocation3 + $0x18] sm:$0xff]
      %v3937 = vld [vmem:[#allocation3 + $0x20] sm:$0xf]
      %v3938 = vld [vmem:[#allocation3 + $0x24] sm:$0xff]
      %v3939 = vld [vmem:[#allocation3 + $0x2c] sm:$0xff]
      %v3940 = vld [vmem:[#allocation3 + $0x34] sm:$0xff]
      %v3941 = vld [vmem:[#allocation3 + $0x3c] sm:$0xff]
      %v3942 = vld [vmem:[#allocation3 + $0x44] sm:$0xf]
      %v3943 = vld [vmem:[#allocation3 + $0x48] sm:$0xff]
      %v3944 = vld [vmem:[#allocation3 + $0x50] sm:$0xff]
      %v3945 = vld [vmem:[#allocation3 + $0x58] sm:$0xff]
      %v3946 = vld [vmem:[#allocation3 + $0x60] sm:$0xff]
      %v3947 = vld [vmem:[#allocation3 + $0x68] sm:$0xf]
      %v3948 = vld [vmem:[#allocation3 + $0x6c] sm:$0xff]
      %v3949 = vld [vmem:[#allocation3 + $0x74] sm:$0xff]
      %v3950 = vld [vmem:[#allocation3 + $0x7c] sm:$0xff]
      %v3951 = vld [vmem:[#allocation3 + $0x84] sm:$0xff]
      %v3952 = vld [vmem:[#allocation3 + $0x8c] sm:$0xf]
      %v3953 = vld [vmem:[#allocation3 + $0x90] sm:$0xff]
      %v3954 = vld [vmem:[#allocation3 + $0x98] sm:$0xff]
      %v3955 = vld [vmem:[#allocation3 + $0xa0] sm:$0xff]
      %v3956 = vld [vmem:[#allocation3 + $0xa8] sm:$0xff]
      %v3957 = vld [vmem:[#allocation3 + $0xb0] sm:$0xf]
      %v3958 = vld [vmem:[#allocation3 + $0xb4] sm:$0xff]
      %v3959 = vld [vmem:[#allocation3 + $0xbc] sm:$0xff]
      %v3960 = vld [vmem:[#allocation3 + $0xc4] sm:$0xff]
      %v3961 = vld [vmem:[#allocation3 + $0xcc] sm:$0xff]
      %v3962 = vld [vmem:[#allocation3 + $0xd4] sm:$0xf]
      %v3963 = vld [vmem:[#allocation3 + $0xd8] sm:$0xff]
      %v3964 = vld [vmem:[#allocation3 + $0xe0] sm:$0xff]
      %v3965 = vld [vmem:[#allocation3 + $0xe8] sm:$0xff]
      %v3966 = vld [vmem:[#allocation3 + $0xf0] sm:$0xff]
      %v3967 = vld [vmem:[#allocation3 + $0xf8] sm:$0xf]
      %v3968 = vld [vmem:[#allocation3 + $0xfc] sm:$0xff]
      %v3969 = vld [vmem:[#allocation3 + $0x104] sm:$0xff]
      %v3970 = vld [vmem:[#allocation3 + $0x10c] sm:$0xff]
      %v3971 = vld [vmem:[#allocation3 + $0x114] sm:$0xff]
      %v3972 = vld [vmem:[#allocation3 + $0x11c] sm:$0xf]
      %v3973 = vld [vmem:[#allocation3 + $0x120] sm:$0xff]
      %v3974 = vld [vmem:[#allocation3 + $0x128] sm:$0xff]
      %v3975 = vld [vmem:[#allocation3 + $0x130] sm:$0xff]
      %v3976 = vld [vmem:[#allocation3 + $0x138] sm:$0xff]
      %v3977 = vld [vmem:[#allocation3 + $0x140] sm:$0xf]
      %v3978 = vld [vmem:[#allocation3 + $0x144] sm:$0xff]
      %v3979 = vld [vmem:[#allocation3 + $0x14c] sm:$0xff]
      %v3980 = vld [vmem:[#allocation3 + $0x154] sm:$0xff]
      %v3981 = vld [vmem:[#allocation3 + $0x15c] sm:$0xff]
      %v3982 = vld [vmem:[#allocation3 + $0x164] sm:$0xf]
      %v3983 = vld [vmem:[#allocation3 + $0x168] sm:$0xff]
      %v3984 = vld [vmem:[#allocation3 + $0x170] sm:$0xff]
      %v3985 = vld [vmem:[#allocation3 + $0x178] sm:$0xff]
      %v3986 = vld [vmem:[#allocation3 + $0x180] sm:$0xff]
      %v3987 = vld [vmem:[#allocation3 + $0x188] sm:$0xf]
      %v3988 = vld [vmem:[#allocation3 + $0x18c] sm:$0xff]
      %v3989 = vld [vmem:[#allocation3 + $0x194] sm:$0xff]
      %v3990 = vld [vmem:[#allocation3 + $0x19c] sm:$0xff]
      %v3991 = vld [vmem:[#allocation3 + $0x1a4] sm:$0xff]
      %v3992 = vld [vmem:[#allocation3 + $0x1ac] sm:$0xf]
      %v3993 = vld [vmem:[#allocation3 + $0x1b0] sm:$0xff]
      %v3994 = vld [vmem:[#allocation3 + $0x1b8] sm:$0xff]
      %v3995 = vld [vmem:[#allocation3 + $0x1c0] sm:$0xff]
      %v3996 = vld [vmem:[#allocation3 + $0x1c8] sm:$0xff]
      %v3997 = vld [vmem:[#allocation3 + $0x1d0] sm:$0xf]
      %v3998 = vld [vmem:[#allocation3 + $0x1d4] sm:$0xff]
      %v3999 = vld [vmem:[#allocation3 + $0x1dc] sm:$0xff]
      %v4000 = vld [vmem:[#allocation3 + $0x1e4] sm:$0xff]
      %v4001 = vld [vmem:[#allocation3 + $0x1ec] sm:$0xff]
      %v4002 = vld [vmem:[#allocation3 + $0x1f4] sm:$0xf]
      %v4003 = vld [vmem:[#allocation3 + $0x1f8] sm:$0xff]
      %v4004 = vld [vmem:[#allocation3 + $0x200] sm:$0xff]
      %v4005 = vld [vmem:[#allocation3 + $0x208] sm:$0xff]
      %v4006 = vld [vmem:[#allocation3 + $0x210] sm:$0xff]
      %v4007 = vld [vmem:[#allocation3 + $0x218] sm:$0xf]
      %v4008 = vld [vmem:[#allocation3 + $0x21c] sm:$0xff]
      %v4009 = vld [vmem:[#allocation3 + $0x224] sm:$0xff]
      %v4010 = vld [vmem:[#allocation3 + $0x22c] sm:$0xff]
      %v4011 = vld [vmem:[#allocation3 + $0x234] sm:$0xff]
      %v4012 = vld [vmem:[#allocation3 + $0x23c] sm:$0xf]
      %v4013 = vld [vmem:[#allocation3 + $0x240] sm:$0xff]
      %v4014 = vld [vmem:[#allocation3 + $0x248] sm:$0xff]
      %v4015 = vld [vmem:[#allocation3 + $0x250] sm:$0xff]
      %v4016 = vld [vmem:[#allocation3 + $0x258] sm:$0xff]
      %v4017 = vld [vmem:[#allocation3 + $0x260] sm:$0xf]
      %v4018 = vld [vmem:[#allocation3 + $0x264] sm:$0xff]
      %v4019 = vld [vmem:[#allocation3 + $0x26c] sm:$0xff]
      %v4020 = vld [vmem:[#allocation3 + $0x274] sm:$0xff]
      %v4021 = vld [vmem:[#allocation3 + $0x27c] sm:$0xff]
      %v4022 = vld [vmem:[#allocation3 + $0x284] sm:$0xf]
      %v4023 = vld [vmem:[#allocation3 + $0x288] sm:$0xff]
      %v4024 = vld [vmem:[#allocation3 + $0x290] sm:$0xff]
      %v4025 = vld [vmem:[#allocation3 + $0x298] sm:$0xff]
      %v4026 = vld [vmem:[#allocation3 + $0x2a0] sm:$0xff]
      %v4027 = vld [vmem:[#allocation3 + $0x2a8] sm:$0xf]
      %v4028 = vld [vmem:[#allocation3 + $0x2ac] sm:$0xff]
      %v4029 = vld [vmem:[#allocation3 + $0x2b4] sm:$0xff]
      %v4030 = vld [vmem:[#allocation3 + $0x2bc] sm:$0xff]
      %v4031 = vld [vmem:[#allocation3 + $0x2c4] sm:$0xff]
      %v4032 = vld [vmem:[#allocation3 + $0x2cc] sm:$0xf]
      %v4033 = vld [vmem:[#allocation3 + $0x2d0] sm:$0xff]
      %v4034 = vld [vmem:[#allocation3 + $0x2d8] sm:$0xff]
      %v4035 = vld [vmem:[#allocation3 + $0x2e0] sm:$0xff]
      %v4036 = vld [vmem:[#allocation3 + $0x2e8] sm:$0xff]
      %v4037 = vld [vmem:[#allocation3 + $0x2f0] sm:$0xf]
      %v4038 = vld [vmem:[#allocation3 + $0x2f4] sm:$0xff]
      %v4039 = vld [vmem:[#allocation3 + $0x2fc] sm:$0xff]
      %v4040 = vld [vmem:[#allocation3 + $0x304] sm:$0xff]
      %v4041 = vld [vmem:[#allocation3 + $0x30c] sm:$0xff]
      %v4042 = vld [vmem:[#allocation3 + $0x314] sm:$0xf]
      %v4043 = vld [vmem:[#allocation3 + $0x318] sm:$0xff]
      %v4044 = vld [vmem:[#allocation3 + $0x320] sm:$0xff]
      %v4045 = vld [vmem:[#allocation3 + $0x328] sm:$0xff]
      %v4046 = vld [vmem:[#allocation3 + $0x330] sm:$0xff]
      %v4047 = vld [vmem:[#allocation3 + $0x338] sm:$0xf]
      %v4048 = vld [vmem:[#allocation3 + $0x33c] sm:$0xff]
      %v4049 = vld [vmem:[#allocation3 + $0x344] sm:$0xff]
      %v4050 = vld [vmem:[#allocation3 + $0x34c] sm:$0xff]
      %v4051 = vld [vmem:[#allocation3 + $0x354] sm:$0xff]
      %v4052 = vld [vmem:[#allocation3 + $0x35c] sm:$0xf]
      %v4053 = vld [vmem:[#allocation3 + $0x360] sm:$0xff]
      %v4054 = vld [vmem:[#allocation3 + $0x368] sm:$0xff]
      %v4055 = vld [vmem:[#allocation3 + $0x370] sm:$0xff]
      %v4056 = vld [vmem:[#allocation3 + $0x378] sm:$0xff]
      %v4057 = vld [vmem:[#allocation3 + $0x380] sm:$0xf]
      %v4058 = vld [vmem:[#allocation3 + $0x384] sm:$0xff]
      %v4059 = vld [vmem:[#allocation3 + $0x38c] sm:$0xff]
      %v4060 = vld [vmem:[#allocation3 + $0x394] sm:$0xff]
      %v4061 = vld [vmem:[#allocation3 + $0x39c] sm:$0xff]
      %v4062 = vld [vmem:[#allocation3 + $0x3a4] sm:$0xf]
      %v4063 = vld [vmem:[#allocation3 + $0x3a8] sm:$0xff]
      %v4064 = vld [vmem:[#allocation3 + $0x3b0] sm:$0xff]
      %v4065 = vld [vmem:[#allocation3 + $0x3b8] sm:$0xff]
      %v4066 = vld [vmem:[#allocation3 + $0x3c0] sm:$0xff]
      %v4067 = vld [vmem:[#allocation3 + $0x3c8] sm:$0xf]
      %v4068 = vld [vmem:[#allocation3 + $0x3cc] sm:$0xff]
      %v4069 = vld [vmem:[#allocation3 + $0x3d4] sm:$0xff]
      %v4070 = vld [vmem:[#allocation3 + $0x3dc] sm:$0xff]
      %v4071 = vld [vmem:[#allocation3 + $0x3e4] sm:$0xff]
      %v4072 = vld [vmem:[#allocation3 + $0x3ec] sm:$0xf]
      %v4073 = vld [vmem:[#allocation3 + $0x3f0] sm:$0xff]
      %v4074 = vld [vmem:[#allocation3 + $0x3f8] sm:$0xff]
      %v4075 = vld [vmem:[#allocation3 + $0x400] sm:$0xff]
      %v4076 = vld [vmem:[#allocation3 + $0x408] sm:$0xff]
      %v4077 = vld [vmem:[#allocation3 + $0x410] sm:$0xf]
      %v4078 = vld [vmem:[#allocation3 + $0x414] sm:$0xff]
      %v4079 = vld [vmem:[#allocation3 + $0x41c] sm:$0xff]
      %v4080 = vld [vmem:[#allocation3 + $0x424] sm:$0xff]
      %v4081 = vld [vmem:[#allocation3 + $0x42c] sm:$0xff]
      %v4082 = vld [vmem:[#allocation3 + $0x434] sm:$0xf]
      %v4083 = vld [vmem:[#allocation3 + $0x438] sm:$0xff]
      %v4084 = vld [vmem:[#allocation3 + $0x440] sm:$0xff]
      %v4085 = vld [vmem:[#allocation3 + $0x448] sm:$0xff]
      %v4086 = vld [vmem:[#allocation3 + $0x450] sm:$0xff]
      %v4087 = vld [vmem:[#allocation3 + $0x458] sm:$0xf]
      %v4088 = vld [vmem:[#allocation3 + $0x45c] sm:$0xff]
      %v4089 = vld [vmem:[#allocation3 + $0x464] sm:$0xff]
      %v4090 = vld [vmem:[#allocation3 + $0x46c] sm:$0xff]
      %v4091 = vld [vmem:[#allocation3 + $0x474] sm:$0xff]
      %v4092 = vld [vmem:[#allocation3 + $0x47c] sm:$0xf]
      %v4093 = vld [vmem:[%s3] sm:$0xf]
      %v4094 = vld [vmem:[%s3 + $0x4] sm:$0xf]
      %v4095 = vld [vmem:[%s3 + $0x8] sm:$0xf]
      %v4096 = vld [vmem:[%s3 + $0xc] sm:$0xf]
      %v4097 = vld [vmem:[%s3 + $0x10] sm:$0xf]
      %v4098 = vld [vmem:[%s3 + $0x14] sm:$0xf]
      %v4099 = vld [vmem:[%s3 + $0x18] sm:$0xf]
      %v4100 = vld [vmem:[%s3 + $0x1c] sm:$0xf]
      %v4101 = vld [vmem:[%s3 + $0x20] sm:$0xf]
      %v4102 = vld [vmem:[%s3 + $0x24] sm:$0xf]
      %v4103 = vld [vmem:[%s3 + $0x28] sm:$0xf]
      %v4104 = vld [vmem:[%s3 + $0x2c] sm:$0xf]
      %v4105 = vld [vmem:[%s3 + $0x30] sm:$0xf]
      %v4106 = vld [vmem:[%s3 + $0x34] sm:$0xf]
      %v4107 = vld [vmem:[%s3 + $0x38] sm:$0xf]
      %v4108 = vld [vmem:[%s3 + $0x3c] sm:$0xf]
      %v4109 = vld [vmem:[%s3 + $0x40] sm:$0xf]
      %v4110 = vld [vmem:[%s3 + $0x44] sm:$0xf]
      %v4111 = vld [vmem:[%s3 + $0x48] sm:$0xf]
      %v4112 = vld [vmem:[%s3 + $0x4c] sm:$0xf]
      %v4113 = vld [vmem:[%s3 + $0x50] sm:$0xf]
      %v4114 = vld [vmem:[%s3 + $0x54] sm:$0xf]
      %v4115 = vld [vmem:[%s3 + $0x58] sm:$0xf]
      %v4116 = vld [vmem:[%s3 + $0x5c] sm:$0xf]
      %v4117 = vld [vmem:[%s3 + $0x60] sm:$0xf]
      %v4118 = vld [vmem:[%s3 + $0x64] sm:$0xf]
      %v4119 = vld [vmem:[%s3 + $0x68] sm:$0xf]
      %v4120 = vld [vmem:[%s3 + $0x6c] sm:$0xf]
      %v4121 = vld [vmem:[%s3 + $0x70] sm:$0xf]
      %v4122 = vld [vmem:[%s3 + $0x74] sm:$0xf]
      %v4123 = vld [vmem:[%s3 + $0x78] sm:$0xf]
      %v4124 = vld [vmem:[%s3 + $0x7c] sm:$0xf]
      %v4125 = vld [vmem:[%s3 + $0x80] sm:$0xf]
      %v4126 = vld [vmem:[%s3 + $0x84] sm:$0xf]
      %v4127 = vld [vmem:[%s3 + $0x88] sm:$0xf]
      %v4128 = vld [vmem:[%s3 + $0x8c] sm:$0xf]
      %v4129 = vld [vmem:[%s3 + $0x90] sm:$0xf]
      %v4130 = vld [vmem:[%s3 + $0x94] sm:$0xf]
      %v4131 = vld [vmem:[%s3 + $0x98] sm:$0xf]
      %v4132 = vld [vmem:[%s3 + $0x9c] sm:$0xf]
      %v4133 = vld [vmem:[%s3 + $0xa0] sm:$0xf]
      %v4134 = vld [vmem:[%s3 + $0xa4] sm:$0xf]
      %v4135 = vld [vmem:[%s3 + $0xa8] sm:$0xf]
      %v4136 = vld [vmem:[%s3 + $0xac] sm:$0xf]
      %v4137 = vld [vmem:[%s3 + $0xb0] sm:$0xf]
      %v4138 = vld [vmem:[%s3 + $0xb4] sm:$0xf]
      %v4139 = vld [vmem:[%s3 + $0xb8] sm:$0xf]
      %v4140 = vld [vmem:[%s3 + $0xbc] sm:$0xf]
      %v4141 = vld [vmem:[%s3 + $0xc0] sm:$0xf]
      %v4142 = vld [vmem:[%s3 + $0xc4] sm:$0xf]
      %v4143 = vld [vmem:[%s3 + $0xc8] sm:$0xf]
      %v4144 = vld [vmem:[%s3 + $0xcc] sm:$0xf]
      %v4145 = vld [vmem:[%s3 + $0xd0] sm:$0xf]
      %v4146 = vld [vmem:[%s3 + $0xd4] sm:$0xf]
      %v4147 = vld [vmem:[%s3 + $0xd8] sm:$0xf]
      %v4148 = vld [vmem:[%s3 + $0xdc] sm:$0xf]
      %v4149 = vld [vmem:[%s3 + $0xe0] sm:$0xf]
      %v4150 = vld [vmem:[%s3 + $0xe4] sm:$0xf]
      %v4151 = vld [vmem:[%s3 + $0xe8] sm:$0xf]
      %v4152 = vld [vmem:[%s3 + $0xec] sm:$0xf]
      %v4153 = vld [vmem:[%s3 + $0xf0] sm:$0xf]
      %v4154 = vld [vmem:[%s3 + $0xf4] sm:$0xf]
      %v4155 = vld [vmem:[%s3 + $0xf8] sm:$0xf]
      %v4156 = vld [vmem:[%s3 + $0xfc] sm:$0xf]
      %v4157 = vld [vmem:[%s3 + $0x100] sm:$0xf]
      %v4158 = vld [vmem:[%s3 + $0x104] sm:$0xf]
      %v4159 = vld [vmem:[%s3 + $0x108] sm:$0xf]
      %v4160 = vld [vmem:[%s3 + $0x10c] sm:$0xf]
      %v4161 = vld [vmem:[%s3 + $0x110] sm:$0xf]
      %v4162 = vld [vmem:[%s3 + $0x114] sm:$0xf]
      %v4163 = vld [vmem:[%s3 + $0x118] sm:$0xf]
      %v4164 = vld [vmem:[%s3 + $0x11c] sm:$0xf]
      %v4165 = vld [vmem:[%s3 + $0x120] sm:$0xf]
      %v4166 = vld [vmem:[%s3 + $0x124] sm:$0xf]
      %v4167 = vld [vmem:[%s3 + $0x128] sm:$0xf]
      %v4168 = vld [vmem:[%s3 + $0x12c] sm:$0xf]
      %v4169 = vld [vmem:[%s3 + $0x130] sm:$0xf]
      %v4170 = vld [vmem:[%s3 + $0x134] sm:$0xf]
      %v4171 = vld [vmem:[%s3 + $0x138] sm:$0xf]
      %v4172 = vld [vmem:[%s3 + $0x13c] sm:$0xf]
      %v4173 = vld [vmem:[%s3 + $0x140] sm:$0xf]
      %v4174 = vld [vmem:[%s3 + $0x144] sm:$0xf]
      %v4175 = vld [vmem:[%s3 + $0x148] sm:$0xf]
      %v4176 = vld [vmem:[%s3 + $0x14c] sm:$0xf]
      %v4177 = vld [vmem:[%s3 + $0x150] sm:$0xf]
      %v4178 = vld [vmem:[%s3 + $0x154] sm:$0xf]
      %v4179 = vld [vmem:[%s3 + $0x158] sm:$0xf]
      %v4180 = vld [vmem:[%s3 + $0x15c] sm:$0xf]
      %v4181 = vld [vmem:[%s3 + $0x160] sm:$0xf]
      %v4182 = vld [vmem:[%s3 + $0x164] sm:$0xf]
      %v4183 = vld [vmem:[%s3 + $0x168] sm:$0xf]
      %v4184 = vld [vmem:[%s3 + $0x16c] sm:$0xf]
      %v4185 = vld [vmem:[%s3 + $0x170] sm:$0xf]
      %v4186 = vld [vmem:[%s3 + $0x174] sm:$0xf]
      %v4187 = vld [vmem:[%s3 + $0x178] sm:$0xf]
      %v4188 = vld [vmem:[%s3 + $0x17c] sm:$0xf]
      %v4189 = vld [vmem:[%s3 + $0x180] sm:$0xf]
      %v4190 = vld [vmem:[%s3 + $0x184] sm:$0xf]
      %v4191 = vld [vmem:[%s3 + $0x188] sm:$0xf]
      %v4192 = vld [vmem:[%s3 + $0x18c] sm:$0xf]
      %v4193 = vld [vmem:[%s3 + $0x190] sm:$0xf]
      %v4194 = vld [vmem:[%s3 + $0x194] sm:$0xf]
      %v4195 = vld [vmem:[%s3 + $0x198] sm:$0xf]
      %v4196 = vld [vmem:[%s3 + $0x19c] sm:$0xf]
      %v4197 = vld [vmem:[%s3 + $0x1a0] sm:$0xf]
      %v4198 = vld [vmem:[%s3 + $0x1a4] sm:$0xf]
      %v4199 = vld [vmem:[%s3 + $0x1a8] sm:$0xf]
      %v4200 = vld [vmem:[%s3 + $0x1ac] sm:$0xf]
      %v4201 = vld [vmem:[%s3 + $0x1b0] sm:$0xf]
      %v4202 = vld [vmem:[%s3 + $0x1b4] sm:$0xf]
      %v4203 = vld [vmem:[%s3 + $0x1b8] sm:$0xf]
      %v4204 = vld [vmem:[%s3 + $0x1bc] sm:$0xf]
      %v4205 = vld [vmem:[%s3 + $0x1c0] sm:$0xf]
      %v4206 = vld [vmem:[%s3 + $0x1c4] sm:$0xf]
      %v4207 = vld [vmem:[%s3 + $0x1c8] sm:$0xf]
      %v4208 = vld [vmem:[%s3 + $0x1cc] sm:$0xf]
      %v4209 = vld [vmem:[%s3 + $0x1d0] sm:$0xf]
      %v4210 = vld [vmem:[%s3 + $0x1d4] sm:$0xf]
      %v4211 = vld [vmem:[%s3 + $0x1d8] sm:$0xf]
      %v4212 = vld [vmem:[%s3 + $0x1dc] sm:$0xf]
      %v4213 = vld [vmem:[%s3 + $0x1e0] sm:$0xf]
      %v4214 = vld [vmem:[%s3 + $0x1e4] sm:$0xf]
      %v4215 = vld [vmem:[%s3 + $0x1e8] sm:$0xf]
      %v4216 = vld [vmem:[%s3 + $0x1ec] sm:$0xf]
      %v4217 = vld [vmem:[%s3 + $0x1f0] sm:$0xf]
      %v4218 = vld [vmem:[%s3 + $0x1f4] sm:$0xf]
      %v4219 = vld [vmem:[%s3 + $0x1f8] sm:$0xf]
      %v4220 = vld [vmem:[%s3 + $0x1fc] sm:$0xf]
      %v4221 = vld [vmem:[%s3 + $0x200] sm:$0xf]
      %v4222 = vld [vmem:[%s3 + $0x204] sm:$0xf]
      %v4223 = vld [vmem:[%s3 + $0x208] sm:$0xf]
      %v4224 = vld [vmem:[%s3 + $0x20c] sm:$0xf]
      %v4225 = vld [vmem:[%s3 + $0x210] sm:$0xf]
      %v4226 = vld [vmem:[%s3 + $0x214] sm:$0xf]
      %v4227 = vld [vmem:[%s3 + $0x218] sm:$0xf]
      %v4228 = vld [vmem:[%s3 + $0x21c] sm:$0xf]
      %v4229 = vld [vmem:[%s3 + $0x220] sm:$0xf]
      %v4230 = vld [vmem:[%s3 + $0x224] sm:$0xf]
      %v4231 = vld [vmem:[%s3 + $0x228] sm:$0xf]
      %v4232 = vld [vmem:[%s3 + $0x22c] sm:$0xf]
      %v4233 = vld [vmem:[%s3 + $0x230] sm:$0xf]
      %v4234 = vld [vmem:[%s3 + $0x234] sm:$0xf]
      %v4235 = vld [vmem:[%s3 + $0x238] sm:$0xf]
      %v4236 = vld [vmem:[%s3 + $0x23c] sm:$0xf]
      %v4237 = vld [vmem:[%s4] sm:$0x1]
      %v4239 = vlaneseq
      %v4240 = vshrl.u32 %v4239, 7
      %v4241 = vsub.s32 0, %v4240
      %v4242 = vrot.slane %v4237, %v4241
      %v4404 = vunpack.c.l.b16 %v3933
      %v4405 = vunpack.c.h.b16 %v3933
      %v4406 = vunpack.c.l.b16 %v3934
      %v4407 = vunpack.c.h.b16 %v3934
      %v4408 = vunpack.c.l.b16 %v3935
      %v4409 = vunpack.c.h.b16 %v3935
      %v4410 = vunpack.c.l.b16 %v3936
      %v4411 = vunpack.c.h.b16 %v3936
      %v4412 = vunpack.c.l.b16 %v3937
      %v4413 = vunpack.c.l.b16 %v3938
      %v4414 = vunpack.c.h.b16 %v3938
      %v4415 = vunpack.c.l.b16 %v3939
      %v4416 = vunpack.c.h.b16 %v3939
      %v4417 = vunpack.c.l.b16 %v3940
      %v4418 = vunpack.c.h.b16 %v3940
      %v4419 = vunpack.c.l.b16 %v3941
      %v4420 = vunpack.c.h.b16 %v3941
      %v4421 = vunpack.c.l.b16 %v3942
      %v4422 = vunpack.c.l.b16 %v3943
      %v4423 = vunpack.c.h.b16 %v3943
      %v4424 = vunpack.c.l.b16 %v3944
      %v4425 = vunpack.c.h.b16 %v3944
      %v4426 = vunpack.c.l.b16 %v3945
      %v4427 = vunpack.c.h.b16 %v3945
      %v4428 = vunpack.c.l.b16 %v3946
      %v4429 = vunpack.c.h.b16 %v3946
      %v4430 = vunpack.c.l.b16 %v3947
      %v4431 = vunpack.c.l.b16 %v3948
      %v4432 = vunpack.c.h.b16 %v3948
      %v4433 = vunpack.c.l.b16 %v3949
      %v4434 = vunpack.c.h.b16 %v3949
      %v4435 = vunpack.c.l.b16 %v3950
      %v4436 = vunpack.c.h.b16 %v3950
      %v4437 = vunpack.c.l.b16 %v3951
      %v4438 = vunpack.c.h.b16 %v3951
      %v4439 = vunpack.c.l.b16 %v3952
      %v4440 = vunpack.c.l.b16 %v3953
      %v4441 = vunpack.c.h.b16 %v3953
      %v4442 = vunpack.c.l.b16 %v3954
      %v4443 = vunpack.c.h.b16 %v3954
      %v4444 = vunpack.c.l.b16 %v3955
      %v4445 = vunpack.c.h.b16 %v3955
      %v4446 = vunpack.c.l.b16 %v3956
      %v4447 = vunpack.c.h.b16 %v3956
      %v4448 = vunpack.c.l.b16 %v3957
      %v4449 = vunpack.c.l.b16 %v3958
      %v4450 = vunpack.c.h.b16 %v3958
      %v4451 = vunpack.c.l.b16 %v3959
      %v4452 = vunpack.c.h.b16 %v3959
      %v4453 = vunpack.c.l.b16 %v3960
      %v4454 = vunpack.c.h.b16 %v3960
      %v4455 = vunpack.c.l.b16 %v3961
      %v4456 = vunpack.c.h.b16 %v3961
      %v4457 = vunpack.c.l.b16 %v3962
      %v4458 = vunpack.c.l.b16 %v3963
      %v4459 = vunpack.c.h.b16 %v3963
      %v4460 = vunpack.c.l.b16 %v3964
      %v4461 = vunpack.c.h.b16 %v3964
      %v4462 = vunpack.c.l.b16 %v3965
      %v4463 = vunpack.c.h.b16 %v3965
      %v4464 = vunpack.c.l.b16 %v3966
      %v4465 = vunpack.c.h.b16 %v3966
      %v4466 = vunpack.c.l.b16 %v3967
      %v4467 = vunpack.c.l.b16 %v3968
      %v4468 = vunpack.c.h.b16 %v3968
      %v4469 = vunpack.c.l.b16 %v3969
      %v4470 = vunpack.c.h.b16 %v3969
      %v4471 = vunpack.c.l.b16 %v3970
      %v4472 = vunpack.c.h.b16 %v3970
      %v4473 = vunpack.c.l.b16 %v3971
      %v4474 = vunpack.c.h.b16 %v3971
      %v4475 = vunpack.c.l.b16 %v3972
      %v4476 = vunpack.c.l.b16 %v3973
      %v4477 = vunpack.c.h.b16 %v3973
      %v4478 = vunpack.c.l.b16 %v3974
      %v4479 = vunpack.c.h.b16 %v3974
      %v4480 = vunpack.c.l.b16 %v3975
      %v4481 = vunpack.c.h.b16 %v3975
      %v4482 = vunpack.c.l.b16 %v3976
      %v4483 = vunpack.c.h.b16 %v3976
      %v4484 = vunpack.c.l.b16 %v3977
      %v4485 = vunpack.c.l.b16 %v3978
      %v4486 = vunpack.c.h.b16 %v3978
      %v4487 = vunpack.c.l.b16 %v3979
      %v4488 = vunpack.c.h.b16 %v3979
      %v4489 = vunpack.c.l.b16 %v3980
      %v4490 = vunpack.c.h.b16 %v3980
      %v4491 = vunpack.c.l.b16 %v3981
      %v4492 = vunpack.c.h.b16 %v3981
      %v4493 = vunpack.c.l.b16 %v3982
      %v4494 = vunpack.c.l.b16 %v3983
      %v4495 = vunpack.c.h.b16 %v3983
      %v4496 = vunpack.c.l.b16 %v3984
      %v4497 = vunpack.c.h.b16 %v3984
      %v4498 = vunpack.c.l.b16 %v3985
      %v4499 = vunpack.c.h.b16 %v3985
      %v4500 = vunpack.c.l.b16 %v3986
      %v4501 = vunpack.c.h.b16 %v3986
      %v4502 = vunpack.c.l.b16 %v3987
      %v4503 = vunpack.c.l.b16 %v3988
      %v4504 = vunpack.c.h.b16 %v3988
      %v4505 = vunpack.c.l.b16 %v3989
      %v4506 = vunpack.c.h.b16 %v3989
      %v4507 = vunpack.c.l.b16 %v3990
      %v4508 = vunpack.c.h.b16 %v3990
      %v4509 = vunpack.c.l.b16 %v3991
      %v4510 = vunpack.c.h.b16 %v3991
      %v4511 = vunpack.c.l.b16 %v3992
      %v4512 = vunpack.c.l.b16 %v3993
      %v4513 = vunpack.c.h.b16 %v3993
      %v4514 = vunpack.c.l.b16 %v3994
      %v4515 = vunpack.c.h.b16 %v3994
      %v4516 = vunpack.c.l.b16 %v3995
      %v4517 = vunpack.c.h.b16 %v3995
      %v4518 = vunpack.c.l.b16 %v3996
      %v4519 = vunpack.c.h.b16 %v3996
      %v4520 = vunpack.c.l.b16 %v3997
      %v4521 = vunpack.c.l.b16 %v3998
      %v4522 = vunpack.c.h.b16 %v3998
      %v4523 = vunpack.c.l.b16 %v3999
      %v4524 = vunpack.c.h.b16 %v3999
      %v4525 = vunpack.c.l.b16 %v4000
      %v4526 = vunpack.c.h.b16 %v4000
      %v4527 = vunpack.c.l.b16 %v4001
      %v4528 = vunpack.c.h.b16 %v4001
      %v4529 = vunpack.c.l.b16 %v4002
      %v4530 = vunpack.c.l.b16 %v4003
      %v4531 = vunpack.c.h.b16 %v4003
      %v4532 = vunpack.c.l.b16 %v4004
      %v4533 = vunpack.c.h.b16 %v4004
      %v4534 = vunpack.c.l.b16 %v4005
      %v4535 = vunpack.c.h.b16 %v4005
      %v4536 = vunpack.c.l.b16 %v4006
      %v4537 = vunpack.c.h.b16 %v4006
      %v4538 = vunpack.c.l.b16 %v4007
      %v4539 = vunpack.c.l.b16 %v4008
      %v4540 = vunpack.c.h.b16 %v4008
      %v4541 = vunpack.c.l.b16 %v4009
      %v4542 = vunpack.c.h.b16 %v4009
      %v4543 = vunpack.c.l.b16 %v4010
      %v4544 = vunpack.c.h.b16 %v4010
      %v4545 = vunpack.c.l.b16 %v4011
      %v4546 = vunpack.c.h.b16 %v4011
      %v4547 = vunpack.c.l.b16 %v4012
      %v4548 = vunpack.c.l.b16 %v4013
      %v4549 = vunpack.c.h.b16 %v4013
      %v4550 = vunpack.c.l.b16 %v4014
      %v4551 = vunpack.c.h.b16 %v4014
      %v4552 = vunpack.c.l.b16 %v4015
      %v4553 = vunpack.c.h.b16 %v4015
      %v4554 = vunpack.c.l.b16 %v4016
      %v4555 = vunpack.c.h.b16 %v4016
      %v4556 = vunpack.c.l.b16 %v4017
      %v4557 = vunpack.c.l.b16 %v4018
      %v4558 = vunpack.c.h.b16 %v4018
      %v4559 = vunpack.c.l.b16 %v4019
      %v4560 = vunpack.c.h.b16 %v4019
      %v4561 = vunpack.c.l.b16 %v4020
      %v4562 = vunpack.c.h.b16 %v4020
      %v4563 = vunpack.c.l.b16 %v4021
      %v4564 = vunpack.c.h.b16 %v4021
      %v4565 = vunpack.c.l.b16 %v4022
      %v4566 = vunpack.c.l.b16 %v4023
      %v4567 = vunpack.c.h.b16 %v4023
      %v4568 = vunpack.c.l.b16 %v4024
      %v4569 = vunpack.c.h.b16 %v4024
      %v4570 = vunpack.c.l.b16 %v4025
      %v4571 = vunpack.c.h.b16 %v4025
      %v4572 = vunpack.c.l.b16 %v4026
      %v4573 = vunpack.c.h.b16 %v4026
      %v4574 = vunpack.c.l.b16 %v4027
      %v4575 = vunpack.c.l.b16 %v4028
      %v4576 = vunpack.c.h.b16 %v4028
      %v4577 = vunpack.c.l.b16 %v4029
      %v4578 = vunpack.c.h.b16 %v4029
      %v4579 = vunpack.c.l.b16 %v4030
      %v4580 = vunpack.c.h.b16 %v4030
      %v4581 = vunpack.c.l.b16 %v4031
      %v4582 = vunpack.c.h.b16 %v4031
      %v4583 = vunpack.c.l.b16 %v4032
      %v4584 = vunpack.c.l.b16 %v4033
      %v4585 = vunpack.c.h.b16 %v4033
      %v4586 = vunpack.c.l.b16 %v4034
      %v4587 = vunpack.c.h.b16 %v4034
      %v4588 = vunpack.c.l.b16 %v4035
      %v4589 = vunpack.c.h.b16 %v4035
      %v4590 = vunpack.c.l.b16 %v4036
      %v4591 = vunpack.c.h.b16 %v4036
      %v4592 = vunpack.c.l.b16 %v4037
      %v4593 = vunpack.c.l.b16 %v4038
      %v4594 = vunpack.c.h.b16 %v4038
      %v4595 = vunpack.c.l.b16 %v4039
      %v4596 = vunpack.c.h.b16 %v4039
      %v4597 = vunpack.c.l.b16 %v4040
      %v4598 = vunpack.c.h.b16 %v4040
      %v4599 = vunpack.c.l.b16 %v4041
      %v4600 = vunpack.c.h.b16 %v4041
      %v4601 = vunpack.c.l.b16 %v4042
      %v4602 = vunpack.c.l.b16 %v4043
      %v4603 = vunpack.c.h.b16 %v4043
      %v4604 = vunpack.c.l.b16 %v4044
      %v4605 = vunpack.c.h.b16 %v4044
      %v4606 = vunpack.c.l.b16 %v4045
      %v4607 = vunpack.c.h.b16 %v4045
      %v4608 = vunpack.c.l.b16 %v4046
      %v4609 = vunpack.c.h.b16 %v4046
      %v4610 = vunpack.c.l.b16 %v4047
      %v4611 = vunpack.c.l.b16 %v4048
      %v4612 = vunpack.c.h.b16 %v4048
      %v4613 = vunpack.c.l.b16 %v4049
      %v4614 = vunpack.c.h.b16 %v4049
      %v4615 = vunpack.c.l.b16 %v4050
      %v4616 = vunpack.c.h.b16 %v4050
      %v4617 = vunpack.c.l.b16 %v4051
      %v4618 = vunpack.c.h.b16 %v4051
      %v4619 = vunpack.c.l.b16 %v4052
      %v4620 = vunpack.c.l.b16 %v4053
      %v4621 = vunpack.c.h.b16 %v4053
      %v4622 = vunpack.c.l.b16 %v4054
      %v4623 = vunpack.c.h.b16 %v4054
      %v4624 = vunpack.c.l.b16 %v4055
      %v4625 = vunpack.c.h.b16 %v4055
      %v4626 = vunpack.c.l.b16 %v4056
      %v4627 = vunpack.c.h.b16 %v4056
      %v4628 = vunpack.c.l.b16 %v4057
      %v4629 = vunpack.c.l.b16 %v4058
      %v4630 = vunpack.c.h.b16 %v4058
      %v4631 = vunpack.c.l.b16 %v4059
      %v4632 = vunpack.c.h.b16 %v4059
      %v4633 = vunpack.c.l.b16 %v4060
      %v4634 = vunpack.c.h.b16 %v4060
      %v4635 = vunpack.c.l.b16 %v4061
      %v4636 = vunpack.c.h.b16 %v4061
      %v4637 = vunpack.c.l.b16 %v4062
      %v4638 = vunpack.c.l.b16 %v4063
      %v4639 = vunpack.c.h.b16 %v4063
      %v4640 = vunpack.c.l.b16 %v4064
      %v4641 = vunpack.c.h.b16 %v4064
      %v4642 = vunpack.c.l.b16 %v4065
      %v4643 = vunpack.c.h.b16 %v4065
      %v4644 = vunpack.c.l.b16 %v4066
      %v4645 = vunpack.c.h.b16 %v4066
      %v4646 = vunpack.c.l.b16 %v4067
      %v4647 = vunpack.c.l.b16 %v4068
      %v4648 = vunpack.c.h.b16 %v4068
      %v4649 = vunpack.c.l.b16 %v4069
      %v4650 = vunpack.c.h.b16 %v4069
      %v4651 = vunpack.c.l.b16 %v4070
      %v4652 = vunpack.c.h.b16 %v4070
      %v4653 = vunpack.c.l.b16 %v4071
      %v4654 = vunpack.c.h.b16 %v4071
      %v4655 = vunpack.c.l.b16 %v4072
      %v4656 = vunpack.c.l.b16 %v4073
      %v4657 = vunpack.c.h.b16 %v4073
      %v4658 = vunpack.c.l.b16 %v4074
      %v4659 = vunpack.c.h.b16 %v4074
      %v4660 = vunpack.c.l.b16 %v4075
      %v4661 = vunpack.c.h.b16 %v4075
      %v4662 = vunpack.c.l.b16 %v4076
      %v4663 = vunpack.c.h.b16 %v4076
      %v4664 = vunpack.c.l.b16 %v4077
      %v4665 = vunpack.c.l.b16 %v4078
      %v4666 = vunpack.c.h.b16 %v4078
      %v4667 = vunpack.c.l.b16 %v4079
      %v4668 = vunpack.c.h.b16 %v4079
      %v4669 = vunpack.c.l.b16 %v4080
      %v4670 = vunpack.c.h.b16 %v4080
      %v4671 = vunpack.c.l.b16 %v4081
      %v4672 = vunpack.c.h.b16 %v4081
      %v4673 = vunpack.c.l.b16 %v4082
      %v4674 = vunpack.c.l.b16 %v4083
      %v4675 = vunpack.c.h.b16 %v4083
      %v4676 = vunpack.c.l.b16 %v4084
      %v4677 = vunpack.c.h.b16 %v4084
      %v4678 = vunpack.c.l.b16 %v4085
      %v4679 = vunpack.c.h.b16 %v4085
      %v4680 = vunpack.c.l.b16 %v4086
      %v4681 = vunpack.c.h.b16 %v4086
      %v4682 = vunpack.c.l.b16 %v4087
      %v4683 = vunpack.c.l.b16 %v4088
      %v4684 = vunpack.c.h.b16 %v4088
      %v4685 = vunpack.c.l.b16 %v4089
      %v4686 = vunpack.c.h.b16 %v4089
      %v4687 = vunpack.c.l.b16 %v4090
      %v4688 = vunpack.c.h.b16 %v4090
      %v4689 = vunpack.c.l.b16 %v4091
      %v4690 = vunpack.c.h.b16 %v4091
      %v4691 = vunpack.c.l.b16 %v4092
      %v4692 = vpack.c.b16 %v4413, %v4404
      %v4693 = vpack.c.b16 %v4414, %v4405
      %v4694 = vpack.c.b16 %v4415, %v4406
      %v4695 = vpack.c.b16 %v4416, %v4407
      %v4696 = vpack.c.b16 %v4417, %v4408
      %v4697 = vpack.c.b16 %v4418, %v4409
      %v4698 = vpack.c.b16 %v4419, %v4410
      %v4699 = vpack.c.b16 %v4420, %v4411
      %v4700 = vpack.c.b16 %v4421, %v4412
      %v4701 = vpack.c.b16 %v4431, %v4422
      %v4702 = vpack.c.b16 %v4432, %v4423
      %v4703 = vpack.c.b16 %v4433, %v4424
      %v4704 = vpack.c.b16 %v4434, %v4425
      %v4705 = vpack.c.b16 %v4435, %v4426
      %v4706 = vpack.c.b16 %v4436, %v4427
      %v4707 = vpack.c.b16 %v4437, %v4428
      %v4708 = vpack.c.b16 %v4438, %v4429
      %v4709 = vpack.c.b16 %v4439, %v4430
      %v4710 = vpack.c.b16 %v4449, %v4440
      %v4711 = vpack.c.b16 %v4450, %v4441
      %v4712 = vpack.c.b16 %v4451, %v4442
      %v4713 = vpack.c.b16 %v4452, %v4443
      %v4714 = vpack.c.b16 %v4453, %v4444
      %v4715 = vpack.c.b16 %v4454, %v4445
      %v4716 = vpack.c.b16 %v4455, %v4446
      %v4717 = vpack.c.b16 %v4456, %v4447
      %v4718 = vpack.c.b16 %v4457, %v4448
      %v4719 = vpack.c.b16 %v4467, %v4458
      %v4720 = vpack.c.b16 %v4468, %v4459
      %v4721 = vpack.c.b16 %v4469, %v4460
      %v4722 = vpack.c.b16 %v4470, %v4461
      %v4723 = vpack.c.b16 %v4471, %v4462
      %v4724 = vpack.c.b16 %v4472, %v4463
      %v4725 = vpack.c.b16 %v4473, %v4464
      %v4726 = vpack.c.b16 %v4474, %v4465
      %v4727 = vpack.c.b16 %v4475, %v4466
      %v4728 = vpack.c.b16 %v4485, %v4476
      %v4729 = vpack.c.b16 %v4486, %v4477
      %v4730 = vpack.c.b16 %v4487, %v4478
      %v4731 = vpack.c.b16 %v4488, %v4479
      %v4732 = vpack.c.b16 %v4489, %v4480
      %v4733 = vpack.c.b16 %v4490, %v4481
      %v4734 = vpack.c.b16 %v4491, %v4482
      %v4735 = vpack.c.b16 %v4492, %v4483
      %v4736 = vpack.c.b16 %v4493, %v4484
      %v4737 = vpack.c.b16 %v4503, %v4494
      %v4738 = vpack.c.b16 %v4504, %v4495
      %v4739 = vpack.c.b16 %v4505, %v4496
      %v4740 = vpack.c.b16 %v4506, %v4497
      %v4741 = vpack.c.b16 %v4507, %v4498
      %v4742 = vpack.c.b16 %v4508, %v4499
      %v4743 = vpack.c.b16 %v4509, %v4500
      %v4744 = vpack.c.b16 %v4510, %v4501
      %v4745 = vpack.c.b16 %v4511, %v4502
      %v4746 = vpack.c.b16 %v4521, %v4512
      %v4747 = vpack.c.b16 %v4522, %v4513
      %v4748 = vpack.c.b16 %v4523, %v4514
      %v4749 = vpack.c.b16 %v4524, %v4515
      %v4750 = vpack.c.b16 %v4525, %v4516
      %v4751 = vpack.c.b16 %v4526, %v4517
      %v4752 = vpack.c.b16 %v4527, %v4518
      %v4753 = vpack.c.b16 %v4528, %v4519
      %v4754 = vpack.c.b16 %v4529, %v4520
      %v4755 = vpack.c.b16 %v4539, %v4530
      %v4756 = vpack.c.b16 %v4540, %v4531
      %v4757 = vpack.c.b16 %v4541, %v4532
      %v4758 = vpack.c.b16 %v4542, %v4533
      %v4759 = vpack.c.b16 %v4543, %v4534
      %v4760 = vpack.c.b16 %v4544, %v4535
      %v4761 = vpack.c.b16 %v4545, %v4536
      %v4762 = vpack.c.b16 %v4546, %v4537
      %v4763 = vpack.c.b16 %v4547, %v4538
      %v4764 = vpack.c.b16 %v4557, %v4548
      %v4765 = vpack.c.b16 %v4558, %v4549
      %v4766 = vpack.c.b16 %v4559, %v4550
      %v4767 = vpack.c.b16 %v4560, %v4551
      %v4768 = vpack.c.b16 %v4561, %v4552
      %v4769 = vpack.c.b16 %v4562, %v4553
      %v4770 = vpack.c.b16 %v4563, %v4554
      %v4771 = vpack.c.b16 %v4564, %v4555
      %v4772 = vpack.c.b16 %v4565, %v4556
      %v4773 = vpack.c.b16 %v4575, %v4566
      %v4774 = vpack.c.b16 %v4576, %v4567
      %v4775 = vpack.c.b16 %v4577, %v4568
      %v4776 = vpack.c.b16 %v4578, %v4569
      %v4777 = vpack.c.b16 %v4579, %v4570
      %v4778 = vpack.c.b16 %v4580, %v4571
      %v4779 = vpack.c.b16 %v4581, %v4572
      %v4780 = vpack.c.b16 %v4582, %v4573
      %v4781 = vpack.c.b16 %v4583, %v4574
      %v4782 = vpack.c.b16 %v4593, %v4584
      %v4783 = vpack.c.b16 %v4594, %v4585
      %v4784 = vpack.c.b16 %v4595, %v4586
      %v4785 = vpack.c.b16 %v4596, %v4587
      %v4786 = vpack.c.b16 %v4597, %v4588
      %v4787 = vpack.c.b16 %v4598, %v4589
      %v4788 = vpack.c.b16 %v4599, %v4590
      %v4789 = vpack.c.b16 %v4600, %v4591
      %v4790 = vpack.c.b16 %v4601, %v4592
      %v4791 = vpack.c.b16 %v4611, %v4602
      %v4792 = vpack.c.b16 %v4612, %v4603
      %v4793 = vpack.c.b16 %v4613, %v4604
      %v4794 = vpack.c.b16 %v4614, %v4605
      %v4795 = vpack.c.b16 %v4615, %v4606
      %v4796 = vpack.c.b16 %v4616, %v4607
      %v4797 = vpack.c.b16 %v4617, %v4608
      %v4798 = vpack.c.b16 %v4618, %v4609
      %v4799 = vpack.c.b16 %v4619, %v4610
      %v4800 = vpack.c.b16 %v4629, %v4620
      %v4801 = vpack.c.b16 %v4630, %v4621
      %v4802 = vpack.c.b16 %v4631, %v4622
      %v4803 = vpack.c.b16 %v4632, %v4623
      %v4804 = vpack.c.b16 %v4633, %v4624
      %v4805 = vpack.c.b16 %v4634, %v4625
      %v4806 = vpack.c.b16 %v4635, %v4626
      %v4807 = vpack.c.b16 %v4636, %v4627
      %v4808 = vpack.c.b16 %v4637, %v4628
      %v4809 = vpack.c.b16 %v4647, %v4638
      %v4810 = vpack.c.b16 %v4648, %v4639
      %v4811 = vpack.c.b16 %v4649, %v4640
      %v4812 = vpack.c.b16 %v4650, %v4641
      %v4813 = vpack.c.b16 %v4651, %v4642
      %v4814 = vpack.c.b16 %v4652, %v4643
      %v4815 = vpack.c.b16 %v4653, %v4644
      %v4816 = vpack.c.b16 %v4654, %v4645
      %v4817 = vpack.c.b16 %v4655, %v4646
      %v4818 = vpack.c.b16 %v4665, %v4656
      %v4819 = vpack.c.b16 %v4666, %v4657
      %v4820 = vpack.c.b16 %v4667, %v4658
      %v4821 = vpack.c.b16 %v4668, %v4659
      %v4822 = vpack.c.b16 %v4669, %v4660
      %v4823 = vpack.c.b16 %v4670, %v4661
      %v4824 = vpack.c.b16 %v4671, %v4662
      %v4825 = vpack.c.b16 %v4672, %v4663
      %v4826 = vpack.c.b16 %v4673, %v4664
      %v4827 = vpack.c.b16 %v4683, %v4674
      %v4828 = vpack.c.b16 %v4684, %v4675
      %v4829 = vpack.c.b16 %v4685, %v4676
      %v4830 = vpack.c.b16 %v4686, %v4677
      %v4831 = vpack.c.b16 %v4687, %v4678
      %v4832 = vpack.c.b16 %v4688, %v4679
      %v4833 = vpack.c.b16 %v4689, %v4680
      %v4834 = vpack.c.b16 %v4690, %v4681
      %v4835 = vpack.c.b16 %v4691, %v4682
      %v5124 = vunpack.c.l.b16 %v4093
      %v5125 = vunpack.c.l.b16 %v4094
      %v5126 = vunpack.c.l.b16 %v4095
      %v5127 = vunpack.c.l.b16 %v4096
      %v5128 = vunpack.c.l.b16 %v4097
      %v5129 = vunpack.c.l.b16 %v4098
      %v5130 = vunpack.c.l.b16 %v4099
      %v5131 = vunpack.c.l.b16 %v4100
      %v5132 = vunpack.c.l.b16 %v4101
      %v5133 = vunpack.c.l.b16 %v4102
      %v5134 = vunpack.c.l.b16 %v4103
      %v5135 = vunpack.c.l.b16 %v4104
      %v5136 = vunpack.c.l.b16 %v4105
      %v5137 = vunpack.c.l.b16 %v4106
      %v5138 = vunpack.c.l.b16 %v4107
      %v5139 = vunpack.c.l.b16 %v4108
      %v5140 = vunpack.c.l.b16 %v4109
      %v5141 = vunpack.c.l.b16 %v4110
      %v5142 = vunpack.c.l.b16 %v4111
      %v5143 = vunpack.c.l.b16 %v4112
      %v5144 = vunpack.c.l.b16 %v4113
      %v5145 = vunpack.c.l.b16 %v4114
      %v5146 = vunpack.c.l.b16 %v4115
      %v5147 = vunpack.c.l.b16 %v4116
      %v5148 = vunpack.c.l.b16 %v4117
      %v5149 = vunpack.c.l.b16 %v4118
      %v5150 = vunpack.c.l.b16 %v4119
      %v5151 = vunpack.c.l.b16 %v4120
      %v5152 = vunpack.c.l.b16 %v4121
      %v5153 = vunpack.c.l.b16 %v4122
      %v5154 = vunpack.c.l.b16 %v4123
      %v5155 = vunpack.c.l.b16 %v4124
      %v5156 = vunpack.c.l.b16 %v4125
      %v5157 = vunpack.c.l.b16 %v4126
      %v5158 = vunpack.c.l.b16 %v4127
      %v5159 = vunpack.c.l.b16 %v4128
      %v5160 = vunpack.c.l.b16 %v4129
      %v5161 = vunpack.c.l.b16 %v4130
      %v5162 = vunpack.c.l.b16 %v4131
      %v5163 = vunpack.c.l.b16 %v4132
      %v5164 = vunpack.c.l.b16 %v4133
      %v5165 = vunpack.c.l.b16 %v4134
      %v5166 = vunpack.c.l.b16 %v4135
      %v5167 = vunpack.c.l.b16 %v4136
      %v5168 = vunpack.c.l.b16 %v4137
      %v5169 = vunpack.c.l.b16 %v4138
      %v5170 = vunpack.c.l.b16 %v4139
      %v5171 = vunpack.c.l.b16 %v4140
      %v5172 = vunpack.c.l.b16 %v4141
      %v5173 = vunpack.c.l.b16 %v4142
      %v5174 = vunpack.c.l.b16 %v4143
      %v5175 = vunpack.c.l.b16 %v4144
      %v5176 = vunpack.c.l.b16 %v4145
      %v5177 = vunpack.c.l.b16 %v4146
      %v5178 = vunpack.c.l.b16 %v4147
      %v5179 = vunpack.c.l.b16 %v4148
      %v5180 = vunpack.c.l.b16 %v4149
      %v5181 = vunpack.c.l.b16 %v4150
      %v5182 = vunpack.c.l.b16 %v4151
      %v5183 = vunpack.c.l.b16 %v4152
      %v5184 = vunpack.c.l.b16 %v4153
      %v5185 = vunpack.c.l.b16 %v4154
      %v5186 = vunpack.c.l.b16 %v4155
      %v5187 = vunpack.c.l.b16 %v4156
      %v5188 = vunpack.c.l.b16 %v4157
      %v5189 = vunpack.c.l.b16 %v4158
      %v5190 = vunpack.c.l.b16 %v4159
      %v5191 = vunpack.c.l.b16 %v4160
      %v5192 = vunpack.c.l.b16 %v4161
      %v5193 = vunpack.c.l.b16 %v4162
      %v5194 = vunpack.c.l.b16 %v4163
      %v5195 = vunpack.c.l.b16 %v4164
      %v5196 = vunpack.c.l.b16 %v4165
      %v5197 = vunpack.c.l.b16 %v4166
      %v5198 = vunpack.c.l.b16 %v4167
      %v5199 = vunpack.c.l.b16 %v4168
      %v5200 = vunpack.c.l.b16 %v4169
      %v5201 = vunpack.c.l.b16 %v4170
      %v5202 = vunpack.c.l.b16 %v4171
      %v5203 = vunpack.c.l.b16 %v4172
      %v5204 = vunpack.c.l.b16 %v4173
      %v5205 = vunpack.c.l.b16 %v4174
      %v5206 = vunpack.c.l.b16 %v4175
      %v5207 = vunpack.c.l.b16 %v4176
      %v5208 = vunpack.c.l.b16 %v4177
      %v5209 = vunpack.c.l.b16 %v4178
      %v5210 = vunpack.c.l.b16 %v4179
      %v5211 = vunpack.c.l.b16 %v4180
      %v5212 = vunpack.c.l.b16 %v4181
      %v5213 = vunpack.c.l.b16 %v4182
      %v5214 = vunpack.c.l.b16 %v4183
      %v5215 = vunpack.c.l.b16 %v4184
      %v5216 = vunpack.c.l.b16 %v4185
      %v5217 = vunpack.c.l.b16 %v4186
      %v5218 = vunpack.c.l.b16 %v4187
      %v5219 = vunpack.c.l.b16 %v4188
      %v5220 = vunpack.c.l.b16 %v4189
      %v5221 = vunpack.c.l.b16 %v4190
      %v5222 = vunpack.c.l.b16 %v4191
      %v5223 = vunpack.c.l.b16 %v4192
      %v5224 = vunpack.c.l.b16 %v4193
      %v5225 = vunpack.c.l.b16 %v4194
      %v5226 = vunpack.c.l.b16 %v4195
      %v5227 = vunpack.c.l.b16 %v4196
      %v5228 = vunpack.c.l.b16 %v4197
      %v5229 = vunpack.c.l.b16 %v4198
      %v5230 = vunpack.c.l.b16 %v4199
      %v5231 = vunpack.c.l.b16 %v4200
      %v5232 = vunpack.c.l.b16 %v4201
      %v5233 = vunpack.c.l.b16 %v4202
      %v5234 = vunpack.c.l.b16 %v4203
      %v5235 = vunpack.c.l.b16 %v4204
      %v5236 = vunpack.c.l.b16 %v4205
      %v5237 = vunpack.c.l.b16 %v4206
      %v5238 = vunpack.c.l.b16 %v4207
      %v5239 = vunpack.c.l.b16 %v4208
      %v5240 = vunpack.c.l.b16 %v4209
      %v5241 = vunpack.c.l.b16 %v4210
      %v5242 = vunpack.c.l.b16 %v4211
      %v5243 = vunpack.c.l.b16 %v4212
      %v5244 = vunpack.c.l.b16 %v4213
      %v5245 = vunpack.c.l.b16 %v4214
      %v5246 = vunpack.c.l.b16 %v4215
      %v5247 = vunpack.c.l.b16 %v4216
      %v5248 = vunpack.c.l.b16 %v4217
      %v5249 = vunpack.c.l.b16 %v4218
      %v5250 = vunpack.c.l.b16 %v4219
      %v5251 = vunpack.c.l.b16 %v4220
      %v5252 = vunpack.c.l.b16 %v4221
      %v5253 = vunpack.c.l.b16 %v4222
      %v5254 = vunpack.c.l.b16 %v4223
      %v5255 = vunpack.c.l.b16 %v4224
      %v5256 = vunpack.c.l.b16 %v4225
      %v5257 = vunpack.c.l.b16 %v4226
      %v5258 = vunpack.c.l.b16 %v4227
      %v5259 = vunpack.c.l.b16 %v4228
      %v5260 = vunpack.c.l.b16 %v4229
      %v5261 = vunpack.c.l.b16 %v4230
      %v5262 = vunpack.c.l.b16 %v4231
      %v5263 = vunpack.c.l.b16 %v4232
      %v5264 = vunpack.c.l.b16 %v4233
      %v5265 = vunpack.c.l.b16 %v4234
      %v5266 = vunpack.c.l.b16 %v4235
      %v5267 = vunpack.c.l.b16 %v4236
      %v5268 = vpack.c.b16 %v5125, %v5124
      %v5269 = vpack.c.b16 %v5127, %v5126
      %v5270 = vpack.c.b16 %v5129, %v5128
      %v5271 = vpack.c.b16 %v5131, %v5130
      %v5272 = vpack.c.b16 %v5133, %v5132
      %v5273 = vpack.c.b16 %v5135, %v5134
      %v5274 = vpack.c.b16 %v5137, %v5136
      %v5275 = vpack.c.b16 %v5139, %v5138
      %v5276 = vpack.c.b16 %v5141, %v5140
      %v5277 = vpack.c.b16 %v5143, %v5142
      %v5278 = vpack.c.b16 %v5145, %v5144
      %v5279 = vpack.c.b16 %v5147, %v5146
      %v5280 = vpack.c.b16 %v5149, %v5148
      %v5281 = vpack.c.b16 %v5151, %v5150
      %v5282 = vpack.c.b16 %v5153, %v5152
      %v5283 = vpack.c.b16 %v5155, %v5154
      %v5284 = vpack.c.b16 %v5157, %v5156
      %v5285 = vpack.c.b16 %v5159, %v5158
      %v5286 = vpack.c.b16 %v5161, %v5160
      %v5287 = vpack.c.b16 %v5163, %v5162
      %v5288 = vpack.c.b16 %v5165, %v5164
      %v5289 = vpack.c.b16 %v5167, %v5166
      %v5290 = vpack.c.b16 %v5169, %v5168
      %v5291 = vpack.c.b16 %v5171, %v5170
      %v5292 = vpack.c.b16 %v5173, %v5172
      %v5293 = vpack.c.b16 %v5175, %v5174
      %v5294 = vpack.c.b16 %v5177, %v5176
      %v5295 = vpack.c.b16 %v5179, %v5178
      %v5296 = vpack.c.b16 %v5181, %v5180
      %v5297 = vpack.c.b16 %v5183, %v5182
      %v5298 = vpack.c.b16 %v5185, %v5184
      %v5299 = vpack.c.b16 %v5187, %v5186
      %v5300 = vpack.c.b16 %v5189, %v5188
      %v5301 = vpack.c.b16 %v5191, %v5190
      %v5302 = vpack.c.b16 %v5193, %v5192
      %v5303 = vpack.c.b16 %v5195, %v5194
      %v5304 = vpack.c.b16 %v5197, %v5196
      %v5305 = vpack.c.b16 %v5199, %v5198
      %v5306 = vpack.c.b16 %v5201, %v5200
      %v5307 = vpack.c.b16 %v5203, %v5202
      %v5308 = vpack.c.b16 %v5205, %v5204
      %v5309 = vpack.c.b16 %v5207, %v5206
      %v5310 = vpack.c.b16 %v5209, %v5208
      %v5311 = vpack.c.b16 %v5211, %v5210
      %v5312 = vpack.c.b16 %v5213, %v5212
      %v5313 = vpack.c.b16 %v5215, %v5214
      %v5314 = vpack.c.b16 %v5217, %v5216
      %v5315 = vpack.c.b16 %v5219, %v5218
      %v5316 = vpack.c.b16 %v5221, %v5220
      %v5317 = vpack.c.b16 %v5223, %v5222
      %v5318 = vpack.c.b16 %v5225, %v5224
      %v5319 = vpack.c.b16 %v5227, %v5226
      %v5320 = vpack.c.b16 %v5229, %v5228
      %v5321 = vpack.c.b16 %v5231, %v5230
      %v5322 = vpack.c.b16 %v5233, %v5232
      %v5323 = vpack.c.b16 %v5235, %v5234
      %v5324 = vpack.c.b16 %v5237, %v5236
      %v5325 = vpack.c.b16 %v5239, %v5238
      %v5326 = vpack.c.b16 %v5241, %v5240
      %v5327 = vpack.c.b16 %v5243, %v5242
      %v5328 = vpack.c.b16 %v5245, %v5244
      %v5329 = vpack.c.b16 %v5247, %v5246
      %v5330 = vpack.c.b16 %v5249, %v5248
      %v5331 = vpack.c.b16 %v5251, %v5250
      %v5332 = vpack.c.b16 %v5253, %v5252
      %v5333 = vpack.c.b16 %v5255, %v5254
      %v5334 = vpack.c.b16 %v5257, %v5256
      %v5335 = vpack.c.b16 %v5259, %v5258
      %v5336 = vpack.c.b16 %v5261, %v5260
      %v5337 = vpack.c.b16 %v5263, %v5262
      %v5338 = vpack.c.b16 %v5265, %v5264
      %v5339 = vpack.c.b16 %v5267, %v5266
      %5412 = vmatprep.subr.bf16.mxu0 0
      %5413 = vmatpush1.bf16.msra.mxu0 %v5275
      %5414 = vmatprep.subr.bf16.mxu0 0
      %5415 = vmatpush1.bf16.msra.mxu0 %v5274
      %5416 = vmatprep.subr.bf16.mxu0 0
      %5417 = vmatpush1.bf16.msra.mxu0 %v5273
      %5418 = vmatprep.subr.bf16.mxu0 0
      %5419 = vmatpush1.bf16.msra.mxu0 %v5272
      %5420 = vmatprep.subr.bf16.mxu0 0
      %5421 = vmatpush1.bf16.msra.mxu0 %v5271
      %5422 = vmatprep.subr.bf16.mxu0 0
      %5423 = vmatpush1.bf16.msra.mxu0 %v5270
      %5424 = vmatprep.subr.bf16.mxu0 0
      %5425 = vmatpush1.bf16.msra.mxu0 %v5269
      %5426 = vmatprep.subr.bf16.mxu0 0
      %5427 = vmatpush1.bf16.msra.mxu0 %v5268
      %5428 = vmatprep.subr.bf16.mxu0 0
      %5429 = vmatpush2.bf16.msra.mxu0 %v5283
      %5430 = vmatprep.subr.bf16.mxu0 0
      %5431 = vmatpush2.bf16.msra.mxu0 %v5282
      %5432 = vmatprep.subr.bf16.mxu0 0
      %5433 = vmatpush2.bf16.msra.mxu0 %v5281
      %5434 = vmatprep.subr.bf16.mxu0 0
      %5435 = vmatpush2.bf16.msra.mxu0 %v5280
      %5436 = vmatprep.subr.bf16.mxu0 0
      %5437 = vmatpush2.bf16.msra.mxu0 %v5279
      %5438 = vmatprep.subr.bf16.mxu0 0
      %5439 = vmatpush2.bf16.msra.mxu0 %v5278
      %5440 = vmatprep.subr.bf16.mxu0 0
      %5441 = vmatpush2.bf16.msra.mxu0 %v5277
      %5442 = vmatprep.subr.bf16.mxu0 0
      %5443 = vmatpush2.bf16.msra.mxu0 %v5276
      %5444 = vmatprep.mubr.bf16.mxu0 %v4693
      %5445 = vmatmul.mubr.bf16.gmra.mxu0 %v4692
      %v5446 = vpop.f32.mrf.mxu0
      %v5447 = vadd.f32 %v4242, %v5446
      %v5448 = vpop.f32.mrf.mxu0
      %v5449 = vpop.f32.mrf.mxu0
      %v5450 = vadd.f32 %v4242, %v5449
      %v5451 = vpop.f32.mrf.mxu0
      %5452 = vmatprep.mubr.bf16.mxu0 %v4702
      %5453 = vmatmul.mubr.bf16.gmra.mxu0 %v4701
      %v5454 = vpop.f32.mrf.mxu0
      %v5455 = vadd.f32 %v4242, %v5454
      %v5456 = vpop.f32.mrf.mxu0
      %v5457 = vpop.f32.mrf.mxu0
      %v5458 = vadd.f32 %v4242, %v5457
      %v5459 = vpop.f32.mrf.mxu0
      %5460 = vmatprep.mubr.bf16.mxu0 %v4711
      %5461 = vmatmul.mubr.bf16.gmra.mxu0 %v4710
      %v5462 = vpop.f32.mrf.mxu0
      %v5463 = vadd.f32 %v4242, %v5462
      %v5464 = vpop.f32.mrf.mxu0
      %v5465 = vpop.f32.mrf.mxu0
      %v5466 = vadd.f32 %v4242, %v5465
      %v5467 = vpop.f32.mrf.mxu0
      %5468 = vmatprep.mubr.bf16.mxu0 %v4720
      %5469 = vmatmul.mubr.bf16.gmra.mxu0 %v4719
      %v5470 = vpop.f32.mrf.mxu0
      %v5471 = vadd.f32 %v4242, %v5470
      %v5472 = vpop.f32.mrf.mxu0
      %v5473 = vpop.f32.mrf.mxu0
      %v5474 = vadd.f32 %v4242, %v5473
      %v5475 = vpop.f32.mrf.mxu0
      %5476 = vmatprep.mubr.bf16.mxu0 %v4729
      %5477 = vmatmul.mubr.bf16.gmra.mxu0 %v4728
      %v5478 = vpop.f32.mrf.mxu0
      %v5479 = vadd.f32 %v4242, %v5478
      %v5480 = vpop.f32.mrf.mxu0
      %v5481 = vpop.f32.mrf.mxu0
      %v5482 = vadd.f32 %v4242, %v5481
      %v5483 = vpop.f32.mrf.mxu0
      %5484 = vmatprep.mubr.bf16.mxu0 %v4738
      %5485 = vmatmul.mubr.bf16.gmra.mxu0 %v4737
      %v5486 = vpop.f32.mrf.mxu0
      %v5487 = vadd.f32 %v4242, %v5486
      %v5488 = vpop.f32.mrf.mxu0
      %v5489 = vpop.f32.mrf.mxu0
      %v5490 = vadd.f32 %v4242, %v5489
      %v5491 = vpop.f32.mrf.mxu0
      %5492 = vmatprep.mubr.bf16.mxu0 %v4747
      %5493 = vmatmul.mubr.bf16.gmra.mxu0 %v4746
      %v5494 = vpop.f32.mrf.mxu0
      %v5495 = vadd.f32 %v4242, %v5494
      %v5496 = vpop.f32.mrf.mxu0
      %v5497 = vpop.f32.mrf.mxu0
      %v5498 = vadd.f32 %v4242, %v5497
      %v5499 = vpop.f32.mrf.mxu0
      %5500 = vmatprep.mubr.bf16.mxu0 %v4756
      %5501 = vmatmul.mubr.bf16.gmra.mxu0 %v4755
      %v5502 = vpop.f32.mrf.mxu0
      %v5503 = vadd.f32 %v4242, %v5502
      %v5504 = vpop.f32.mrf.mxu0
      %v5505 = vpop.f32.mrf.mxu0
      %v5506 = vadd.f32 %v4242, %v5505
      %v5507 = vpop.f32.mrf.mxu0
      %5508 = vmatprep.mubr.bf16.mxu0 %v4765
      %5509 = vmatmul.mubr.bf16.gmra.mxu0 %v4764
      %v5510 = vpop.f32.mrf.mxu0
      %v5511 = vadd.f32 %v4242, %v5510
      %v5512 = vpop.f32.mrf.mxu0
      %v5513 = vpop.f32.mrf.mxu0
      %v5514 = vadd.f32 %v4242, %v5513
      %v5515 = vpop.f32.mrf.mxu0
      %5516 = vmatprep.mubr.bf16.mxu0 %v4774
      %5517 = vmatmul.mubr.bf16.gmra.mxu0 %v4773
      %v5518 = vpop.f32.mrf.mxu0
      %v5519 = vadd.f32 %v4242, %v5518
      %v5520 = vpop.f32.mrf.mxu0
      %v5521 = vpop.f32.mrf.mxu0
      %v5522 = vadd.f32 %v4242, %v5521
      %v5523 = vpop.f32.mrf.mxu0
      %5524 = vmatprep.mubr.bf16.mxu0 %v4783
      %5525 = vmatmul.mubr.bf16.gmra.mxu0 %v4782
      %v5526 = vpop.f32.mrf.mxu0
      %v5527 = vadd.f32 %v4242, %v5526
      %v5528 = vpop.f32.mrf.mxu0
      %v5529 = vpop.f32.mrf.mxu0
      %v5530 = vadd.f32 %v4242, %v5529
      %v5531 = vpop.f32.mrf.mxu0
      %5532 = vmatprep.mubr.bf16.mxu0 %v4792
      %5533 = vmatmul.mubr.bf16.gmra.mxu0 %v4791
      %v5534 = vpop.f32.mrf.mxu0
      %v5535 = vadd.f32 %v4242, %v5534
      %v5536 = vpop.f32.mrf.mxu0
      %v5537 = vpop.f32.mrf.mxu0
      %v5538 = vadd.f32 %v4242, %v5537
      %v5539 = vpop.f32.mrf.mxu0
      %5540 = vmatprep.mubr.bf16.mxu0 %v4801
      %5541 = vmatmul.mubr.bf16.gmra.mxu0 %v4800
      %v5542 = vpop.f32.mrf.mxu0
      %v5543 = vadd.f32 %v4242, %v5542
      %v5544 = vpop.f32.mrf.mxu0
      %v5545 = vpop.f32.mrf.mxu0
      %v5546 = vadd.f32 %v4242, %v5545
      %v5547 = vpop.f32.mrf.mxu0
      %5548 = vmatprep.mubr.bf16.mxu0 %v4810
      %5549 = vmatmul.mubr.bf16.gmra.mxu0 %v4809
      %v5550 = vpop.f32.mrf.mxu0
      %v5551 = vadd.f32 %v4242, %v5550
      %v5552 = vpop.f32.mrf.mxu0
      %v5553 = vpop.f32.mrf.mxu0
      %v5554 = vadd.f32 %v4242, %v5553
      %v5555 = vpop.f32.mrf.mxu0
      %5556 = vmatprep.mubr.bf16.mxu0 %v4819
      %5557 = vmatmul.mubr.bf16.gmra.mxu0 %v4818
      %v5558 = vpop.f32.mrf.mxu0
      %v5559 = vadd.f32 %v4242, %v5558
      %v5560 = vpop.f32.mrf.mxu0
      %v5561 = vpop.f32.mrf.mxu0
      %v5562 = vadd.f32 %v4242, %v5561
      %v5563 = vpop.f32.mrf.mxu0
      %5564 = vmatprep.mubr.bf16.mxu0 %v4828
      %5565 = vmatmul.mubr.bf16.gmra.mxu0 %v4827
      %v5566 = vpop.f32.mrf.mxu0
      %v5567 = vadd.f32 %v4242, %v5566
      %v5568 = vpop.f32.mrf.mxu0
      %v5569 = vpop.f32.mrf.mxu0
      %v5570 = vadd.f32 %v4242, %v5569
      %v5571 = vpop.f32.mrf.mxu0
      %5572 = vdwg.mxu0
      %5573 = vmatprep.subr.bf16.mxu0 0
      %5574 = vmatpush1.bf16.msra.mxu0 %v5291
      %5575 = vmatprep.subr.bf16.mxu0 0
      %5576 = vmatpush1.bf16.msra.mxu0 %v5290
      %5577 = vmatprep.subr.bf16.mxu0 0
      %5578 = vmatpush1.bf16.msra.mxu0 %v5289
      %5579 = vmatprep.subr.bf16.mxu0 0
      %5580 = vmatpush1.bf16.msra.mxu0 %v5288
      %5581 = vmatprep.subr.bf16.mxu0 0
      %5582 = vmatpush1.bf16.msra.mxu0 %v5287
      %5583 = vmatprep.subr.bf16.mxu0 0
      %5584 = vmatpush1.bf16.msra.mxu0 %v5286
      %5585 = vmatprep.subr.bf16.mxu0 0
      %5586 = vmatpush1.bf16.msra.mxu0 %v5285
      %5587 = vmatprep.subr.bf16.mxu0 0
      %5588 = vmatpush1.bf16.msra.mxu0 %v5284
      %5589 = vmatprep.subr.bf16.mxu0 0
      %5590 = vmatpush2.bf16.msra.mxu0 %v5299
      %5591 = vmatprep.subr.bf16.mxu0 0
      %5592 = vmatpush2.bf16.msra.mxu0 %v5298
      %5593 = vmatprep.subr.bf16.mxu0 0
      %5594 = vmatpush2.bf16.msra.mxu0 %v5297
      %5595 = vmatprep.subr.bf16.mxu0 0
      %5596 = vmatpush2.bf16.msra.mxu0 %v5296
      %5597 = vmatprep.subr.bf16.mxu0 0
      %5598 = vmatpush2.bf16.msra.mxu0 %v5295
      %5599 = vmatprep.subr.bf16.mxu0 0
      %5600 = vmatpush2.bf16.msra.mxu0 %v5294
      %5601 = vmatprep.subr.bf16.mxu0 0
      %5602 = vmatpush2.bf16.msra.mxu0 %v5293
      %5603 = vmatprep.subr.bf16.mxu0 0
      %5604 = vmatpush2.bf16.msra.mxu0 %v5292
      %5605 = vmatprep.mubr.bf16.mxu0 %v4695
      %5606 = vmatmul.mubr.bf16.gmra.mxu0 %v4694
      %v5607 = vpop.f32.mrf.mxu0
      %v5608 = vadd.f32 %v5447, %v5607
      %v5609 = vpop.f32.mrf.mxu0
      %v5610 = vpop.f32.mrf.mxu0
      %v5611 = vadd.f32 %v5450, %v5610
      %v5612 = vpop.f32.mrf.mxu0
      %5613 = vmatprep.mubr.bf16.mxu0 %v4704
      %5614 = vmatmul.mubr.bf16.gmra.mxu0 %v4703
      %v5615 = vpop.f32.mrf.mxu0
      %v5616 = vadd.f32 %v5455, %v5615
      %v5617 = vpop.f32.mrf.mxu0
      %v5618 = vpop.f32.mrf.mxu0
      %v5619 = vadd.f32 %v5458, %v5618
      %v5620 = vpop.f32.mrf.mxu0
      %5621 = vmatprep.mubr.bf16.mxu0 %v4713
      %5622 = vmatmul.mubr.bf16.gmra.mxu0 %v4712
      %v5623 = vpop.f32.mrf.mxu0
      %v5624 = vadd.f32 %v5463, %v5623
      %v5625 = vpop.f32.mrf.mxu0
      %v5626 = vpop.f32.mrf.mxu0
      %v5627 = vadd.f32 %v5466, %v5626
      %v5628 = vpop.f32.mrf.mxu0
      %5629 = vmatprep.mubr.bf16.mxu0 %v4722
      %5630 = vmatmul.mubr.bf16.gmra.mxu0 %v4721
      %v5631 = vpop.f32.mrf.mxu0
      %v5632 = vadd.f32 %v5471, %v5631
      %v5633 = vpop.f32.mrf.mxu0
      %v5634 = vpop.f32.mrf.mxu0
      %v5635 = vadd.f32 %v5474, %v5634
      %v5636 = vpop.f32.mrf.mxu0
      %5637 = vmatprep.mubr.bf16.mxu0 %v4731
      %5638 = vmatmul.mubr.bf16.gmra.mxu0 %v4730
      %v5639 = vpop.f32.mrf.mxu0
      %v5640 = vadd.f32 %v5479, %v5639
      %v5641 = vpop.f32.mrf.mxu0
      %v5642 = vpop.f32.mrf.mxu0
      %v5643 = vadd.f32 %v5482, %v5642
      %v5644 = vpop.f32.mrf.mxu0
      %5645 = vmatprep.mubr.bf16.mxu0 %v4740
      %5646 = vmatmul.mubr.bf16.gmra.mxu0 %v4739
      %v5647 = vpop.f32.mrf.mxu0
      %v5648 = vadd.f32 %v5487, %v5647
      %v5649 = vpop.f32.mrf.mxu0
      %v5650 = vpop.f32.mrf.mxu0
      %v5651 = vadd.f32 %v5490, %v5650
      %v5652 = vpop.f32.mrf.mxu0
      %5653 = vmatprep.mubr.bf16.mxu0 %v4749
      %5654 = vmatmul.mubr.bf16.gmra.mxu0 %v4748
      %v5655 = vpop.f32.mrf.mxu0
      %v5656 = vadd.f32 %v5495, %v5655
      %v5657 = vpop.f32.mrf.mxu0
      %v5658 = vpop.f32.mrf.mxu0
      %v5659 = vadd.f32 %v5498, %v5658
      %v5660 = vpop.f32.mrf.mxu0
      %5661 = vmatprep.mubr.bf16.mxu0 %v4758
      %5662 = vmatmul.mubr.bf16.gmra.mxu0 %v4757
      %v5663 = vpop.f32.mrf.mxu0
      %v5664 = vadd.f32 %v5503, %v5663
      %v5665 = vpop.f32.mrf.mxu0
      %v5666 = vpop.f32.mrf.mxu0
      %v5667 = vadd.f32 %v5506, %v5666
      %v5668 = vpop.f32.mrf.mxu0
      %5669 = vmatprep.mubr.bf16.mxu0 %v4767
      %5670 = vmatmul.mubr.bf16.gmra.mxu0 %v4766
      %v5671 = vpop.f32.mrf.mxu0
      %v5672 = vadd.f32 %v5511, %v5671
      %v5673 = vpop.f32.mrf.mxu0
      %v5674 = vpop.f32.mrf.mxu0
      %v5675 = vadd.f32 %v5514, %v5674
      %v5676 = vpop.f32.mrf.mxu0
      %5677 = vmatprep.mubr.bf16.mxu0 %v4776
      %5678 = vmatmul.mubr.bf16.gmra.mxu0 %v4775
      %v5679 = vpop.f32.mrf.mxu0
      %v5680 = vadd.f32 %v5519, %v5679
      %v5681 = vpop.f32.mrf.mxu0
      %v5682 = vpop.f32.mrf.mxu0
      %v5683 = vadd.f32 %v5522, %v5682
      %v5684 = vpop.f32.mrf.mxu0
      %5685 = vmatprep.mubr.bf16.mxu0 %v4785
      %5686 = vmatmul.mubr.bf16.gmra.mxu0 %v4784
      %v5687 = vpop.f32.mrf.mxu0
      %v5688 = vadd.f32 %v5527, %v5687
      %v5689 = vpop.f32.mrf.mxu0
      %v5690 = vpop.f32.mrf.mxu0
      %v5691 = vadd.f32 %v5530, %v5690
      %v5692 = vpop.f32.mrf.mxu0
      %5693 = vmatprep.mubr.bf16.mxu0 %v4794
      %5694 = vmatmul.mubr.bf16.gmra.mxu0 %v4793
      %v5695 = vpop.f32.mrf.mxu0
      %v5696 = vadd.f32 %v5535, %v5695
      %v5697 = vpop.f32.mrf.mxu0
      %v5698 = vpop.f32.mrf.mxu0
      %v5699 = vadd.f32 %v5538, %v5698
      %v5700 = vpop.f32.mrf.mxu0
      %5701 = vmatprep.mubr.bf16.mxu0 %v4803
      %5702 = vmatmul.mubr.bf16.gmra.mxu0 %v4802
      %v5703 = vpop.f32.mrf.mxu0
      %v5704 = vadd.f32 %v5543, %v5703
      %v5705 = vpop.f32.mrf.mxu0
      %v5706 = vpop.f32.mrf.mxu0
      %v5707 = vadd.f32 %v5546, %v5706
      %v5708 = vpop.f32.mrf.mxu0
      %5709 = vmatprep.mubr.bf16.mxu0 %v4812
      %5710 = vmatmul.mubr.bf16.gmra.mxu0 %v4811
      %v5711 = vpop.f32.mrf.mxu0
      %v5712 = vadd.f32 %v5551, %v5711
      %v5713 = vpop.f32.mrf.mxu0
      %v5714 = vpop.f32.mrf.mxu0
      %v5715 = vadd.f32 %v5554, %v5714
      %v5716 = vpop.f32.mrf.mxu0
      %5717 = vmatprep.mubr.bf16.mxu0 %v4821
      %5718 = vmatmul.mubr.bf16.gmra.mxu0 %v4820
      %v5719 = vpop.f32.mrf.mxu0
      %v5720 = vadd.f32 %v5559, %v5719
      %v5721 = vpop.f32.mrf.mxu0
      %v5722 = vpop.f32.mrf.mxu0
      %v5723 = vadd.f32 %v5562, %v5722
      %v5724 = vpop.f32.mrf.mxu0
      %5725 = vmatprep.mubr.bf16.mxu0 %v4830
      %5726 = vmatmul.mubr.bf16.gmra.mxu0 %v4829
      %v5727 = vpop.f32.mrf.mxu0
      %v5728 = vadd.f32 %v5567, %v5727
      %v5729 = vpop.f32.mrf.mxu0
      %v5730 = vpop.f32.mrf.mxu0
      %v5731 = vadd.f32 %v5570, %v5730
      %v5732 = vpop.f32.mrf.mxu0
      %5733 = vdwg.mxu0
      %5734 = vmatprep.subr.bf16.mxu0 0
      %5735 = vmatpush1.bf16.msra.mxu0 %v5307
      %5736 = vmatprep.subr.bf16.mxu0 0
      %5737 = vmatpush1.bf16.msra.mxu0 %v5306
      %5738 = vmatprep.subr.bf16.mxu0 0
      %5739 = vmatpush1.bf16.msra.mxu0 %v5305
      %5740 = vmatprep.subr.bf16.mxu0 0
      %5741 = vmatpush1.bf16.msra.mxu0 %v5304
      %5742 = vmatprep.subr.bf16.mxu0 0
      %5743 = vmatpush1.bf16.msra.mxu0 %v5303
      %5744 = vmatprep.subr.bf16.mxu0 0
      %5745 = vmatpush1.bf16.msra.mxu0 %v5302
      %5746 = vmatprep.subr.bf16.mxu0 0
      %5747 = vmatpush1.bf16.msra.mxu0 %v5301
      %5748 = vmatprep.subr.bf16.mxu0 0
      %5749 = vmatpush1.bf16.msra.mxu0 %v5300
      %5750 = vmatprep.subr.bf16.mxu0 0
      %5751 = vmatpush2.bf16.msra.mxu0 %v5315
      %5752 = vmatprep.subr.bf16.mxu0 0
      %5753 = vmatpush2.bf16.msra.mxu0 %v5314
      %5754 = vmatprep.subr.bf16.mxu0 0
      %5755 = vmatpush2.bf16.msra.mxu0 %v5313
      %5756 = vmatprep.subr.bf16.mxu0 0
      %5757 = vmatpush2.bf16.msra.mxu0 %v5312
      %5758 = vmatprep.subr.bf16.mxu0 0
      %5759 = vmatpush2.bf16.msra.mxu0 %v5311
      %5760 = vmatprep.subr.bf16.mxu0 0
      %5761 = vmatpush2.bf16.msra.mxu0 %v5310
      %5762 = vmatprep.subr.bf16.mxu0 0
      %5763 = vmatpush2.bf16.msra.mxu0 %v5309
      %5764 = vmatprep.subr.bf16.mxu0 0
      %5765 = vmatpush2.bf16.msra.mxu0 %v5308
      %5766 = vmatprep.mubr.bf16.mxu0 %v4697
      %5767 = vmatmul.mubr.bf16.gmra.mxu0 %v4696
      %v5768 = vpop.f32.mrf.mxu0
      %v5769 = vadd.f32 %v5608, %v5768
      %v5770 = vpop.f32.mrf.mxu0
      %v5771 = vpop.f32.mrf.mxu0
      %v5772 = vadd.f32 %v5611, %v5771
      %v5773 = vpop.f32.mrf.mxu0
      %5774 = vmatprep.mubr.bf16.mxu0 %v4706
      %5775 = vmatmul.mubr.bf16.gmra.mxu0 %v4705
      %v5776 = vpop.f32.mrf.mxu0
      %v5777 = vadd.f32 %v5616, %v5776
      %v5778 = vpop.f32.mrf.mxu0
      %v5779 = vpop.f32.mrf.mxu0
      %v5780 = vadd.f32 %v5619, %v5779
      %v5781 = vpop.f32.mrf.mxu0
      %5782 = vmatprep.mubr.bf16.mxu0 %v4715
      %5783 = vmatmul.mubr.bf16.gmra.mxu0 %v4714
      %v5784 = vpop.f32.mrf.mxu0
      %v5785 = vadd.f32 %v5624, %v5784
      %v5786 = vpop.f32.mrf.mxu0
      %v5787 = vpop.f32.mrf.mxu0
      %v5788 = vadd.f32 %v5627, %v5787
      %v5789 = vpop.f32.mrf.mxu0
      %5790 = vmatprep.mubr.bf16.mxu0 %v4724
      %5791 = vmatmul.mubr.bf16.gmra.mxu0 %v4723
      %v5792 = vpop.f32.mrf.mxu0
      %v5793 = vadd.f32 %v5632, %v5792
      %v5794 = vpop.f32.mrf.mxu0
      %v5795 = vpop.f32.mrf.mxu0
      %v5796 = vadd.f32 %v5635, %v5795
      %v5797 = vpop.f32.mrf.mxu0
      %5798 = vmatprep.mubr.bf16.mxu0 %v4733
      %5799 = vmatmul.mubr.bf16.gmra.mxu0 %v4732
      %v5800 = vpop.f32.mrf.mxu0
      %v5801 = vadd.f32 %v5640, %v5800
      %v5802 = vpop.f32.mrf.mxu0
      %v5803 = vpop.f32.mrf.mxu0
      %v5804 = vadd.f32 %v5643, %v5803
      %v5805 = vpop.f32.mrf.mxu0
      %5806 = vmatprep.mubr.bf16.mxu0 %v4742
      %5807 = vmatmul.mubr.bf16.gmra.mxu0 %v4741
      %v5808 = vpop.f32.mrf.mxu0
      %v5809 = vadd.f32 %v5648, %v5808
      %v5810 = vpop.f32.mrf.mxu0
      %v5811 = vpop.f32.mrf.mxu0
      %v5812 = vadd.f32 %v5651, %v5811
      %v5813 = vpop.f32.mrf.mxu0
      %5814 = vmatprep.mubr.bf16.mxu0 %v4751
      %5815 = vmatmul.mubr.bf16.gmra.mxu0 %v4750
      %v5816 = vpop.f32.mrf.mxu0
      %v5817 = vadd.f32 %v5656, %v5816
      %v5818 = vpop.f32.mrf.mxu0
      %v5819 = vpop.f32.mrf.mxu0
      %v5820 = vadd.f32 %v5659, %v5819
      %v5821 = vpop.f32.mrf.mxu0
      %5822 = vmatprep.mubr.bf16.mxu0 %v4760
      %5823 = vmatmul.mubr.bf16.gmra.mxu0 %v4759
      %v5824 = vpop.f32.mrf.mxu0
      %v5825 = vadd.f32 %v5664, %v5824
      %v5826 = vpop.f32.mrf.mxu0
      %v5827 = vpop.f32.mrf.mxu0
      %v5828 = vadd.f32 %v5667, %v5827
      %v5829 = vpop.f32.mrf.mxu0
      %5830 = vmatprep.mubr.bf16.mxu0 %v4769
      %5831 = vmatmul.mubr.bf16.gmra.mxu0 %v4768
      %v5832 = vpop.f32.mrf.mxu0
      %v5833 = vadd.f32 %v5672, %v5832
      %v5834 = vpop.f32.mrf.mxu0
      %v5835 = vpop.f32.mrf.mxu0
      %v5836 = vadd.f32 %v5675, %v5835
      %v5837 = vpop.f32.mrf.mxu0
      %5838 = vmatprep.mubr.bf16.mxu0 %v4778
      %5839 = vmatmul.mubr.bf16.gmra.mxu0 %v4777
      %v5840 = vpop.f32.mrf.mxu0
      %v5841 = vadd.f32 %v5680, %v5840
      %v5842 = vpop.f32.mrf.mxu0
      %v5843 = vpop.f32.mrf.mxu0
      %v5844 = vadd.f32 %v5683, %v5843
      %v5845 = vpop.f32.mrf.mxu0
      %5846 = vmatprep.mubr.bf16.mxu0 %v4787
      %5847 = vmatmul.mubr.bf16.gmra.mxu0 %v4786
      %v5848 = vpop.f32.mrf.mxu0
      %v5849 = vadd.f32 %v5688, %v5848
      %v5850 = vpop.f32.mrf.mxu0
      %v5851 = vpop.f32.mrf.mxu0
      %v5852 = vadd.f32 %v5691, %v5851
      %v5853 = vpop.f32.mrf.mxu0
      %5854 = vmatprep.mubr.bf16.mxu0 %v4796
      %5855 = vmatmul.mubr.bf16.gmra.mxu0 %v4795
      %v5856 = vpop.f32.mrf.mxu0
      %v5857 = vadd.f32 %v5696, %v5856
      %v5858 = vpop.f32.mrf.mxu0
      %v5859 = vpop.f32.mrf.mxu0
      %v5860 = vadd.f32 %v5699, %v5859
      %v5861 = vpop.f32.mrf.mxu0
      %5862 = vmatprep.mubr.bf16.mxu0 %v4805
      %5863 = vmatmul.mubr.bf16.gmra.mxu0 %v4804
      %v5864 = vpop.f32.mrf.mxu0
      %v5865 = vadd.f32 %v5704, %v5864
      %v5866 = vpop.f32.mrf.mxu0
      %v5867 = vpop.f32.mrf.mxu0
      %v5868 = vadd.f32 %v5707, %v5867
      %v5869 = vpop.f32.mrf.mxu0
      %5870 = vmatprep.mubr.bf16.mxu0 %v4814
      %5871 = vmatmul.mubr.bf16.gmra.mxu0 %v4813
      %v5872 = vpop.f32.mrf.mxu0
      %v5873 = vadd.f32 %v5712, %v5872
      %v5874 = vpop.f32.mrf.mxu0
      %v5875 = vpop.f32.mrf.mxu0
      %v5876 = vadd.f32 %v5715, %v5875
      %v5877 = vpop.f32.mrf.mxu0
      %5878 = vmatprep.mubr.bf16.mxu0 %v4823
      %5879 = vmatmul.mubr.bf16.gmra.mxu0 %v4822
      %v5880 = vpop.f32.mrf.mxu0
      %v5881 = vadd.f32 %v5720, %v5880
      %v5882 = vpop.f32.mrf.mxu0
      %v5883 = vpop.f32.mrf.mxu0
      %v5884 = vadd.f32 %v5723, %v5883
      %v5885 = vpop.f32.mrf.mxu0
      %5886 = vmatprep.mubr.bf16.mxu0 %v4832
      %5887 = vmatmul.mubr.bf16.gmra.mxu0 %v4831
      %v5888 = vpop.f32.mrf.mxu0
      %v5889 = vadd.f32 %v5728, %v5888
      %v5890 = vpop.f32.mrf.mxu0
      %v5891 = vpop.f32.mrf.mxu0
      %v5892 = vadd.f32 %v5731, %v5891
      %v5893 = vpop.f32.mrf.mxu0
      %5894 = vdwg.mxu0
      %5895 = vmatprep.subr.bf16.mxu0 0
      %5896 = vmatpush1.bf16.msra.mxu0 %v5323
      %5897 = vmatprep.subr.bf16.mxu0 0
      %5898 = vmatpush1.bf16.msra.mxu0 %v5322
      %5899 = vmatprep.subr.bf16.mxu0 0
      %5900 = vmatpush1.bf16.msra.mxu0 %v5321
      %5901 = vmatprep.subr.bf16.mxu0 0
      %5902 = vmatpush1.bf16.msra.mxu0 %v5320
      %5903 = vmatprep.subr.bf16.mxu0 0
      %5904 = vmatpush1.bf16.msra.mxu0 %v5319
      %5905 = vmatprep.subr.bf16.mxu0 0
      %5906 = vmatpush1.bf16.msra.mxu0 %v5318
      %5907 = vmatprep.subr.bf16.mxu0 0
      %5908 = vmatpush1.bf16.msra.mxu0 %v5317
      %5909 = vmatprep.subr.bf16.mxu0 0
      %5910 = vmatpush1.bf16.msra.mxu0 %v5316
      %5911 = vmatprep.subr.bf16.mxu0 0
      %5912 = vmatpush2.bf16.msra.mxu0 %v5331
      %5913 = vmatprep.subr.bf16.mxu0 0
      %5914 = vmatpush2.bf16.msra.mxu0 %v5330
      %5915 = vmatprep.subr.bf16.mxu0 0
      %5916 = vmatpush2.bf16.msra.mxu0 %v5329
      %5917 = vmatprep.subr.bf16.mxu0 0
      %5918 = vmatpush2.bf16.msra.mxu0 %v5328
      %5919 = vmatprep.subr.bf16.mxu0 0
      %5920 = vmatpush2.bf16.msra.mxu0 %v5327
      %5921 = vmatprep.subr.bf16.mxu0 0
      %5922 = vmatpush2.bf16.msra.mxu0 %v5326
      %5923 = vmatprep.subr.bf16.mxu0 0
      %5924 = vmatpush2.bf16.msra.mxu0 %v5325
      %5925 = vmatprep.subr.bf16.mxu0 0
      %5926 = vmatpush2.bf16.msra.mxu0 %v5324
      %5927 = vmatprep.mubr.bf16.mxu0 %v4699
      %5928 = vmatmul.mubr.bf16.gmra.mxu0 %v4698
      %v5929 = vpop.f32.mrf.mxu0
      %v5930 = vadd.f32 %v5769, %v5929
      %v5931 = vpop.f32.mrf.mxu0
      %v5932 = vpop.f32.mrf.mxu0
      %v5933 = vadd.f32 %v5772, %v5932
      %v5934 = vpop.f32.mrf.mxu0
      %5935 = vmatprep.mubr.bf16.mxu0 %v4708
      %5936 = vmatmul.mubr.bf16.gmra.mxu0 %v4707
      %v5937 = vpop.f32.mrf.mxu0
      %v5938 = vadd.f32 %v5777, %v5937
      %v5939 = vpop.f32.mrf.mxu0
      %v5940 = vpop.f32.mrf.mxu0
      %v5941 = vadd.f32 %v5780, %v5940
      %v5942 = vpop.f32.mrf.mxu0
      %5943 = vmatprep.mubr.bf16.mxu0 %v4717
      %5944 = vmatmul.mubr.bf16.gmra.mxu0 %v4716
      %v5945 = vpop.f32.mrf.mxu0
      %v5946 = vadd.f32 %v5785, %v5945
      %v5947 = vpop.f32.mrf.mxu0
      %v5948 = vpop.f32.mrf.mxu0
      %v5949 = vadd.f32 %v5788, %v5948
      %v5950 = vpop.f32.mrf.mxu0
      %5951 = vmatprep.mubr.bf16.mxu0 %v4726
      %5952 = vmatmul.mubr.bf16.gmra.mxu0 %v4725
      %v5953 = vpop.f32.mrf.mxu0
      %v5954 = vadd.f32 %v5793, %v5953
      %v5955 = vpop.f32.mrf.mxu0
      %v5956 = vpop.f32.mrf.mxu0
      %v5957 = vadd.f32 %v5796, %v5956
      %v5958 = vpop.f32.mrf.mxu0
      %5959 = vmatprep.mubr.bf16.mxu0 %v4735
      %5960 = vmatmul.mubr.bf16.gmra.mxu0 %v4734
      %v5961 = vpop.f32.mrf.mxu0
      %v5962 = vadd.f32 %v5801, %v5961
      %v5963 = vpop.f32.mrf.mxu0
      %v5964 = vpop.f32.mrf.mxu0
      %v5965 = vadd.f32 %v5804, %v5964
      %v5966 = vpop.f32.mrf.mxu0
      %5967 = vmatprep.mubr.bf16.mxu0 %v4744
      %5968 = vmatmul.mubr.bf16.gmra.mxu0 %v4743
      %v5969 = vpop.f32.mrf.mxu0
      %v5970 = vadd.f32 %v5809, %v5969
      %v5971 = vpop.f32.mrf.mxu0
      %v5972 = vpop.f32.mrf.mxu0
      %v5973 = vadd.f32 %v5812, %v5972
      %v5974 = vpop.f32.mrf.mxu0
      %5975 = vmatprep.mubr.bf16.mxu0 %v4753
      %5976 = vmatmul.mubr.bf16.gmra.mxu0 %v4752
      %v5977 = vpop.f32.mrf.mxu0
      %v5978 = vadd.f32 %v5817, %v5977
      %v5979 = vpop.f32.mrf.mxu0
      %v5980 = vpop.f32.mrf.mxu0
      %v5981 = vadd.f32 %v5820, %v5980
      %v5982 = vpop.f32.mrf.mxu0
      %5983 = vmatprep.mubr.bf16.mxu0 %v4762
      %5984 = vmatmul.mubr.bf16.gmra.mxu0 %v4761
      %v5985 = vpop.f32.mrf.mxu0
      %v5986 = vadd.f32 %v5825, %v5985
      %v5987 = vpop.f32.mrf.mxu0
      %v5988 = vpop.f32.mrf.mxu0
      %v5989 = vadd.f32 %v5828, %v5988
      %v5990 = vpop.f32.mrf.mxu0
      %5991 = vmatprep.mubr.bf16.mxu0 %v4771
      %5992 = vmatmul.mubr.bf16.gmra.mxu0 %v4770
      %v5993 = vpop.f32.mrf.mxu0
      %v5994 = vadd.f32 %v5833, %v5993
      %v5995 = vpop.f32.mrf.mxu0
      %v5996 = vpop.f32.mrf.mxu0
      %v5997 = vadd.f32 %v5836, %v5996
      %v5998 = vpop.f32.mrf.mxu0
      %5999 = vmatprep.mubr.bf16.mxu0 %v4780
      %6000 = vmatmul.mubr.bf16.gmra.mxu0 %v4779
      %v6001 = vpop.f32.mrf.mxu0
      %v6002 = vadd.f32 %v5841, %v6001
      %v6003 = vpop.f32.mrf.mxu0
      %v6004 = vpop.f32.mrf.mxu0
      %v6005 = vadd.f32 %v5844, %v6004
      %v6006 = vpop.f32.mrf.mxu0
      %6007 = vmatprep.mubr.bf16.mxu0 %v4789
      %6008 = vmatmul.mubr.bf16.gmra.mxu0 %v4788
      %v6009 = vpop.f32.mrf.mxu0
      %v6010 = vadd.f32 %v5849, %v6009
      %v6011 = vpop.f32.mrf.mxu0
      %v6012 = vpop.f32.mrf.mxu0
      %v6013 = vadd.f32 %v5852, %v6012
      %v6014 = vpop.f32.mrf.mxu0
      %6015 = vmatprep.mubr.bf16.mxu0 %v4798
      %6016 = vmatmul.mubr.bf16.gmra.mxu0 %v4797
      %v6017 = vpop.f32.mrf.mxu0
      %v6018 = vadd.f32 %v5857, %v6017
      %v6019 = vpop.f32.mrf.mxu0
      %v6020 = vpop.f32.mrf.mxu0
      %v6021 = vadd.f32 %v5860, %v6020
      %v6022 = vpop.f32.mrf.mxu0
      %6023 = vmatprep.mubr.bf16.mxu0 %v4807
      %6024 = vmatmul.mubr.bf16.gmra.mxu0 %v4806
      %v6025 = vpop.f32.mrf.mxu0
      %v6026 = vadd.f32 %v5865, %v6025
      %v6027 = vpop.f32.mrf.mxu0
      %v6028 = vpop.f32.mrf.mxu0
      %v6029 = vadd.f32 %v5868, %v6028
      %v6030 = vpop.f32.mrf.mxu0
      %6031 = vmatprep.mubr.bf16.mxu0 %v4816
      %6032 = vmatmul.mubr.bf16.gmra.mxu0 %v4815
      %v6033 = vpop.f32.mrf.mxu0
      %v6034 = vadd.f32 %v5873, %v6033
      %v6035 = vpop.f32.mrf.mxu0
      %v6036 = vpop.f32.mrf.mxu0
      %v6037 = vadd.f32 %v5876, %v6036
      %v6038 = vpop.f32.mrf.mxu0
      %6039 = vmatprep.mubr.bf16.mxu0 %v4825
      %6040 = vmatmul.mubr.bf16.gmra.mxu0 %v4824
      %v6041 = vpop.f32.mrf.mxu0
      %v6042 = vadd.f32 %v5881, %v6041
      %v6043 = vpop.f32.mrf.mxu0
      %v6044 = vpop.f32.mrf.mxu0
      %v6045 = vadd.f32 %v5884, %v6044
      %v6046 = vpop.f32.mrf.mxu0
      %6047 = vmatprep.mubr.bf16.mxu0 %v4834
      %6048 = vmatmul.mubr.bf16.gmra.mxu0 %v4833
      %v6049 = vpop.f32.mrf.mxu0
      %v6050 = vadd.f32 %v5889, %v6049
      %v6051 = vpop.f32.mrf.mxu0
      %v6052 = vpop.f32.mrf.mxu0
      %v6053 = vadd.f32 %v5892, %v6052
      %v6054 = vpop.f32.mrf.mxu0
      %6055 = vdwg.mxu0
      %6056 = vmatprep.subr.bf16.mxu0 0
      %6057 = vmatpush1.bf16.msra.mxu0 %v5339
      %6058 = vmatprep.subr.bf16.mxu0 0
      %6059 = vmatpush1.bf16.msra.mxu0 %v5338
      %6060 = vmatprep.subr.bf16.mxu0 0
      %6061 = vmatpush1.bf16.msra.mxu0 %v5337
      %6062 = vmatprep.subr.bf16.mxu0 0
      %6063 = vmatpush1.bf16.msra.mxu0 %v5336
      %6064 = vmatprep.subr.bf16.mxu0 0
      %6065 = vmatpush1.bf16.msra.mxu0 %v5335
      %6066 = vmatprep.subr.bf16.mxu0 0
      %6067 = vmatpush1.bf16.msra.mxu0 %v5334
      %6068 = vmatprep.subr.bf16.mxu0 0
      %6069 = vmatpush1.bf16.msra.mxu0 %v5333
      %6070 = vmatprep.subr.bf16.mxu0 0
      %6071 = vmatpush1.bf16.msra.mxu0 %v5332
      %6072 = vmatprep.subr.bf16.mxu0 0
      %6073 = vmatpush2.bf16.msra.mxu0 0
      %6074 = vmatprep.subr.bf16.mxu0 0
      %6075 = vmatpush2.bf16.msra.mxu0 0
      %6076 = vmatprep.subr.bf16.mxu0 0
      %6077 = vmatpush2.bf16.msra.mxu0 0
      %6078 = vmatprep.subr.bf16.mxu0 0
      %6079 = vmatpush2.bf16.msra.mxu0 0
      %6080 = vmatprep.subr.bf16.mxu0 0
      %6081 = vmatpush2.bf16.msra.mxu0 0
      %6082 = vmatprep.subr.bf16.mxu0 0
      %6083 = vmatpush2.bf16.msra.mxu0 0
      %6084 = vmatprep.subr.bf16.mxu0 0
      %6085 = vmatpush2.bf16.msra.mxu0 0
      %6086 = vmatprep.subr.bf16.mxu0 0
      %6087 = vmatpush2.bf16.msra.mxu0 0
      %6088 = vmatprep.mubr.bf16.mxu0 0
      %6089 = vmatmul.mubr.bf16.gmra.mxu0 %v4700
      %v6090 = vpop.f32.mrf.mxu0
      %v6091 = vadd.f32 %v5930, %v6090
      %v6092 = vpop.f32.mrf.mxu0
      %v6093 = vpop.f32.mrf.mxu0
      %v6094 = vadd.f32 %v5933, %v6093
      %v6095 = vpop.f32.mrf.mxu0
      %6096 = vmatprep.mubr.bf16.mxu0 0
      %6097 = vmatmul.mubr.bf16.gmra.mxu0 %v4709
      %v6098 = vpop.f32.mrf.mxu0
      %v6099 = vadd.f32 %v5938, %v6098
      %v6100 = vpop.f32.mrf.mxu0
      %v6101 = vpop.f32.mrf.mxu0
      %v6102 = vadd.f32 %v5941, %v6101
      %v6103 = vpop.f32.mrf.mxu0
      %6104 = vmatprep.mubr.bf16.mxu0 0
      %6105 = vmatmul.mubr.bf16.gmra.mxu0 %v4718
      %v6106 = vpop.f32.mrf.mxu0
      %v6107 = vadd.f32 %v5946, %v6106
      %v6108 = vpop.f32.mrf.mxu0
      %v6109 = vpop.f32.mrf.mxu0
      %v6110 = vadd.f32 %v5949, %v6109
      %v6111 = vpop.f32.mrf.mxu0
      %6112 = vmatprep.mubr.bf16.mxu0 0
      %6113 = vmatmul.mubr.bf16.gmra.mxu0 %v4727
      %v6114 = vpop.f32.mrf.mxu0
      %v6115 = vadd.f32 %v5954, %v6114
      %v6116 = vpop.f32.mrf.mxu0
      %v6117 = vpop.f32.mrf.mxu0
      %v6118 = vadd.f32 %v5957, %v6117
      %v6119 = vpop.f32.mrf.mxu0
      %6120 = vmatprep.mubr.bf16.mxu0 0
      %6121 = vmatmul.mubr.bf16.gmra.mxu0 %v4736
      %v6122 = vpop.f32.mrf.mxu0
      %v6123 = vadd.f32 %v5962, %v6122
      %v6124 = vpop.f32.mrf.mxu0
      %v6125 = vpop.f32.mrf.mxu0
      %v6126 = vadd.f32 %v5965, %v6125
      %v6127 = vpop.f32.mrf.mxu0
      %6128 = vmatprep.mubr.bf16.mxu0 0
      %6129 = vmatmul.mubr.bf16.gmra.mxu0 %v4745
      %v6130 = vpop.f32.mrf.mxu0
      %v6131 = vadd.f32 %v5970, %v6130
      %v6132 = vpop.f32.mrf.mxu0
      %v6133 = vpop.f32.mrf.mxu0
      %v6134 = vadd.f32 %v5973, %v6133
      %v6135 = vpop.f32.mrf.mxu0
      %6136 = vmatprep.mubr.bf16.mxu0 0
      %6137 = vmatmul.mubr.bf16.gmra.mxu0 %v4754
      %v6138 = vpop.f32.mrf.mxu0
      %v6139 = vadd.f32 %v5978, %v6138
      %v6140 = vpop.f32.mrf.mxu0
      %v6141 = vpop.f32.mrf.mxu0
      %v6142 = vadd.f32 %v5981, %v6141
      %v6143 = vpop.f32.mrf.mxu0
      %6144 = vmatprep.mubr.bf16.mxu0 0
      %6145 = vmatmul.mubr.bf16.gmra.mxu0 %v4763
      %v6146 = vpop.f32.mrf.mxu0
      %v6147 = vadd.f32 %v5986, %v6146
      %v6148 = vpop.f32.mrf.mxu0
      %v6149 = vpop.f32.mrf.mxu0
      %v6150 = vadd.f32 %v5989, %v6149
      %v6151 = vpop.f32.mrf.mxu0
      %6152 = vmatprep.mubr.bf16.mxu0 0
      %6153 = vmatmul.mubr.bf16.gmra.mxu0 %v4772
      %v6154 = vpop.f32.mrf.mxu0
      %v6155 = vadd.f32 %v5994, %v6154
      %v6156 = vpop.f32.mrf.mxu0
      %v6157 = vpop.f32.mrf.mxu0
      %v6158 = vadd.f32 %v5997, %v6157
      %v6159 = vpop.f32.mrf.mxu0
      %6160 = vmatprep.mubr.bf16.mxu0 0
      %6161 = vmatmul.mubr.bf16.gmra.mxu0 %v4781
      %v6162 = vpop.f32.mrf.mxu0
      %v6163 = vadd.f32 %v6002, %v6162
      %v6164 = vpop.f32.mrf.mxu0
      %v6165 = vpop.f32.mrf.mxu0
      %v6166 = vadd.f32 %v6005, %v6165
      %v6167 = vpop.f32.mrf.mxu0
      %6168 = vmatprep.mubr.bf16.mxu0 0
      %6169 = vmatmul.mubr.bf16.gmra.mxu0 %v4790
      %v6170 = vpop.f32.mrf.mxu0
      %v6171 = vadd.f32 %v6010, %v6170
      %v6172 = vpop.f32.mrf.mxu0
      %v6173 = vpop.f32.mrf.mxu0
      %v6174 = vadd.f32 %v6013, %v6173
      %v6175 = vpop.f32.mrf.mxu0
      %6176 = vmatprep.mubr.bf16.mxu0 0
      %6177 = vmatmul.mubr.bf16.gmra.mxu0 %v4799
      %v6178 = vpop.f32.mrf.mxu0
      %v6179 = vadd.f32 %v6018, %v6178
      %v6180 = vpop.f32.mrf.mxu0
      %v6181 = vpop.f32.mrf.mxu0
      %v6182 = vadd.f32 %v6021, %v6181
      %v6183 = vpop.f32.mrf.mxu0
      %6184 = vmatprep.mubr.bf16.mxu0 0
      %6185 = vmatmul.mubr.bf16.gmra.mxu0 %v4808
      %v6186 = vpop.f32.mrf.mxu0
      %v6187 = vadd.f32 %v6026, %v6186
      %v6188 = vpop.f32.mrf.mxu0
      %v6189 = vpop.f32.mrf.mxu0
      %v6190 = vadd.f32 %v6029, %v6189
      %v6191 = vpop.f32.mrf.mxu0
      %6192 = vmatprep.mubr.bf16.mxu0 0
      %6193 = vmatmul.mubr.bf16.gmra.mxu0 %v4817
      %v6194 = vpop.f32.mrf.mxu0
      %v6195 = vadd.f32 %v6034, %v6194
      %v6196 = vpop.f32.mrf.mxu0
      %v6197 = vpop.f32.mrf.mxu0
      %v6198 = vadd.f32 %v6037, %v6197
      %v6199 = vpop.f32.mrf.mxu0
      %6200 = vmatprep.mubr.bf16.mxu0 0
      %6201 = vmatmul.mubr.bf16.gmra.mxu0 %v4826
      %v6202 = vpop.f32.mrf.mxu0
      %v6203 = vadd.f32 %v6042, %v6202
      %v6204 = vpop.f32.mrf.mxu0
      %v6205 = vpop.f32.mrf.mxu0
      %v6206 = vadd.f32 %v6045, %v6205
      %v6207 = vpop.f32.mrf.mxu0
      %6208 = vmatprep.mubr.bf16.mxu0 0
      %6209 = vmatmul.mubr.bf16.gmra.mxu0 %v4835
      %v6210 = vpop.f32.mrf.mxu0
      %v6211 = vadd.f32 %v6050, %v6210
      %v6212 = vpop.f32.mrf.mxu0
      %v6213 = vpop.f32.mrf.mxu0
      %v6214 = vadd.f32 %v6053, %v6213
      %v6215 = vpop.f32.mrf.mxu0
      %6216 = vdwg.mxu0
      %v6217 = vsub.f32 0.0, %v6091
      %v6218 = vsub.f32 0.0, %v6094
      %v6219 = vsub.f32 0.0, %v6099
      %v6220 = vsub.f32 0.0, %v6102
      %v6221 = vsub.f32 0.0, %v6107
      %v6222 = vsub.f32 0.0, %v6110
      %v6223 = vsub.f32 0.0, %v6115
      %v6224 = vsub.f32 0.0, %v6118
      %v6225 = vsub.f32 0.0, %v6123
      %v6226 = vsub.f32 0.0, %v6126
      %v6227 = vsub.f32 0.0, %v6131
      %v6228 = vsub.f32 0.0, %v6134
      %v6229 = vsub.f32 0.0, %v6139
      %v6230 = vsub.f32 0.0, %v6142
      %v6231 = vsub.f32 0.0, %v6147
      %v6232 = vsub.f32 0.0, %v6150
      %v6233 = vsub.f32 0.0, %v6155
      %v6234 = vsub.f32 0.0, %v6158
      %v6235 = vsub.f32 0.0, %v6163
      %v6236 = vsub.f32 0.0, %v6166
      %v6237 = vsub.f32 0.0, %v6171
      %v6238 = vsub.f32 0.0, %v6174
      %v6239 = vsub.f32 0.0, %v6179
      %v6240 = vsub.f32 0.0, %v6182
      %v6241 = vsub.f32 0.0, %v6187
      %v6242 = vsub.f32 0.0, %v6190
      %v6243 = vsub.f32 0.0, %v6195
      %v6244 = vsub.f32 0.0, %v6198
      %v6245 = vsub.f32 0.0, %v6203
      %v6246 = vsub.f32 0.0, %v6206
      %v6247 = vsub.f32 0.0, %v6211
      %v6248 = vsub.f32 0.0, %v6214
      %v6249 = vmul.f32 %v6217, 1.442695
      %v6250 = vpow.pop %v6249
      %v6251 = vmul.f32 %v6218, 1.442695
      %v6252 = vpow.pop %v6251
      %v6253 = vmul.f32 %v6219, 1.442695
      %v6254 = vpow.pop %v6253
      %v6255 = vmul.f32 %v6220, 1.442695
      %v6256 = vpow.pop %v6255
      %v6257 = vmul.f32 %v6221, 1.442695
      %v6258 = vpow.pop %v6257
      %v6259 = vmul.f32 %v6222, 1.442695
      %v6260 = vpow.pop %v6259
      %v6261 = vmul.f32 %v6223, 1.442695
      %v6262 = vpow.pop %v6261
      %v6263 = vmul.f32 %v6224, 1.442695
      %v6264 = vpow.pop %v6263
      %v6265 = vmul.f32 %v6225, 1.442695
      %v6266 = vpow.pop %v6265
      %v6267 = vmul.f32 %v6226, 1.442695
      %v6268 = vpow.pop %v6267
      %v6269 = vmul.f32 %v6227, 1.442695
      %v6270 = vpow.pop %v6269
      %v6271 = vmul.f32 %v6228, 1.442695
      %v6272 = vpow.pop %v6271
      %v6273 = vmul.f32 %v6229, 1.442695
      %v6274 = vpow.pop %v6273
      %v6275 = vmul.f32 %v6230, 1.442695
      %v6276 = vpow.pop %v6275
      %v6277 = vmul.f32 %v6231, 1.442695
      %v6278 = vpow.pop %v6277
      %v6279 = vmul.f32 %v6232, 1.442695
      %v6280 = vpow.pop %v6279
      %v6281 = vmul.f32 %v6233, 1.442695
      %v6282 = vpow.pop %v6281
      %v6283 = vmul.f32 %v6234, 1.442695
      %v6284 = vpow.pop %v6283
      %v6285 = vmul.f32 %v6235, 1.442695
      %v6286 = vpow.pop %v6285
      %v6287 = vmul.f32 %v6236, 1.442695
      %v6288 = vpow.pop %v6287
      %v6289 = vmul.f32 %v6237, 1.442695
      %v6290 = vpow.pop %v6289
      %v6291 = vmul.f32 %v6238, 1.442695
      %v6292 = vpow.pop %v6291
      %v6293 = vmul.f32 %v6239, 1.442695
      %v6294 = vpow.pop %v6293
      %v6295 = vmul.f32 %v6240, 1.442695
      %v6296 = vpow.pop %v6295
      %v6297 = vmul.f32 %v6241, 1.442695
      %v6298 = vpow.pop %v6297
      %v6299 = vmul.f32 %v6242, 1.442695
      %v6300 = vpow.pop %v6299
      %v6301 = vmul.f32 %v6243, 1.442695
      %v6302 = vpow.pop %v6301
      %v6303 = vmul.f32 %v6244, 1.442695
      %v6304 = vpow.pop %v6303
      %v6305 = vmul.f32 %v6245, 1.442695
      %v6306 = vpow.pop %v6305
      %v6307 = vmul.f32 %v6246, 1.442695
      %v6308 = vpow.pop %v6307
      %v6309 = vmul.f32 %v6247, 1.442695
      %v6310 = vpow.pop %v6309
      %v6311 = vmul.f32 %v6248, 1.442695
      %v6312 = vpow.pop %v6311
      %v6313 = vadd.f32 %v6250, 1.0
      %v6314 = vadd.f32 %v6252, 1.0
      %v6315 = vadd.f32 %v6254, 1.0
      %v6316 = vadd.f32 %v6256, 1.0
      %v6317 = vadd.f32 %v6258, 1.0
      %v6318 = vadd.f32 %v6260, 1.0
      %v6319 = vadd.f32 %v6262, 1.0
      %v6320 = vadd.f32 %v6264, 1.0
      %v6321 = vadd.f32 %v6266, 1.0
      %v6322 = vadd.f32 %v6268, 1.0
      %v6323 = vadd.f32 %v6270, 1.0
      %v6324 = vadd.f32 %v6272, 1.0
      %v6325 = vadd.f32 %v6274, 1.0
      %v6326 = vadd.f32 %v6276, 1.0
      %v6327 = vadd.f32 %v6278, 1.0
      %v6328 = vadd.f32 %v6280, 1.0
      %v6329 = vadd.f32 %v6282, 1.0
      %v6330 = vadd.f32 %v6284, 1.0
      %v6331 = vadd.f32 %v6286, 1.0
      %v6332 = vadd.f32 %v6288, 1.0
      %v6333 = vadd.f32 %v6290, 1.0
      %v6334 = vadd.f32 %v6292, 1.0
      %v6335 = vadd.f32 %v6294, 1.0
      %v6336 = vadd.f32 %v6296, 1.0
      %v6337 = vadd.f32 %v6298, 1.0
      %v6338 = vadd.f32 %v6300, 1.0
      %v6339 = vadd.f32 %v6302, 1.0
      %v6340 = vadd.f32 %v6304, 1.0
      %v6341 = vadd.f32 %v6306, 1.0
      %v6342 = vadd.f32 %v6308, 1.0
      %v6343 = vadd.f32 %v6310, 1.0
      %v6344 = vadd.f32 %v6312, 1.0
      %v6345 = vrcp.pop %v6313
      %v6346 = vrcp.pop %v6314
      %v6347 = vrcp.pop %v6315
      %v6348 = vrcp.pop %v6316
      %v6349 = vrcp.pop %v6317
      %v6350 = vrcp.pop %v6318
      %v6351 = vrcp.pop %v6319
      %v6352 = vrcp.pop %v6320
      %v6353 = vrcp.pop %v6321
      %v6354 = vrcp.pop %v6322
      %v6355 = vrcp.pop %v6323
      %v6356 = vrcp.pop %v6324
      %v6357 = vrcp.pop %v6325
      %v6358 = vrcp.pop %v6326
      %v6359 = vrcp.pop %v6327
      %v6360 = vrcp.pop %v6328
      %v6361 = vrcp.pop %v6329
      %v6362 = vrcp.pop %v6330
      %v6363 = vrcp.pop %v6331
      %v6364 = vrcp.pop %v6332
      %v6365 = vrcp.pop %v6333
      %v6366 = vrcp.pop %v6334
      %v6367 = vrcp.pop %v6335
      %v6368 = vrcp.pop %v6336
      %v6369 = vrcp.pop %v6337
      %v6370 = vrcp.pop %v6338
      %v6371 = vrcp.pop %v6339
      %v6372 = vrcp.pop %v6340
      %v6373 = vrcp.pop %v6341
      %v6374 = vrcp.pop %v6342
      %v6375 = vrcp.pop %v6343
      %v6376 = vrcp.pop %v6344
      %v6377 = vmul.f32 %v6091, %v6345
      %v6378 = vmul.f32 %v6094, %v6346
      %v6379 = vmul.f32 %v6099, %v6347
      %v6380 = vmul.f32 %v6102, %v6348
      %v6381 = vmul.f32 %v6107, %v6349
      %v6382 = vmul.f32 %v6110, %v6350
      %v6383 = vmul.f32 %v6115, %v6351
      %v6384 = vmul.f32 %v6118, %v6352
      %v6385 = vmul.f32 %v6123, %v6353
      %v6386 = vmul.f32 %v6126, %v6354
      %v6387 = vmul.f32 %v6131, %v6355
      %v6388 = vmul.f32 %v6134, %v6356
      %v6389 = vmul.f32 %v6139, %v6357
      %v6390 = vmul.f32 %v6142, %v6358
      %v6391 = vmul.f32 %v6147, %v6359
      %v6392 = vmul.f32 %v6150, %v6360
      %v6393 = vmul.f32 %v6155, %v6361
      %v6394 = vmul.f32 %v6158, %v6362
      %v6395 = vmul.f32 %v6163, %v6363
      %v6396 = vmul.f32 %v6166, %v6364
      %v6397 = vmul.f32 %v6171, %v6365
      %v6398 = vmul.f32 %v6174, %v6366
      %v6399 = vmul.f32 %v6179, %v6367
      %v6400 = vmul.f32 %v6182, %v6368
      %v6401 = vmul.f32 %v6187, %v6369
      %v6402 = vmul.f32 %v6190, %v6370
      %v6403 = vmul.f32 %v6195, %v6371
      %v6404 = vmul.f32 %v6198, %v6372
      %v6405 = vmul.f32 %v6203, %v6373
      %v6406 = vmul.f32 %v6206, %v6374
      %v6407 = vmul.f32 %v6211, %v6375
      %v6408 = vmul.f32 %v6214, %v6376
      %v6409 = vld [vmem:[%s219] sm:$0xf]
      %v6410 = vld [vmem:[%s219 + $0x4] sm:$0xf]
      %v6411 = vld [vmem:[%s219 + $0x8] sm:$0xf]
      %v6412 = vld [vmem:[%s219 + $0xc] sm:$0xf]
      %v6413 = vld [vmem:[%s219 + $0x10] sm:$0xf]
      %v6414 = vld [vmem:[%s219 + $0x14] sm:$0xf]
      %v6415 = vld [vmem:[%s219 + $0x18] sm:$0xf]
      %v6416 = vld [vmem:[%s219 + $0x1c] sm:$0xf]
      %v6417 = vld [vmem:[%s219 + $0x20] sm:$0xf]
      %v6418 = vld [vmem:[%s219 + $0x24] sm:$0xf]
      %v6419 = vld [vmem:[%s219 + $0x28] sm:$0xf]
      %v6420 = vld [vmem:[%s219 + $0x2c] sm:$0xf]
      %v6421 = vld [vmem:[%s219 + $0x30] sm:$0xf]
      %v6422 = vld [vmem:[%s219 + $0x34] sm:$0xf]
      %v6423 = vld [vmem:[%s219 + $0x38] sm:$0xf]
      %v6424 = vld [vmem:[%s219 + $0x3c] sm:$0xf]
      %v6425 = vld [vmem:[%s219 + $0x40] sm:$0xf]
      %v6426 = vld [vmem:[%s219 + $0x44] sm:$0xf]
      %v6427 = vld [vmem:[%s219 + $0x48] sm:$0xf]
      %v6428 = vld [vmem:[%s219 + $0x4c] sm:$0xf]
      %v6429 = vld [vmem:[%s219 + $0x50] sm:$0xf]
      %v6430 = vld [vmem:[%s219 + $0x54] sm:$0xf]
      %v6431 = vld [vmem:[%s219 + $0x58] sm:$0xf]
      %v6432 = vld [vmem:[%s219 + $0x5c] sm:$0xf]
      %v6433 = vld [vmem:[%s219 + $0x60] sm:$0xf]
      %v6434 = vld [vmem:[%s219 + $0x64] sm:$0xf]
      %v6435 = vld [vmem:[%s219 + $0x68] sm:$0xf]
      %v6436 = vld [vmem:[%s219 + $0x6c] sm:$0xf]
      %v6437 = vld [vmem:[%s219 + $0x70] sm:$0xf]
      %v6438 = vld [vmem:[%s219 + $0x74] sm:$0xf]
      %v6439 = vld [vmem:[%s219 + $0x78] sm:$0xf]
      %v6440 = vld [vmem:[%s219 + $0x7c] sm:$0xf]
      %v6441 = vunpack.c.l.bf16 %v6409
      %v6442 = vunpack.c.l.bf16 %v6410
      %v6443 = vunpack.c.l.bf16 %v6411
      %v6444 = vunpack.c.l.bf16 %v6412
      %v6445 = vunpack.c.l.bf16 %v6413
      %v6446 = vunpack.c.l.bf16 %v6414
      %v6447 = vunpack.c.l.bf16 %v6415
      %v6448 = vunpack.c.l.bf16 %v6416
      %v6449 = vunpack.c.l.bf16 %v6417
      %v6450 = vunpack.c.l.bf16 %v6418
      %v6451 = vunpack.c.l.bf16 %v6419
      %v6452 = vunpack.c.l.bf16 %v6420
      %v6453 = vunpack.c.l.bf16 %v6421
      %v6454 = vunpack.c.l.bf16 %v6422
      %v6455 = vunpack.c.l.bf16 %v6423
      %v6456 = vunpack.c.l.bf16 %v6424
      %v6457 = vunpack.c.l.bf16 %v6425
      %v6458 = vunpack.c.l.bf16 %v6426
      %v6459 = vunpack.c.l.bf16 %v6427
      %v6460 = vunpack.c.l.bf16 %v6428
      %v6461 = vunpack.c.l.bf16 %v6429
      %v6462 = vunpack.c.l.bf16 %v6430
      %v6463 = vunpack.c.l.bf16 %v6431
      %v6464 = vunpack.c.l.bf16 %v6432
      %v6465 = vunpack.c.l.bf16 %v6433
      %v6466 = vunpack.c.l.bf16 %v6434
      %v6467 = vunpack.c.l.bf16 %v6435
      %v6468 = vunpack.c.l.bf16 %v6436
      %v6469 = vunpack.c.l.bf16 %v6437
      %v6470 = vunpack.c.l.bf16 %v6438
      %v6471 = vunpack.c.l.bf16 %v6439
      %v6472 = vunpack.c.l.bf16 %v6440
      %v6473 = vadd.f32 %v6377, %v6441
      %v6474 = vadd.f32 %v6378, %v6442
      %v6475 = vadd.f32 %v6379, %v6443
      %v6476 = vadd.f32 %v6380, %v6444
      %v6477 = vadd.f32 %v6381, %v6445
      %v6478 = vadd.f32 %v6382, %v6446
      %v6479 = vadd.f32 %v6383, %v6447
      %v6480 = vadd.f32 %v6384, %v6448
      %v6481 = vadd.f32 %v6385, %v6449
      %v6482 = vadd.f32 %v6386, %v6450
      %v6483 = vadd.f32 %v6387, %v6451
      %v6484 = vadd.f32 %v6388, %v6452
      %v6485 = vadd.f32 %v6389, %v6453
      %v6486 = vadd.f32 %v6390, %v6454
      %v6487 = vadd.f32 %v6391, %v6455
      %v6488 = vadd.f32 %v6392, %v6456
      %v6489 = vadd.f32 %v6393, %v6457
      %v6490 = vadd.f32 %v6394, %v6458
      %v6491 = vadd.f32 %v6395, %v6459
      %v6492 = vadd.f32 %v6396, %v6460
      %v6493 = vadd.f32 %v6397, %v6461
      %v6494 = vadd.f32 %v6398, %v6462
      %v6495 = vadd.f32 %v6399, %v6463
      %v6496 = vadd.f32 %v6400, %v6464
      %v6497 = vadd.f32 %v6401, %v6465
      %v6498 = vadd.f32 %v6402, %v6466
      %v6499 = vadd.f32 %v6403, %v6467
      %v6500 = vadd.f32 %v6404, %v6468
      %v6501 = vadd.f32 %v6405, %v6469
      %v6502 = vadd.f32 %v6406, %v6470
      %v6503 = vadd.f32 %v6407, %v6471
      %v6504 = vadd.f32 %v6408, %v6472
      %6505 = vst [vmem:[%s224] sm:$0xff] %v6473
      %6506 = vst [vmem:[%s224 + $0x8] sm:$0xff] %v6474
      %6507 = vst [vmem:[%s224 + $0x10] sm:$0xff] %v6475
      %6508 = vst [vmem:[%s224 + $0x18] sm:$0xff] %v6476
      %6509 = vst [vmem:[%s224 + $0x20] sm:$0xff] %v6477
      %6510 = vst [vmem:[%s224 + $0x28] sm:$0xff] %v6478
      %6511 = vst [vmem:[%s224 + $0x30] sm:$0xff] %v6479
      %6512 = vst [vmem:[%s224 + $0x38] sm:$0xff] %v6480
      %6513 = vst [vmem:[%s224 + $0x40] sm:$0xff] %v6481
      %6514 = vst [vmem:[%s224 + $0x48] sm:$0xff] %v6482
      %6515 = vst [vmem:[%s224 + $0x50] sm:$0xff] %v6483
      %6516 = vst [vmem:[%s224 + $0x58] sm:$0xff] %v6484
      %6517 = vst [vmem:[%s224 + $0x60] sm:$0xff] %v6485
      %6518 = vst [vmem:[%s224 + $0x68] sm:$0xff] %v6486
      %6519 = vst [vmem:[%s224 + $0x70] sm:$0xff] %v6487
      %6520 = vst [vmem:[%s224 + $0x78] sm:$0xff] %v6488
      %6521 = vst [vmem:[%s224 + $0x80] sm:$0xff] %v6489
      %6522 = vst [vmem:[%s224 + $0x88] sm:$0xff] %v6490
      %6523 = vst [vmem:[%s224 + $0x90] sm:$0xff] %v6491
      %6524 = vst [vmem:[%s224 + $0x98] sm:$0xff] %v6492
      %6525 = vst [vmem:[%s224 + $0xa0] sm:$0xff] %v6493
      %6526 = vst [vmem:[%s224 + $0xa8] sm:$0xff] %v6494
      %6527 = vst [vmem:[%s224 + $0xb0] sm:$0xff] %v6495
      %6528 = vst [vmem:[%s224 + $0xb8] sm:$0xff] %v6496
      %6529 = vst [vmem:[%s224 + $0xc0] sm:$0xff] %v6497
      %6530 = vst [vmem:[%s224 + $0xc8] sm:$0xff] %v6498
      %6531 = vst [vmem:[%s224 + $0xd0] sm:$0xff] %v6499
      %6532 = vst [vmem:[%s224 + $0xd8] sm:$0xff] %v6500
      %6533 = vst [vmem:[%s224 + $0xe0] sm:$0xff] %v6501
      %6534 = vst [vmem:[%s224 + $0xe8] sm:$0xff] %v6502
      %6535 = vst [vmem:[%s224 + $0xf0] sm:$0xff] %v6503
      %6536 = vst [vmem:[%s224 + $0xf8] sm:$0xff] %v6504
      %p6537 = scmp.lt.s32.totalorder %s16, 1
      %s6538 = scalar_select %p6537, %s16, 1
      %s6539 = smul.addr %s6538, 32
      %s6540 = smul.addr %s6539, 8
      %s6541 = scalar_lea.vmem %s5, %s6540
      // Predicated region
      $region41: #{bottleneck_forward.1} parent=39 // pred_check
        %p6542 = pneg %p144
      $region42: #{bottleneck_forward.1} parent=39 // pred_check_branch
        %6544 = sbr.rel (%p6542) target = $region44
      $region43: #{bottleneck_forward.1} parent=39 // pred_region
        _
      $region44: #{bottleneck_forward.1} parent=39 // pred_fallthru
        _
    $region40: #{bottleneck_forward.1} parent=5 // pred_fallthru
      _
    %p6545 = scmp.le.s32.totalorder 2, %s11
    // Predicated region
    $region45: #{bottleneck_forward.1} parent=5 // pred_check
      %p6546 = pneg %p6545
    $region46: #{bottleneck_forward.1} parent=5 // pred_check_branch
      %6548 = sbr.rel (%p6546) target = $region48
    $region47: #{bottleneck_forward.1} parent=5 // pred_region
      %s6549 = ssub.s32 %s11, 2
      // Predicated region
      $region49: #{bottleneck_forward.1} parent=47 // pred_check
        %p6550 = pneg %p150
      $region50: #{bottleneck_forward.1} parent=47 // pred_check_branch
        %6552 = sbr.rel (%p6550) target = $region52
      $region51: #{bottleneck_forward.1} parent=47 // pred_region
        %p6553 = scmp.lt.s32.totalorder %s17, 1
        %s6554 = scalar_select %p6553, %s17, 1
        %s6555 = smul.addr %s6554, 32
        %s6556 = smul.addr %s6555, 8
        %s6557 = scalar_lea.vmem %s5, %s6556
      $region52: #{bottleneck_forward.1} parent=47 // pred_fallthru
        _
    $region48: #{bottleneck_forward.1} parent=5 // pred_fallthru
      _
  $region6: #{bottleneck_forward.1} parent=0 // loop_footer
    %s15 = sadd.s32 1, %s11
  $region7: #{bottleneck_forward.1} parent=0 // loop_footer_branch
    %10 = sbr.rel target = $region3
  $region8: #{bottleneck_forward.1} parent=0 // loop_exit
    _

</llo_original>
